<compile_context>
chip_gen: v6e
topology: v6e:2x2x1
jax: 0.10.0
libtpu: 0.0.40
codegen_flags: <defaults>
</compile_context>

<pallas_src>
import functools

import jax
import jax.numpy as jnp
from jax import lax
from jax.experimental import pallas as pl
from jax.experimental.pallas import tpu as pltpu


# -----------------------------------------------------------------------------
# In-kernel helpers (operate on values already loaded into vregs)
# -----------------------------------------------------------------------------
def _attention(q, k, v, add_mask, wo_ref, bo_ref, n_head, approx_recip):
    """softmax(q k^T + mask) v, projected by Wo, accumulated per head.

    q: (S, D) f32 (1/sqrt(dh) already folded into the Q projection weights),
    k, v: (T, D) f32, add_mask: (S, T) f32 additive or None.
    """
    S, D = q.shape
    dh = D // n_head
    qb = q.astype(jnp.bfloat16)
    kb = k.astype(jnp.bfloat16)
    vb = v.astype(jnp.bfloat16)
    acc = jnp.zeros((S, D), jnp.float32)
    for h in range(n_head):                       # static, unrolled over heads
        sl = slice(h * dh, (h + 1) * dh)
        # contract the dh axis of q and k directly (no materialized transpose)
        s = lax.dot_general(qb[:, sl], kb[:, sl], (((1,), (1,)), ((), ())),
                            preferred_element_type=jnp.float32)
        if add_mask is not None:
            s = s + add_mask
        s = s - jnp.max(s, axis=-1, keepdims=True)
        p = jnp.exp(s)
        denom = jnp.sum(p, axis=-1, keepdims=True)
        if approx_recip:
            p = p * pl.reciprocal(denom, approx=True)   # EUP slot, ~free
        else:
            p = p / denom
        o_h = jnp.dot(p.astype(jnp.bfloat16), vb[:, sl],
                      preferred_element_type=jnp.float32)
        # concat(heads) @ Wo == sum_h head_h @ Wo[h*dh:(h+1)*dh, :]
        acc = acc + jnp.dot(o_h.astype(jnp.bfloat16), wo_ref[sl, :],
                            preferred_element_type=jnp.float32)
    return acc + bo_ref[...]


def _add_ln(res, x, gamma, beta):
    """LayerNorm(res + x) over the last axis (eps = 1e-5), all f32."""
    y = res + x
    mean = jnp.mean(y, axis=-1, keepdims=True)
    var = jnp.mean(jnp.square(y - mean), axis=-1, keepdims=True)
    return (y - mean) * lax.rsqrt(var + 1e-5) * gamma + beta


# -----------------------------------------------------------------------------
# Fused decoder-layer kernel (one grid step == one batch element)
# -----------------------------------------------------------------------------
def _decoder_layer_kernel(n_head, approx_recip, has_tmask, has_mmask, *refs):
    it = iter(refs)
    trg_ref = next(it)
    mem_ref = next(it)
    tmask_ref = next(it) if has_tmask else None
    mmask_ref = next(it) if has_mmask else None
    (wqkv1_ref, bqkv1_ref, wo1_ref, bo1_ref, g1_ref, be1_ref,
     wq2_ref, bq2_ref, wkv2_ref, bkv2_ref, wo2_ref, bo2_ref, g2_ref, be2_ref,
     w1_ref, b1_ref, w2_ref, b2_ref, g3_ref, be3_ref, out_ref) = tuple(it)

    x = trg_ref[0].astype(jnp.float32)            # (S, D) residual stream, f32
    m_bf = mem_ref[0].astype(jnp.bfloat16)        # (T, D) matmul input, bf16
    D = x.shape[1]

    tmask = tmask_ref[0].astype(jnp.float32) if has_tmask else None
    mmask = mmask_ref[0].astype(jnp.float32) if has_mmask else None

    # ---- self-attention (fused QKV projection, scale pre-folded) + add & LN1
    qkv = jnp.dot(x.astype(jnp.bfloat16), wqkv1_ref[...],
                  preferred_element_type=jnp.float32) + bqkv1_ref[...]
    a = _attention(qkv[:, :D], qkv[:, D:2 * D], qkv[:, 2 * D:], tmask,
                   wo1_ref, bo1_ref, n_head, approx_recip)
    x = _add_ln(x, a, g1_ref[...], be1_ref[...])

    # ---- cross-attention (fused KV projection of memory) + add & LN2 ----
    q = jnp.dot(x.astype(jnp.bfloat16), wq2_ref[...],
                preferred_element_type=jnp.float32) + bq2_ref[...]
    kv = jnp.dot(m_bf, wkv2_ref[...],
                 preferred_element_type=jnp.float32) + bkv2_ref[...]
    a = _attention(q, kv[:, :D], kv[:, D:], mmask,
                   wo2_ref, bo2_ref, n_head, approx_recip)
    x = _add_ln(x, a, g2_ref[...], be2_ref[...])

    # ---- FFN + add & LN3 ----
    h = jnp.maximum(jnp.dot(x.astype(jnp.bfloat16), w1_ref[...],
                            preferred_element_type=jnp.float32) + b1_ref[...],
                    0.0)
    f = jnp.dot(h.astype(jnp.bfloat16), w2_ref[...],
                preferred_element_type=jnp.float32) + b2_ref[...]
    x = _add_ln(x, f, g3_ref[...], be3_ref[...])

    out_ref[0] = x.astype(out_ref.dtype)


# -----------------------------------------------------------------------------
# One-time parameter preparation (fusion + scale fold + bf16 cast)
# -----------------------------------------------------------------------------
def prepare_decoder_layer_params(params, n_head):
    """Fuse QKV / KV weights, fold 1/sqrt(dh) into the Q projection, cast
    matmul weights to bf16.  Run ONCE (outside the per-call hot path)."""
    wq1, bq1, wk1, bk1, wv1, bv1, wo1, bo1 = params["self_attn"]
    wq2, bq2, wk2, bk2, wv2, bv2, wo2, bo2 = params["cross_attn"]
    w1, b1, w2, b2 = params["ffn"]
    g1, be1 = params["ln1"]
    g2, be2 = params["ln2"]
    g3, be3 = params["ln3"]

    d_model = wq1.shape[0]
    scale = 1.0 / float(d_model // n_head) ** 0.5

    bf16 = jnp.bfloat16
    f32 = jnp.float32
    wqkv1 = jnp.concatenate([wq1 * scale, wk1, wv1], axis=1).astype(bf16)
    bqkv1 = jnp.concatenate([bq1 * scale, bk1, bv1], axis=1).astype(f32)
    wkv2 = jnp.concatenate([wk2, wv2], axis=1).astype(bf16)
    bkv2 = jnp.concatenate([bk2, bv2], axis=1).astype(f32)

    return (wqkv1, bqkv1, wo1.astype(bf16), bo1.astype(f32),
            g1.astype(f32), be1.astype(f32),
            (wq2 * scale).astype(bf16), (bq2 * scale).astype(f32),
            wkv2, bkv2, wo2.astype(bf16), bo2.astype(f32),
            g2.astype(f32), be2.astype(f32),
            w1.astype(bf16), b1.astype(f32), w2.astype(bf16), b2.astype(f32),
            g3.astype(f32), be3.astype(f32))


# -----------------------------------------------------------------------------
# Wrapper
# -----------------------------------------------------------------------------
def _const_spec(shape):
    nd = len(shape)
    return pl.BlockSpec(shape, lambda b, _nd=nd: (0,) * _nd)


def _mask_spec(shape):
    _, s1, s2 = shape
    if shape[0] == 1:   # broadcast mask: constant block, DMA'd once
        return pl.BlockSpec((1, s1, s2), lambda b: (0, 0, 0))
    return pl.BlockSpec((1, s1, s2), lambda b: (b, 0, 0))


def transformer_decoder_layer(trg, mem, prepared_params, n_head,
                              target_mask=None, memory_mask=None,
                              approx_softmax_recip=True):
    """Mirrors TransformerDecoderLayer.forward (dropout = identity / eval).

    Masks are additive (0 = keep, -1e9 = masked), shape (1|B, S, S)/(1|B, S, T)
    or None.  `prepared_params` comes from prepare_decoder_layer_params.
    """
    B, S, D = trg.shape
    T = mem.shape[1]

    in_specs = [
        pl.BlockSpec((1, S, D), lambda b: (b, 0, 0)),
        pl.BlockSpec((1, T, D), lambda b: (b, 0, 0)),
    ]
    args = [trg, mem]
    if target_mask is not None:
        in_specs.append(_mask_spec(target_mask.shape))
        args.append(target_mask)
    if memory_mask is not None:
        in_specs.append(_mask_spec(memory_mask.shape))
        args.append(memory_mask)
    in_specs += [_const_spec(w.shape) for w in prepared_params]
    args += list(prepared_params)

    kernel = functools.partial(_decoder_layer_kernel, n_head,
                               approx_softmax_recip,
                               target_mask is not None,
                               memory_mask is not None)
    return pl.pallas_call(
        kernel,
        out_shape=jax.ShapeDtypeStruct((B, S, D), trg.dtype),
        grid=(B,),
        in_specs=in_specs,
        out_specs=pl.BlockSpec((1, S, D), lambda b: (b, 0, 0)),
        compiler_params=pltpu.CompilerParams(
            dimension_semantics=("parallel",),
            vmem_limit_bytes=48 * 1024 * 1024),
    )(*args)


# -----------------------------------------------------------------------------
# Pure-JAX reference (f32, for verification)
# -----------------------------------------------------------------------------
def _mha_ref(x_q, x_kv, mask, params, n_head):
    wq, bq, wk, bk, wv, bv, wo, bo = params
    B, S, D = x_q.shape
    T = x_kv.shape[1]
    dh = D // n_head
    scale = 1.0 / float(dh) ** 0.5
    q = (x_q @ wq + bq).reshape(B, S, n_head, dh).transpose(0, 2, 1, 3)
    k = (x_kv @ wk + bk).reshape(B, T, n_head, dh).transpose(0, 2, 1, 3)
    v = (x_kv @ wv + bv).reshape(B, T, n_head, dh).transpose(0, 2, 1, 3)
    s = jnp.einsum("bhsd,bhtd->bhst", q, k) * scale
    if mask is not None:
        s = s + mask[:, None]
    p = jax.nn.softmax(s, axis=-1)
    o = jnp.einsum("bhst,bhtd->bhsd", p, v).transpose(0, 2, 1, 3).reshape(B, S, D)
    return o @ wo + bo


def _ln_ref(x, gamma, beta):
    mean = jnp.mean(x, axis=-1, keepdims=True)
    var = jnp.mean(jnp.square(x - mean), axis=-1, keepdims=True)
    return (x - mean) / jnp.sqrt(var + 1e-5) * gamma + beta


def _ref_layer(trg, mem, target_mask, memory_mask, params, n_head):
    a = _mha_ref(trg, trg, target_mask, params["self_attn"], n_head)
    trg = _ln_ref(trg + a, *params["ln1"])
    a = _mha_ref(trg, mem, memory_mask, params["cross_attn"], n_head)
    trg = _ln_ref(trg + a, *params["ln2"])
    w1, b1, w2, b2 = params["ffn"]
    f = jnp.maximum(trg @ w1 + b1, 0.0) @ w2 + b2
    trg = _ln_ref(trg + f, *params["ln3"])
    return trg


# -----------------------------------------------------------------------------
# Parameter / input construction
# -----------------------------------------------------------------------------
def _init_params(key, d_model, d_filter):
    def lin(k, din, dout):
        kw, kb = jax.random.split(k)
        w = 0.02 * jax.random.normal(kw, (din, dout), jnp.float32)
        b = 0.02 * jax.random.normal(kb, (1, dout), jnp.float32)
        return w, b

    keys = jax.random.split(key, 10)
    self_attn = lin(keys[0], d_model, d_model) + lin(keys[1], d_model, d_model) \
        + lin(keys[2], d_model, d_model) + lin(keys[3], d_model, d_model)
    cross_attn = lin(keys[4], d_model, d_model) + lin(keys[5], d_model, d_model) \
        + lin(keys[6], d_model, d_model) + lin(keys[7], d_model, d_model)
    w1, b1 = lin(keys[8], d_model, d_filter)
    w2, b2 = lin(keys[9], d_filter, d_model)

    def ln_p():
        return (jnp.ones((1, d_model), jnp.float32),
                jnp.zeros((1, d_model), jnp.float32))

    return {
        "self_attn": self_attn,
        "cross_attn": cross_attn,
        "ffn": (w1, b1, w2, b2),
        "ln1": ln_p(), "ln2": ln_p(), "ln3": ln_p(),
    }


if __name__ == "__main__":
    n_head, d_model, d_filter = 4, 32, 64
    B, S, T = 2, 8, 12          # B batch, S target seq, T memory seq
    # NOTE: toy shapes for the correctness check only; benchmark with
    # D/dh/T as multiples of 128 (see TODOs above) for meaningful perf.

    key = jax.random.PRNGKey(0)
    k_trg, k_mem, k_par = jax.random.split(key, 3)
    trg = jax.random.normal(k_trg, (B, S, d_model), jnp.float32)
    mem = jax.random.normal(k_mem, (B, T, d_model), jnp.float32)
    params = _init_params(k_par, d_model, d_filter)
    prepared = prepare_decoder_layer_params(params, n_head)

    # causal target mask, passed broadcast as (1, S, S) so it is DMA'd once;
    # memory mask = None (matches the PyTorch default and skips an all-zero DMA).
    causal = jnp.where(jnp.arange(S)[:, None] >= jnp.arange(S)[None, :],
                       0.0, -1e9).astype(jnp.float32)
    target_mask = causal[None]          # (1, S, S)
    memory_mask = None

    out = transformer_decoder_layer(trg, mem, prepared, n_head,
                                    target_mask=target_mask,
                                    memory_mask=memory_mask)
    out = jax.block_until_ready(out)

    ref = _ref_layer(trg, mem, target_mask, memory_mask, params, n_head)
    max_err = float(jnp.max(jnp.abs(out - ref)))
    assert out.shape == (B, S, d_model)
    # bf16 matmul inputs + approx softmax reciprocal -> bf16-appropriate tol.
    assert max_err < 2e-2, f"mismatch vs f32 reference: {max_err}"
    print("KERNEL_OK")
</pallas_src>

<mosaic_0001>
module attributes {stable_mosaic.version = 11 : i64} {
  func.func @_decoder_layer_kernel(%arg0: i32, %arg1: memref<1x8x32xf32, #tpu.memory_space<vmem>>, %arg2: memref<1x12x32xf32, #tpu.memory_space<vmem>>, %arg3: memref<1x8x8xf32, #tpu.memory_space<vmem>>, %arg4: memref<32x96xbf16, #tpu.memory_space<vmem>>, %arg5: memref<1x96xf32, #tpu.memory_space<vmem>>, %arg6: memref<32x32xbf16, #tpu.memory_space<vmem>>, %arg7: memref<1x32xf32, #tpu.memory_space<vmem>>, %arg8: memref<1x32xf32, #tpu.memory_space<vmem>>, %arg9: memref<1x32xf32, #tpu.memory_space<vmem>>, %arg10: memref<32x32xbf16, #tpu.memory_space<vmem>>, %arg11: memref<1x32xf32, #tpu.memory_space<vmem>>, %arg12: memref<32x64xbf16, #tpu.memory_space<vmem>>, %arg13: memref<1x64xf32, #tpu.memory_space<vmem>>, %arg14: memref<32x32xbf16, #tpu.memory_space<vmem>>, %arg15: memref<1x32xf32, #tpu.memory_space<vmem>>, %arg16: memref<1x32xf32, #tpu.memory_space<vmem>>, %arg17: memref<1x32xf32, #tpu.memory_space<vmem>>, %arg18: memref<32x64xbf16, #tpu.memory_space<vmem>>, %arg19: memref<1x64xf32, #tpu.memory_space<vmem>>, %arg20: memref<64x32xbf16, #tpu.memory_space<vmem>>, %arg21: memref<1x32xf32, #tpu.memory_space<vmem>>, %arg22: memref<1x32xf32, #tpu.memory_space<vmem>>, %arg23: memref<1x32xf32, #tpu.memory_space<vmem>>, %arg24: memref<1x8x32xf32, #tpu.memory_space<vmem>>) attributes {dimension_semantics = [#tpu.dimension_semantics<parallel>], iteration_bounds = array<i64: 2>, scalar_prefetch = 0 : i64, scratch_operands = 0 : i64, tpu.core_type = #tpu.core_type<tc>, window_params = [{transform_indices = @transform_0, window_bounds = array<i64: 1, 8, 32>}, {transform_indices = @transform_1, window_bounds = array<i64: 1, 12, 32>}, {pipeline_mode = #tpu.pipeline_mode<synchronous>, transform_indices = @transform_2, window_bounds = array<i64: 1, 8, 8>}, {pipeline_mode = #tpu.pipeline_mode<synchronous>, transform_indices = @transform_3, window_bounds = array<i64: 32, 96>}, {pipeline_mode = #tpu.pipeline_mode<synchronous>, transform_indices = @transform_4, window_bounds = array<i64: 1, 96>}, {pipeline_mode = #tpu.pipeline_mode<synchronous>, transform_indices = @transform_5, window_bounds = array<i64: 32, 32>}, {pipeline_mode = #tpu.pipeline_mode<synchronous>, transform_indices = @transform_6, window_bounds = array<i64: 1, 32>}, {pipeline_mode = #tpu.pipeline_mode<synchronous>, transform_indices = @transform_7, window_bounds = array<i64: 1, 32>}, {pipeline_mode = #tpu.pipeline_mode<synchronous>, transform_indices = @transform_8, window_bounds = array<i64: 1, 32>}, {pipeline_mode = #tpu.pipeline_mode<synchronous>, transform_indices = @transform_9, window_bounds = array<i64: 32, 32>}, {pipeline_mode = #tpu.pipeline_mode<synchronous>, transform_indices = @transform_10, window_bounds = array<i64: 1, 32>}, {pipeline_mode = #tpu.pipeline_mode<synchronous>, transform_indices = @transform_11, window_bounds = array<i64: 32, 64>}, {pipeline_mode = #tpu.pipeline_mode<synchronous>, transform_indices = @transform_12, window_bounds = array<i64: 1, 64>}, {pipeline_mode = #tpu.pipeline_mode<synchronous>, transform_indices = @transform_13, window_bounds = array<i64: 32, 32>}, {pipeline_mode = #tpu.pipeline_mode<synchronous>, transform_indices = @transform_14, window_bounds = array<i64: 1, 32>}, {pipeline_mode = #tpu.pipeline_mode<synchronous>, transform_indices = @transform_15, window_bounds = array<i64: 1, 32>}, {pipeline_mode = #tpu.pipeline_mode<synchronous>, transform_indices = @transform_16, window_bounds = array<i64: 1, 32>}, {pipeline_mode = #tpu.pipeline_mode<synchronous>, transform_indices = @transform_17, window_bounds = array<i64: 32, 64>}, {pipeline_mode = #tpu.pipeline_mode<synchronous>, transform_indices = @transform_18, window_bounds = array<i64: 1, 64>}, {pipeline_mode = #tpu.pipeline_mode<synchronous>, transform_indices = @transform_19, window_bounds = array<i64: 64, 32>}, {pipeline_mode = #tpu.pipeline_mode<synchronous>, transform_indices = @transform_20, window_bounds = array<i64: 1, 32>}, {pipeline_mode = #tpu.pipeline_mode<synchronous>, transform_indices = @transform_21, window_bounds = array<i64: 1, 32>}, {pipeline_mode = #tpu.pipeline_mode<synchronous>, transform_indices = @transform_22, window_bounds = array<i64: 1, 32>}, {transform_indices = @transform_23, window_bounds = array<i64: 1, 8, 32>}]} {
    %c0 = arith.constant 0 : index
    %c0_0 = arith.constant 0 : index
    %c0_1 = arith.constant 0 : index
    %0 = vector.load %arg1[%c0, %c0_0, %c0_1] : memref<1x8x32xf32, #tpu.memory_space<vmem>>, vector<1x8x32xf32>
    %1 = vector.shape_cast %0 : vector<1x8x32xf32> to vector<8x32xf32>
    %c0_2 = arith.constant 0 : index
    %c0_3 = arith.constant 0 : index
    %c0_4 = arith.constant 0 : index
    %2 = vector.load %arg2[%c0_2, %c0_3, %c0_4] : memref<1x12x32xf32, #tpu.memory_space<vmem>>, vector<1x12x32xf32>
    %3 = vector.shape_cast %2 : vector<1x12x32xf32> to vector<12x32xf32>
    %4 = arith.truncf %3 : vector<12x32xf32> to vector<12x32xbf16>
    %c0_5 = arith.constant 0 : index
    %c0_6 = arith.constant 0 : index
    %c0_7 = arith.constant 0 : index
    %5 = vector.load %arg3[%c0_5, %c0_6, %c0_7] : memref<1x8x8xf32, #tpu.memory_space<vmem>>, vector<1x8x8xf32>
    %6 = vector.shape_cast %5 : vector<1x8x8xf32> to vector<8x8xf32>
    %7 = arith.truncf %1 : vector<8x32xf32> to vector<8x32xbf16>
    %c0_8 = arith.constant 0 : index
    %c0_9 = arith.constant 0 : index
    %8 = vector.load %arg4[%c0_8, %c0_9] : memref<32x96xbf16, #tpu.memory_space<vmem>>, vector<32x96xbf16>
    %cst = arith.constant dense<0.000000e+00> : vector<8x96xf32>
    %9 = tpu.matmul %7, %8, %cst {dimension_numbers = #tpu.dot_dimension_numbers<[1], [0], [0], [1], [0, 0, 1, 1], [], []>} : vector<8x32xbf16>, vector<32x96xbf16>, vector<8x96xf32> -> vector<8x96xf32>
    %c0_10 = arith.constant 0 : index
    %c0_11 = arith.constant 0 : index
    %10 = vector.load %arg5[%c0_10, %c0_11] : memref<1x96xf32, #tpu.memory_space<vmem>>, vector<1x96xf32>
    %11 = vector.broadcast %10 : vector<1x96xf32> to vector<8x96xf32>
    %12 = arith.addf %9, %11 : vector<8x96xf32>
    %13 = vector.extract_strided_slice %12 {offsets = [0, 0], sizes = [8, 32], strides = [1, 1]} : vector<8x96xf32> to vector<8x32xf32>
    %14 = vector.extract_strided_slice %12 {offsets = [0, 32], sizes = [8, 32], strides = [1, 1]} : vector<8x96xf32> to vector<8x32xf32>
    %15 = vector.extract_strided_slice %12 {offsets = [0, 64], sizes = [8, 32], strides = [1, 1]} : vector<8x96xf32> to vector<8x32xf32>
    %16 = arith.truncf %13 : vector<8x32xf32> to vector<8x32xbf16>
    %17 = arith.truncf %14 : vector<8x32xf32> to vector<8x32xbf16>
    %18 = arith.truncf %15 : vector<8x32xf32> to vector<8x32xbf16>
    %cst_12 = arith.constant 0.000000e+00 : f32
    %19 = vector.broadcast %cst_12 : f32 to vector<8x32xf32>
    %20 = vector.extract_strided_slice %16 {offsets = [0, 0], sizes = [8, 8], strides = [1, 1]} : vector<8x32xbf16> to vector<8x8xbf16>
    %21 = vector.extract_strided_slice %17 {offsets = [0, 0], sizes = [8, 8], strides = [1, 1]} : vector<8x32xbf16> to vector<8x8xbf16>
    %cst_13 = arith.constant dense<0.000000e+00> : vector<8x8xf32>
    %22 = tpu.matmul %20, %21, %cst_13 {dimension_numbers = #tpu.dot_dimension_numbers<[1], [1], [0], [0], [0, 0, 1, 0], [], []>} : vector<8x8xbf16>, vector<8x8xbf16>, vector<8x8xf32> -> vector<8x8xf32>
    %23 = arith.addf %22, %6 : vector<8x8xf32>
    %cst_14 = arith.constant dense<0xFF800000> : vector<8xf32>
    %24 = vector.multi_reduction <maximumf>, %23, %cst_14 [1] : vector<8x8xf32> to vector<8xf32>
    %25 = vector.shape_cast %24 : vector<8xf32> to vector<8x1xf32>
    %26 = vector.broadcast %25 : vector<8x1xf32> to vector<8x8xf32>
    %27 = arith.subf %23, %26 : vector<8x8xf32>
    %28 = math.exp %27 : vector<8x8xf32>
    %cst_15 = arith.constant dense<0.000000e+00> : vector<8xf32>
    %29 = vector.multi_reduction <add>, %28, %cst_15 [1] : vector<8x8xf32> to vector<8xf32>
    %30 = vector.shape_cast %29 : vector<8xf32> to vector<8x1xf32>
    %31 = tpu.reciprocal %30 {approx = true} : vector<8x1xf32> -> vector<8x1xf32>
    %32 = vector.broadcast %31 : vector<8x1xf32> to vector<8x8xf32>
    %33 = arith.mulf %28, %32 : vector<8x8xf32>
    %34 = arith.truncf %33 : vector<8x8xf32> to vector<8x8xbf16>
    %35 = vector.extract_strided_slice %18 {offsets = [0, 0], sizes = [8, 8], strides = [1, 1]} : vector<8x32xbf16> to vector<8x8xbf16>
    %cst_16 = arith.constant dense<0.000000e+00> : vector<8x8xf32>
    %36 = tpu.matmul %34, %35, %cst_16 {dimension_numbers = #tpu.dot_dimension_numbers<[1], [0], [0], [1], [0, 0, 1, 1], [], []>} : vector<8x8xbf16>, vector<8x8xbf16>, vector<8x8xf32> -> vector<8x8xf32>
    %37 = arith.truncf %36 : vector<8x8xf32> to vector<8x8xbf16>
    %c0_17 = arith.constant 0 : index
    %c0_18 = arith.constant 0 : index
    %38 = vector.load %arg6[%c0_17, %c0_18] : memref<32x32xbf16, #tpu.memory_space<vmem>>, vector<8x32xbf16>
    %cst_19 = arith.constant dense<0.000000e+00> : vector<8x32xf32>
    %39 = tpu.matmul %37, %38, %cst_19 {dimension_numbers = #tpu.dot_dimension_numbers<[1], [0], [0], [1], [0, 0, 1, 1], [], []>} : vector<8x8xbf16>, vector<8x32xbf16>, vector<8x32xf32> -> vector<8x32xf32>
    %40 = arith.addf %19, %39 : vector<8x32xf32>
    %41 = vector.extract_strided_slice %16 {offsets = [0, 8], sizes = [8, 8], strides = [1, 1]} : vector<8x32xbf16> to vector<8x8xbf16>
    %42 = vector.extract_strided_slice %17 {offsets = [0, 8], sizes = [8, 8], strides = [1, 1]} : vector<8x32xbf16> to vector<8x8xbf16>
    %cst_20 = arith.constant dense<0.000000e+00> : vector<8x8xf32>
    %43 = tpu.matmul %41, %42, %cst_20 {dimension_numbers = #tpu.dot_dimension_numbers<[1], [1], [0], [0], [0, 0, 1, 0], [], []>} : vector<8x8xbf16>, vector<8x8xbf16>, vector<8x8xf32> -> vector<8x8xf32>
    %44 = arith.addf %43, %6 : vector<8x8xf32>
    %cst_21 = arith.constant dense<0xFF800000> : vector<8xf32>
    %45 = vector.multi_reduction <maximumf>, %44, %cst_21 [1] : vector<8x8xf32> to vector<8xf32>
    %46 = vector.shape_cast %45 : vector<8xf32> to vector<8x1xf32>
    %47 = vector.broadcast %46 : vector<8x1xf32> to vector<8x8xf32>
    %48 = arith.subf %44, %47 : vector<8x8xf32>
    %49 = math.exp %48 : vector<8x8xf32>
    %cst_22 = arith.constant dense<0.000000e+00> : vector<8xf32>
    %50 = vector.multi_reduction <add>, %49, %cst_22 [1] : vector<8x8xf32> to vector<8xf32>
    %51 = vector.shape_cast %50 : vector<8xf32> to vector<8x1xf32>
    %52 = tpu.reciprocal %51 {approx = true} : vector<8x1xf32> -> vector<8x1xf32>
    %53 = vector.broadcast %52 : vector<8x1xf32> to vector<8x8xf32>
    %54 = arith.mulf %49, %53 : vector<8x8xf32>
    %55 = arith.truncf %54 : vector<8x8xf32> to vector<8x8xbf16>
    %56 = vector.extract_strided_slice %18 {offsets = [0, 8], sizes = [8, 8], strides = [1, 1]} : vector<8x32xbf16> to vector<8x8xbf16>
    %cst_23 = arith.constant dense<0.000000e+00> : vector<8x8xf32>
    %57 = tpu.matmul %55, %56, %cst_23 {dimension_numbers = #tpu.dot_dimension_numbers<[1], [0], [0], [1], [0, 0, 1, 1], [], []>} : vector<8x8xbf16>, vector<8x8xbf16>, vector<8x8xf32> -> vector<8x8xf32>
    %58 = arith.truncf %57 : vector<8x8xf32> to vector<8x8xbf16>
    %c8 = arith.constant 8 : index
    %c0_24 = arith.constant 0 : index
    %59 = vector.load %arg6[%c8, %c0_24] : memref<32x32xbf16, #tpu.memory_space<vmem>>, vector<8x32xbf16>
    %cst_25 = arith.constant dense<0.000000e+00> : vector<8x32xf32>
    %60 = tpu.matmul %58, %59, %cst_25 {dimension_numbers = #tpu.dot_dimension_numbers<[1], [0], [0], [1], [0, 0, 1, 1], [], []>} : vector<8x8xbf16>, vector<8x32xbf16>, vector<8x32xf32> -> vector<8x32xf32>
    %61 = arith.addf %40, %60 : vector<8x32xf32>
    %62 = vector.extract_strided_slice %16 {offsets = [0, 16], sizes = [8, 8], strides = [1, 1]} : vector<8x32xbf16> to vector<8x8xbf16>
    %63 = vector.extract_strided_slice %17 {offsets = [0, 16], sizes = [8, 8], strides = [1, 1]} : vector<8x32xbf16> to vector<8x8xbf16>
    %cst_26 = arith.constant dense<0.000000e+00> : vector<8x8xf32>
    %64 = tpu.matmul %62, %63, %cst_26 {dimension_numbers = #tpu.dot_dimension_numbers<[1], [1], [0], [0], [0, 0, 1, 0], [], []>} : vector<8x8xbf16>, vector<8x8xbf16>, vector<8x8xf32> -> vector<8x8xf32>
    %65 = arith.addf %64, %6 : vector<8x8xf32>
    %cst_27 = arith.constant dense<0xFF800000> : vector<8xf32>
    %66 = vector.multi_reduction <maximumf>, %65, %cst_27 [1] : vector<8x8xf32> to vector<8xf32>
    %67 = vector.shape_cast %66 : vector<8xf32> to vector<8x1xf32>
    %68 = vector.broadcast %67 : vector<8x1xf32> to vector<8x8xf32>
    %69 = arith.subf %65, %68 : vector<8x8xf32>
    %70 = math.exp %69 : vector<8x8xf32>
    %cst_28 = arith.constant dense<0.000000e+00> : vector<8xf32>
    %71 = vector.multi_reduction <add>, %70, %cst_28 [1] : vector<8x8xf32> to vector<8xf32>
    %72 = vector.shape_cast %71 : vector<8xf32> to vector<8x1xf32>
    %73 = tpu.reciprocal %72 {approx = true} : vector<8x1xf32> -> vector<8x1xf32>
    %74 = vector.broadcast %73 : vector<8x1xf32> to vector<8x8xf32>
    %75 = arith.mulf %70, %74 : vector<8x8xf32>
    %76 = arith.truncf %75 : vector<8x8xf32> to vector<8x8xbf16>
    %77 = vector.extract_strided_slice %18 {offsets = [0, 16], sizes = [8, 8], strides = [1, 1]} : vector<8x32xbf16> to vector<8x8xbf16>
    %cst_29 = arith.constant dense<0.000000e+00> : vector<8x8xf32>
    %78 = tpu.matmul %76, %77, %cst_29 {dimension_numbers = #tpu.dot_dimension_numbers<[1], [0], [0], [1], [0, 0, 1, 1], [], []>} : vector<8x8xbf16>, vector<8x8xbf16>, vector<8x8xf32> -> vector<8x8xf32>
    %79 = arith.truncf %78 : vector<8x8xf32> to vector<8x8xbf16>
    %c16 = arith.constant 16 : index
    %c0_30 = arith.constant 0 : index
    %80 = vector.load %arg6[%c16, %c0_30] : memref<32x32xbf16, #tpu.memory_space<vmem>>, vector<8x32xbf16>
    %cst_31 = arith.constant dense<0.000000e+00> : vector<8x32xf32>
    %81 = tpu.matmul %79, %80, %cst_31 {dimension_numbers = #tpu.dot_dimension_numbers<[1], [0], [0], [1], [0, 0, 1, 1], [], []>} : vector<8x8xbf16>, vector<8x32xbf16>, vector<8x32xf32> -> vector<8x32xf32>
    %82 = arith.addf %61, %81 : vector<8x32xf32>
    %83 = vector.extract_strided_slice %16 {offsets = [0, 24], sizes = [8, 8], strides = [1, 1]} : vector<8x32xbf16> to vector<8x8xbf16>
    %84 = vector.extract_strided_slice %17 {offsets = [0, 24], sizes = [8, 8], strides = [1, 1]} : vector<8x32xbf16> to vector<8x8xbf16>
    %cst_32 = arith.constant dense<0.000000e+00> : vector<8x8xf32>
    %85 = tpu.matmul %83, %84, %cst_32 {dimension_numbers = #tpu.dot_dimension_numbers<[1], [1], [0], [0], [0, 0, 1, 0], [], []>} : vector<8x8xbf16>, vector<8x8xbf16>, vector<8x8xf32> -> vector<8x8xf32>
    %86 = arith.addf %85, %6 : vector<8x8xf32>
    %cst_33 = arith.constant dense<0xFF800000> : vector<8xf32>
    %87 = vector.multi_reduction <maximumf>, %86, %cst_33 [1] : vector<8x8xf32> to vector<8xf32>
    %88 = vector.shape_cast %87 : vector<8xf32> to vector<8x1xf32>
    %89 = vector.broadcast %88 : vector<8x1xf32> to vector<8x8xf32>
    %90 = arith.subf %86, %89 : vector<8x8xf32>
    %91 = math.exp %90 : vector<8x8xf32>
    %cst_34 = arith.constant dense<0.000000e+00> : vector<8xf32>
    %92 = vector.multi_reduction <add>, %91, %cst_34 [1] : vector<8x8xf32> to vector<8xf32>
    %93 = vector.shape_cast %92 : vector<8xf32> to vector<8x1xf32>
    %94 = tpu.reciprocal %93 {approx = true} : vector<8x1xf32> -> vector<8x1xf32>
    %95 = vector.broadcast %94 : vector<8x1xf32> to vector<8x8xf32>
    %96 = arith.mulf %91, %95 : vector<8x8xf32>
    %97 = arith.truncf %96 : vector<8x8xf32> to vector<8x8xbf16>
    %98 = vector.extract_strided_slice %18 {offsets = [0, 24], sizes = [8, 8], strides = [1, 1]} : vector<8x32xbf16> to vector<8x8xbf16>
    %cst_35 = arith.constant dense<0.000000e+00> : vector<8x8xf32>
    %99 = tpu.matmul %97, %98, %cst_35 {dimension_numbers = #tpu.dot_dimension_numbers<[1], [0], [0], [1], [0, 0, 1, 1], [], []>} : vector<8x8xbf16>, vector<8x8xbf16>, vector<8x8xf32> -> vector<8x8xf32>
    %100 = arith.truncf %99 : vector<8x8xf32> to vector<8x8xbf16>
    %c24 = arith.constant 24 : index
    %c0_36 = arith.constant 0 : index
    %101 = vector.load %arg6[%c24, %c0_36] : memref<32x32xbf16, #tpu.memory_space<vmem>>, vector<8x32xbf16>
    %cst_37 = arith.constant dense<0.000000e+00> : vector<8x32xf32>
    %102 = tpu.matmul %100, %101, %cst_37 {dimension_numbers = #tpu.dot_dimension_numbers<[1], [0], [0], [1], [0, 0, 1, 1], [], []>} : vector<8x8xbf16>, vector<8x32xbf16>, vector<8x32xf32> -> vector<8x32xf32>
    %103 = arith.addf %82, %102 : vector<8x32xf32>
    %c0_38 = arith.constant 0 : index
    %c0_39 = arith.constant 0 : index
    %104 = vector.load %arg7[%c0_38, %c0_39] : memref<1x32xf32, #tpu.memory_space<vmem>>, vector<1x32xf32>
    %105 = vector.broadcast %104 : vector<1x32xf32> to vector<8x32xf32>
    %106 = arith.addf %103, %105 : vector<8x32xf32>
    %c0_40 = arith.constant 0 : index
    %c0_41 = arith.constant 0 : index
    %107 = vector.load %arg8[%c0_40, %c0_41] : memref<1x32xf32, #tpu.memory_space<vmem>>, vector<1x32xf32>
    %c0_42 = arith.constant 0 : index
    %c0_43 = arith.constant 0 : index
    %108 = vector.load %arg9[%c0_42, %c0_43] : memref<1x32xf32, #tpu.memory_space<vmem>>, vector<1x32xf32>
    %109 = arith.addf %1, %106 : vector<8x32xf32>
    %cst_44 = arith.constant dense<0.000000e+00> : vector<8xf32>
    %110 = vector.multi_reduction <add>, %109, %cst_44 [1] : vector<8x32xf32> to vector<8xf32>
    %111 = vector.shape_cast %110 : vector<8xf32> to vector<8x1xf32>
    %cst_45 = arith.constant 3.200000e+01 : f32
    %112 = vector.broadcast %cst_45 : f32 to vector<8x1xf32>
    %113 = arith.divf %111, %112 : vector<8x1xf32>
    %114 = vector.broadcast %113 : vector<8x1xf32> to vector<8x32xf32>
    %115 = arith.subf %109, %114 : vector<8x32xf32>
    %116 = arith.mulf %115, %115 : vector<8x32xf32>
    %cst_46 = arith.constant dense<0.000000e+00> : vector<8xf32>
    %117 = vector.multi_reduction <add>, %116, %cst_46 [1] : vector<8x32xf32> to vector<8xf32>
    %118 = vector.shape_cast %117 : vector<8xf32> to vector<8x1xf32>
    %cst_47 = arith.constant 3.200000e+01 : f32
    %119 = vector.broadcast %cst_47 : f32 to vector<8x1xf32>
    %120 = arith.divf %118, %119 : vector<8x1xf32>
    %121 = vector.broadcast %113 : vector<8x1xf32> to vector<8x32xf32>
    %122 = arith.subf %109, %121 : vector<8x32xf32>
    %cst_48 = arith.constant 9.99999974E-6 : f32
    %123 = vector.broadcast %cst_48 : f32 to vector<8x1xf32>
    %124 = arith.addf %120, %123 : vector<8x1xf32>
    %125 = math.rsqrt %124 : vector<8x1xf32>
    %126 = vector.broadcast %125 : vector<8x1xf32> to vector<8x32xf32>
    %127 = arith.mulf %122, %126 : vector<8x32xf32>
    %128 = vector.broadcast %107 : vector<1x32xf32> to vector<8x32xf32>
    %129 = arith.mulf %127, %128 : vector<8x32xf32>
    %130 = vector.broadcast %108 : vector<1x32xf32> to vector<8x32xf32>
    %131 = arith.addf %129, %130 : vector<8x32xf32>
    %132 = arith.truncf %131 : vector<8x32xf32> to vector<8x32xbf16>
    %c0_49 = arith.constant 0 : index
    %c0_50 = arith.constant 0 : index
    %133 = vector.load %arg10[%c0_49, %c0_50] : memref<32x32xbf16, #tpu.memory_space<vmem>>, vector<32x32xbf16>
    %cst_51 = arith.constant dense<0.000000e+00> : vector<8x32xf32>
    %134 = tpu.matmul %132, %133, %cst_51 {dimension_numbers = #tpu.dot_dimension_numbers<[1], [0], [0], [1], [0, 0, 1, 1], [], []>} : vector<8x32xbf16>, vector<32x32xbf16>, vector<8x32xf32> -> vector<8x32xf32>
    %c0_52 = arith.constant 0 : index
    %c0_53 = arith.constant 0 : index
    %135 = vector.load %arg11[%c0_52, %c0_53] : memref<1x32xf32, #tpu.memory_space<vmem>>, vector<1x32xf32>
    %136 = vector.broadcast %135 : vector<1x32xf32> to vector<8x32xf32>
    %137 = arith.addf %134, %136 : vector<8x32xf32>
    %c0_54 = arith.constant 0 : index
    %c0_55 = arith.constant 0 : index
    %138 = vector.load %arg12[%c0_54, %c0_55] : memref<32x64xbf16, #tpu.memory_space<vmem>>, vector<32x64xbf16>
    %cst_56 = arith.constant dense<0.000000e+00> : vector<12x64xf32>
    %139 = tpu.matmul %4, %138, %cst_56 {dimension_numbers = #tpu.dot_dimension_numbers<[1], [0], [0], [1], [0, 0, 1, 1], [], []>} : vector<12x32xbf16>, vector<32x64xbf16>, vector<12x64xf32> -> vector<12x64xf32>
    %c0_57 = arith.constant 0 : index
    %c0_58 = arith.constant 0 : index
    %140 = vector.load %arg13[%c0_57, %c0_58] : memref<1x64xf32, #tpu.memory_space<vmem>>, vector<1x64xf32>
    %141 = vector.broadcast %140 : vector<1x64xf32> to vector<12x64xf32>
    %142 = arith.addf %139, %141 : vector<12x64xf32>
    %143 = vector.extract_strided_slice %142 {offsets = [0, 0], sizes = [12, 32], strides = [1, 1]} : vector<12x64xf32> to vector<12x32xf32>
    %144 = vector.extract_strided_slice %142 {offsets = [0, 32], sizes = [12, 32], strides = [1, 1]} : vector<12x64xf32> to vector<12x32xf32>
    %145 = arith.truncf %137 : vector<8x32xf32> to vector<8x32xbf16>
    %146 = arith.truncf %143 : vector<12x32xf32> to vector<12x32xbf16>
    %147 = arith.truncf %144 : vector<12x32xf32> to vector<12x32xbf16>
    %cst_59 = arith.constant 0.000000e+00 : f32
    %148 = vector.broadcast %cst_59 : f32 to vector<8x32xf32>
    %149 = vector.extract_strided_slice %145 {offsets = [0, 0], sizes = [8, 8], strides = [1, 1]} : vector<8x32xbf16> to vector<8x8xbf16>
    %150 = vector.extract_strided_slice %146 {offsets = [0, 0], sizes = [12, 8], strides = [1, 1]} : vector<12x32xbf16> to vector<12x8xbf16>
    %cst_60 = arith.constant dense<0.000000e+00> : vector<8x12xf32>
    %151 = tpu.matmul %149, %150, %cst_60 {dimension_numbers = #tpu.dot_dimension_numbers<[1], [1], [0], [0], [0, 0, 1, 0], [], []>} : vector<8x8xbf16>, vector<12x8xbf16>, vector<8x12xf32> -> vector<8x12xf32>
    %cst_61 = arith.constant dense<0xFF800000> : vector<8xf32>
    %152 = vector.multi_reduction <maximumf>, %151, %cst_61 [1] : vector<8x12xf32> to vector<8xf32>
    %153 = vector.shape_cast %152 : vector<8xf32> to vector<8x1xf32>
    %154 = vector.broadcast %153 : vector<8x1xf32> to vector<8x12xf32>
    %155 = arith.subf %151, %154 : vector<8x12xf32>
    %156 = math.exp %155 : vector<8x12xf32>
    %cst_62 = arith.constant dense<0.000000e+00> : vector<8xf32>
    %157 = vector.multi_reduction <add>, %156, %cst_62 [1] : vector<8x12xf32> to vector<8xf32>
    %158 = vector.shape_cast %157 : vector<8xf32> to vector<8x1xf32>
    %159 = tpu.reciprocal %158 {approx = true} : vector<8x1xf32> -> vector<8x1xf32>
    %160 = vector.broadcast %159 : vector<8x1xf32> to vector<8x12xf32>
    %161 = arith.mulf %156, %160 : vector<8x12xf32>
    %162 = arith.truncf %161 : vector<8x12xf32> to vector<8x12xbf16>
    %163 = vector.extract_strided_slice %147 {offsets = [0, 0], sizes = [12, 8], strides = [1, 1]} : vector<12x32xbf16> to vector<12x8xbf16>
    %cst_63 = arith.constant dense<0.000000e+00> : vector<8x8xf32>
    %164 = tpu.matmul %162, %163, %cst_63 {dimension_numbers = #tpu.dot_dimension_numbers<[1], [0], [0], [1], [0, 0, 1, 1], [], []>} : vector<8x12xbf16>, vector<12x8xbf16>, vector<8x8xf32> -> vector<8x8xf32>
    %165 = arith.truncf %164 : vector<8x8xf32> to vector<8x8xbf16>
    %c0_64 = arith.constant 0 : index
    %c0_65 = arith.constant 0 : index
    %166 = vector.load %arg14[%c0_64, %c0_65] : memref<32x32xbf16, #tpu.memory_space<vmem>>, vector<8x32xbf16>
    %cst_66 = arith.constant dense<0.000000e+00> : vector<8x32xf32>
    %167 = tpu.matmul %165, %166, %cst_66 {dimension_numbers = #tpu.dot_dimension_numbers<[1], [0], [0], [1], [0, 0, 1, 1], [], []>} : vector<8x8xbf16>, vector<8x32xbf16>, vector<8x32xf32> -> vector<8x32xf32>
    %168 = arith.addf %148, %167 : vector<8x32xf32>
    %169 = vector.extract_strided_slice %145 {offsets = [0, 8], sizes = [8, 8], strides = [1, 1]} : vector<8x32xbf16> to vector<8x8xbf16>
    %170 = vector.extract_strided_slice %146 {offsets = [0, 8], sizes = [12, 8], strides = [1, 1]} : vector<12x32xbf16> to vector<12x8xbf16>
    %cst_67 = arith.constant dense<0.000000e+00> : vector<8x12xf32>
    %171 = tpu.matmul %169, %170, %cst_67 {dimension_numbers = #tpu.dot_dimension_numbers<[1], [1], [0], [0], [0, 0, 1, 0], [], []>} : vector<8x8xbf16>, vector<12x8xbf16>, vector<8x12xf32> -> vector<8x12xf32>
    %cst_68 = arith.constant dense<0xFF800000> : vector<8xf32>
    %172 = vector.multi_reduction <maximumf>, %171, %cst_68 [1] : vector<8x12xf32> to vector<8xf32>
    %173 = vector.shape_cast %172 : vector<8xf32> to vector<8x1xf32>
    %174 = vector.broadcast %173 : vector<8x1xf32> to vector<8x12xf32>
    %175 = arith.subf %171, %174 : vector<8x12xf32>
    %176 = math.exp %175 : vector<8x12xf32>
    %cst_69 = arith.constant dense<0.000000e+00> : vector<8xf32>
    %177 = vector.multi_reduction <add>, %176, %cst_69 [1] : vector<8x12xf32> to vector<8xf32>
    %178 = vector.shape_cast %177 : vector<8xf32> to vector<8x1xf32>
    %179 = tpu.reciprocal %178 {approx = true} : vector<8x1xf32> -> vector<8x1xf32>
    %180 = vector.broadcast %179 : vector<8x1xf32> to vector<8x12xf32>
    %181 = arith.mulf %176, %180 : vector<8x12xf32>
    %182 = arith.truncf %181 : vector<8x12xf32> to vector<8x12xbf16>
    %183 = vector.extract_strided_slice %147 {offsets = [0, 8], sizes = [12, 8], strides = [1, 1]} : vector<12x32xbf16> to vector<12x8xbf16>
    %cst_70 = arith.constant dense<0.000000e+00> : vector<8x8xf32>
    %184 = tpu.matmul %182, %183, %cst_70 {dimension_numbers = #tpu.dot_dimension_numbers<[1], [0], [0], [1], [0, 0, 1, 1], [], []>} : vector<8x12xbf16>, vector<12x8xbf16>, vector<8x8xf32> -> vector<8x8xf32>
    %185 = arith.truncf %184 : vector<8x8xf32> to vector<8x8xbf16>
    %c8_71 = arith.constant 8 : index
    %c0_72 = arith.constant 0 : index
    %186 = vector.load %arg14[%c8_71, %c0_72] : memref<32x32xbf16, #tpu.memory_space<vmem>>, vector<8x32xbf16>
    %cst_73 = arith.constant dense<0.000000e+00> : vector<8x32xf32>
    %187 = tpu.matmul %185, %186, %cst_73 {dimension_numbers = #tpu.dot_dimension_numbers<[1], [0], [0], [1], [0, 0, 1, 1], [], []>} : vector<8x8xbf16>, vector<8x32xbf16>, vector<8x32xf32> -> vector<8x32xf32>
    %188 = arith.addf %168, %187 : vector<8x32xf32>
    %189 = vector.extract_strided_slice %145 {offsets = [0, 16], sizes = [8, 8], strides = [1, 1]} : vector<8x32xbf16> to vector<8x8xbf16>
    %190 = vector.extract_strided_slice %146 {offsets = [0, 16], sizes = [12, 8], strides = [1, 1]} : vector<12x32xbf16> to vector<12x8xbf16>
    %cst_74 = arith.constant dense<0.000000e+00> : vector<8x12xf32>
    %191 = tpu.matmul %189, %190, %cst_74 {dimension_numbers = #tpu.dot_dimension_numbers<[1], [1], [0], [0], [0, 0, 1, 0], [], []>} : vector<8x8xbf16>, vector<12x8xbf16>, vector<8x12xf32> -> vector<8x12xf32>
    %cst_75 = arith.constant dense<0xFF800000> : vector<8xf32>
    %192 = vector.multi_reduction <maximumf>, %191, %cst_75 [1] : vector<8x12xf32> to vector<8xf32>
    %193 = vector.shape_cast %192 : vector<8xf32> to vector<8x1xf32>
    %194 = vector.broadcast %193 : vector<8x1xf32> to vector<8x12xf32>
    %195 = arith.subf %191, %194 : vector<8x12xf32>
    %196 = math.exp %195 : vector<8x12xf32>
    %cst_76 = arith.constant dense<0.000000e+00> : vector<8xf32>
    %197 = vector.multi_reduction <add>, %196, %cst_76 [1] : vector<8x12xf32> to vector<8xf32>
    %198 = vector.shape_cast %197 : vector<8xf32> to vector<8x1xf32>
    %199 = tpu.reciprocal %198 {approx = true} : vector<8x1xf32> -> vector<8x1xf32>
    %200 = vector.broadcast %199 : vector<8x1xf32> to vector<8x12xf32>
    %201 = arith.mulf %196, %200 : vector<8x12xf32>
    %202 = arith.truncf %201 : vector<8x12xf32> to vector<8x12xbf16>
    %203 = vector.extract_strided_slice %147 {offsets = [0, 16], sizes = [12, 8], strides = [1, 1]} : vector<12x32xbf16> to vector<12x8xbf16>
    %cst_77 = arith.constant dense<0.000000e+00> : vector<8x8xf32>
    %204 = tpu.matmul %202, %203, %cst_77 {dimension_numbers = #tpu.dot_dimension_numbers<[1], [0], [0], [1], [0, 0, 1, 1], [], []>} : vector<8x12xbf16>, vector<12x8xbf16>, vector<8x8xf32> -> vector<8x8xf32>
    %205 = arith.truncf %204 : vector<8x8xf32> to vector<8x8xbf16>
    %c16_78 = arith.constant 16 : index
    %c0_79 = arith.constant 0 : index
    %206 = vector.load %arg14[%c16_78, %c0_79] : memref<32x32xbf16, #tpu.memory_space<vmem>>, vector<8x32xbf16>
    %cst_80 = arith.constant dense<0.000000e+00> : vector<8x32xf32>
    %207 = tpu.matmul %205, %206, %cst_80 {dimension_numbers = #tpu.dot_dimension_numbers<[1], [0], [0], [1], [0, 0, 1, 1], [], []>} : vector<8x8xbf16>, vector<8x32xbf16>, vector<8x32xf32> -> vector<8x32xf32>
    %208 = arith.addf %188, %207 : vector<8x32xf32>
    %209 = vector.extract_strided_slice %145 {offsets = [0, 24], sizes = [8, 8], strides = [1, 1]} : vector<8x32xbf16> to vector<8x8xbf16>
    %210 = vector.extract_strided_slice %146 {offsets = [0, 24], sizes = [12, 8], strides = [1, 1]} : vector<12x32xbf16> to vector<12x8xbf16>
    %cst_81 = arith.constant dense<0.000000e+00> : vector<8x12xf32>
    %211 = tpu.matmul %209, %210, %cst_81 {dimension_numbers = #tpu.dot_dimension_numbers<[1], [1], [0], [0], [0, 0, 1, 0], [], []>} : vector<8x8xbf16>, vector<12x8xbf16>, vector<8x12xf32> -> vector<8x12xf32>
    %cst_82 = arith.constant dense<0xFF800000> : vector<8xf32>
    %212 = vector.multi_reduction <maximumf>, %211, %cst_82 [1] : vector<8x12xf32> to vector<8xf32>
    %213 = vector.shape_cast %212 : vector<8xf32> to vector<8x1xf32>
    %214 = vector.broadcast %213 : vector<8x1xf32> to vector<8x12xf32>
    %215 = arith.subf %211, %214 : vector<8x12xf32>
    %216 = math.exp %215 : vector<8x12xf32>
    %cst_83 = arith.constant dense<0.000000e+00> : vector<8xf32>
    %217 = vector.multi_reduction <add>, %216, %cst_83 [1] : vector<8x12xf32> to vector<8xf32>
    %218 = vector.shape_cast %217 : vector<8xf32> to vector<8x1xf32>
    %219 = tpu.reciprocal %218 {approx = true} : vector<8x1xf32> -> vector<8x1xf32>
    %220 = vector.broadcast %219 : vector<8x1xf32> to vector<8x12xf32>
    %221 = arith.mulf %216, %220 : vector<8x12xf32>
    %222 = arith.truncf %221 : vector<8x12xf32> to vector<8x12xbf16>
    %223 = vector.extract_strided_slice %147 {offsets = [0, 24], sizes = [12, 8], strides = [1, 1]} : vector<12x32xbf16> to vector<12x8xbf16>
    %cst_84 = arith.constant dense<0.000000e+00> : vector<8x8xf32>
    %224 = tpu.matmul %222, %223, %cst_84 {dimension_numbers = #tpu.dot_dimension_numbers<[1], [0], [0], [1], [0, 0, 1, 1], [], []>} : vector<8x12xbf16>, vector<12x8xbf16>, vector<8x8xf32> -> vector<8x8xf32>
    %225 = arith.truncf %224 : vector<8x8xf32> to vector<8x8xbf16>
    %c24_85 = arith.constant 24 : index
    %c0_86 = arith.constant 0 : index
    %226 = vector.load %arg14[%c24_85, %c0_86] : memref<32x32xbf16, #tpu.memory_space<vmem>>, vector<8x32xbf16>
    %cst_87 = arith.constant dense<0.000000e+00> : vector<8x32xf32>
    %227 = tpu.matmul %225, %226, %cst_87 {dimension_numbers = #tpu.dot_dimension_numbers<[1], [0], [0], [1], [0, 0, 1, 1], [], []>} : vector<8x8xbf16>, vector<8x32xbf16>, vector<8x32xf32> -> vector<8x32xf32>
    %228 = arith.addf %208, %227 : vector<8x32xf32>
    %c0_88 = arith.constant 0 : index
    %c0_89 = arith.constant 0 : index
    %229 = vector.load %arg15[%c0_88, %c0_89] : memref<1x32xf32, #tpu.memory_space<vmem>>, vector<1x32xf32>
    %230 = vector.broadcast %229 : vector<1x32xf32> to vector<8x32xf32>
    %231 = arith.addf %228, %230 : vector<8x32xf32>
    %c0_90 = arith.constant 0 : index
    %c0_91 = arith.constant 0 : index
    %232 = vector.load %arg16[%c0_90, %c0_91] : memref<1x32xf32, #tpu.memory_space<vmem>>, vector<1x32xf32>
    %c0_92 = arith.constant 0 : index
    %c0_93 = arith.constant 0 : index
    %233 = vector.load %arg17[%c0_92, %c0_93] : memref<1x32xf32, #tpu.memory_space<vmem>>, vector<1x32xf32>
    %234 = arith.addf %131, %231 : vector<8x32xf32>
    %cst_94 = arith.constant dense<0.000000e+00> : vector<8xf32>
    %235 = vector.multi_reduction <add>, %234, %cst_94 [1] : vector<8x32xf32> to vector<8xf32>
    %236 = vector.shape_cast %235 : vector<8xf32> to vector<8x1xf32>
    %cst_95 = arith.constant 3.200000e+01 : f32
    %237 = vector.broadcast %cst_95 : f32 to vector<8x1xf32>
    %238 = arith.divf %236, %237 : vector<8x1xf32>
    %239 = vector.broadcast %238 : vector<8x1xf32> to vector<8x32xf32>
    %240 = arith.subf %234, %239 : vector<8x32xf32>
    %241 = arith.mulf %240, %240 : vector<8x32xf32>
    %cst_96 = arith.constant dense<0.000000e+00> : vector<8xf32>
    %242 = vector.multi_reduction <add>, %241, %cst_96 [1] : vector<8x32xf32> to vector<8xf32>
    %243 = vector.shape_cast %242 : vector<8xf32> to vector<8x1xf32>
    %cst_97 = arith.constant 3.200000e+01 : f32
    %244 = vector.broadcast %cst_97 : f32 to vector<8x1xf32>
    %245 = arith.divf %243, %244 : vector<8x1xf32>
    %246 = vector.broadcast %238 : vector<8x1xf32> to vector<8x32xf32>
    %247 = arith.subf %234, %246 : vector<8x32xf32>
    %cst_98 = arith.constant 9.99999974E-6 : f32
    %248 = vector.broadcast %cst_98 : f32 to vector<8x1xf32>
    %249 = arith.addf %245, %248 : vector<8x1xf32>
    %250 = math.rsqrt %249 : vector<8x1xf32>
    %251 = vector.broadcast %250 : vector<8x1xf32> to vector<8x32xf32>
    %252 = arith.mulf %247, %251 : vector<8x32xf32>
    %253 = vector.broadcast %232 : vector<1x32xf32> to vector<8x32xf32>
    %254 = arith.mulf %252, %253 : vector<8x32xf32>
    %255 = vector.broadcast %233 : vector<1x32xf32> to vector<8x32xf32>
    %256 = arith.addf %254, %255 : vector<8x32xf32>
    %257 = arith.truncf %256 : vector<8x32xf32> to vector<8x32xbf16>
    %c0_99 = arith.constant 0 : index
    %c0_100 = arith.constant 0 : index
    %258 = vector.load %arg18[%c0_99, %c0_100] : memref<32x64xbf16, #tpu.memory_space<vmem>>, vector<32x64xbf16>
    %cst_101 = arith.constant dense<0.000000e+00> : vector<8x64xf32>
    %259 = tpu.matmul %257, %258, %cst_101 {dimension_numbers = #tpu.dot_dimension_numbers<[1], [0], [0], [1], [0, 0, 1, 1], [], []>} : vector<8x32xbf16>, vector<32x64xbf16>, vector<8x64xf32> -> vector<8x64xf32>
    %c0_102 = arith.constant 0 : index
    %c0_103 = arith.constant 0 : index
    %260 = vector.load %arg19[%c0_102, %c0_103] : memref<1x64xf32, #tpu.memory_space<vmem>>, vector<1x64xf32>
    %261 = vector.broadcast %260 : vector<1x64xf32> to vector<8x64xf32>
    %262 = arith.addf %259, %261 : vector<8x64xf32>
    %cst_104 = arith.constant 0.000000e+00 : f32
    %263 = vector.broadcast %cst_104 : f32 to vector<8x64xf32>
    %264 = arith.maximumf %262, %263 : vector<8x64xf32>
    %265 = arith.truncf %264 : vector<8x64xf32> to vector<8x64xbf16>
    %c0_105 = arith.constant 0 : index
    %c0_106 = arith.constant 0 : index
    %266 = vector.load %arg20[%c0_105, %c0_106] : memref<64x32xbf16, #tpu.memory_space<vmem>>, vector<64x32xbf16>
    %cst_107 = arith.constant dense<0.000000e+00> : vector<8x32xf32>
    %267 = tpu.matmul %265, %266, %cst_107 {dimension_numbers = #tpu.dot_dimension_numbers<[1], [0], [0], [1], [0, 0, 1, 1], [], []>} : vector<8x64xbf16>, vector<64x32xbf16>, vector<8x32xf32> -> vector<8x32xf32>
    %c0_108 = arith.constant 0 : index
    %c0_109 = arith.constant 0 : index
    %268 = vector.load %arg21[%c0_108, %c0_109] : memref<1x32xf32, #tpu.memory_space<vmem>>, vector<1x32xf32>
    %269 = vector.broadcast %268 : vector<1x32xf32> to vector<8x32xf32>
    %270 = arith.addf %267, %269 : vector<8x32xf32>
    %c0_110 = arith.constant 0 : index
    %c0_111 = arith.constant 0 : index
    %271 = vector.load %arg22[%c0_110, %c0_111] : memref<1x32xf32, #tpu.memory_space<vmem>>, vector<1x32xf32>
    %c0_112 = arith.constant 0 : index
    %c0_113 = arith.constant 0 : index
    %272 = vector.load %arg23[%c0_112, %c0_113] : memref<1x32xf32, #tpu.memory_space<vmem>>, vector<1x32xf32>
    %273 = arith.addf %256, %270 : vector<8x32xf32>
    %cst_114 = arith.constant dense<0.000000e+00> : vector<8xf32>
    %274 = vector.multi_reduction <add>, %273, %cst_114 [1] : vector<8x32xf32> to vector<8xf32>
    %275 = vector.shape_cast %274 : vector<8xf32> to vector<8x1xf32>
    %cst_115 = arith.constant 3.200000e+01 : f32
    %276 = vector.broadcast %cst_115 : f32 to vector<8x1xf32>
    %277 = arith.divf %275, %276 : vector<8x1xf32>
    %278 = vector.broadcast %277 : vector<8x1xf32> to vector<8x32xf32>
    %279 = arith.subf %273, %278 : vector<8x32xf32>
    %280 = arith.mulf %279, %279 : vector<8x32xf32>
    %cst_116 = arith.constant dense<0.000000e+00> : vector<8xf32>
    %281 = vector.multi_reduction <add>, %280, %cst_116 [1] : vector<8x32xf32> to vector<8xf32>
    %282 = vector.shape_cast %281 : vector<8xf32> to vector<8x1xf32>
    %cst_117 = arith.constant 3.200000e+01 : f32
    %283 = vector.broadcast %cst_117 : f32 to vector<8x1xf32>
    %284 = arith.divf %282, %283 : vector<8x1xf32>
    %285 = vector.broadcast %277 : vector<8x1xf32> to vector<8x32xf32>
    %286 = arith.subf %273, %285 : vector<8x32xf32>
    %cst_118 = arith.constant 9.99999974E-6 : f32
    %287 = vector.broadcast %cst_118 : f32 to vector<8x1xf32>
    %288 = arith.addf %284, %287 : vector<8x1xf32>
    %289 = math.rsqrt %288 : vector<8x1xf32>
    %290 = vector.broadcast %289 : vector<8x1xf32> to vector<8x32xf32>
    %291 = arith.mulf %286, %290 : vector<8x32xf32>
    %292 = vector.broadcast %271 : vector<1x32xf32> to vector<8x32xf32>
    %293 = arith.mulf %291, %292 : vector<8x32xf32>
    %294 = vector.broadcast %272 : vector<1x32xf32> to vector<8x32xf32>
    %295 = arith.addf %293, %294 : vector<8x32xf32>
    %c0_119 = arith.constant 0 : index
    %c0_120 = arith.constant 0 : index
    %c0_121 = arith.constant 0 : index
    %296 = vector.load %arg24[%c0_119, %c0_120, %c0_121] : memref<1x8x32xf32, #tpu.memory_space<vmem>>, vector<1x8x32xf32>
    %297 = vector.shape_cast %296 : vector<1x8x32xf32> to vector<8x32xf32>
    %298 = vector.shape_cast %295 : vector<8x32xf32> to vector<1x8x32xf32>
    tpu.vector_store %arg24[%c0_119, %c0_120, %c0_121], %298 {strides = array<i32>} : memref<1x8x32xf32, #tpu.memory_space<vmem>>, vector<1x8x32xf32>,
    return
  }
  func.func @transform_0(%arg0: i32) -> (i32, i32, i32) {
    %c0_i32 = arith.constant 0 : i32
    %c0_i32_0 = arith.constant 0 : i32
    %c0_i32_1 = arith.constant 0 : i32
    return %arg0, %c0_i32, %c0_i32_0 : i32, i32, i32
  }
  func.func @transform_1(%arg0: i32) -> (i32, i32, i32) {
    %c0_i32 = arith.constant 0 : i32
    %c0_i32_0 = arith.constant 0 : i32
    %c0_i32_1 = arith.constant 0 : i32
    return %arg0, %c0_i32, %c0_i32_0 : i32, i32, i32
  }
  func.func @transform_2(%arg0: i32) -> (i32, i32, i32) {
    %c0_i32 = arith.constant 0 : i32
    %c0_i32_0 = arith.constant 0 : i32
    %c0_i32_1 = arith.constant 0 : i32
    %c0_i32_2 = arith.constant 0 : i32
    return %c0_i32, %c0_i32_0, %c0_i32_1 : i32, i32, i32
  }
  func.func @transform_3(%arg0: i32) -> (i32, i32) {
    %c0_i32 = arith.constant 0 : i32
    %c0_i32_0 = arith.constant 0 : i32
    %c0_i32_1 = arith.constant 0 : i32
    return %c0_i32, %c0_i32_0 : i32, i32
  }
  func.func @transform_4(%arg0: i32) -> (i32, i32) {
    %c0_i32 = arith.constant 0 : i32
    %c0_i32_0 = arith.constant 0 : i32
    %c0_i32_1 = arith.constant 0 : i32
    return %c0_i32, %c0_i32_0 : i32, i32
  }
  func.func @transform_5(%arg0: i32) -> (i32, i32) {
    %c0_i32 = arith.constant 0 : i32
    %c0_i32_0 = arith.constant 0 : i32
    %c0_i32_1 = arith.constant 0 : i32
    return %c0_i32, %c0_i32_0 : i32, i32
  }
  func.func @transform_6(%arg0: i32) -> (i32, i32) {
    %c0_i32 = arith.constant 0 : i32
    %c0_i32_0 = arith.constant 0 : i32
    %c0_i32_1 = arith.constant 0 : i32
    return %c0_i32, %c0_i32_0 : i32, i32
  }
  func.func @transform_7(%arg0: i32) -> (i32, i32) {
    %c0_i32 = arith.constant 0 : i32
    %c0_i32_0 = arith.constant 0 : i32
    %c0_i32_1 = arith.constant 0 : i32
    return %c0_i32, %c0_i32_0 : i32, i32
  }
  func.func @transform_8(%arg0: i32) -> (i32, i32) {
    %c0_i32 = arith.constant 0 : i32
    %c0_i32_0 = arith.constant 0 : i32
    %c0_i32_1 = arith.constant 0 : i32
    return %c0_i32, %c0_i32_0 : i32, i32
  }
  func.func @transform_9(%arg0: i32) -> (i32, i32) {
    %c0_i32 = arith.constant 0 : i32
    %c0_i32_0 = arith.constant 0 : i32
    %c0_i32_1 = arith.constant 0 : i32
    return %c0_i32, %c0_i32_0 : i32, i32
  }
  func.func @transform_10(%arg0: i32) -> (i32, i32) {
    %c0_i32 = arith.constant 0 : i32
    %c0_i32_0 = arith.constant 0 : i32
    %c0_i32_1 = arith.constant 0 : i32
    return %c0_i32, %c0_i32_0 : i32, i32
  }
  func.func @transform_11(%arg0: i32) -> (i32, i32) {
    %c0_i32 = arith.constant 0 : i32
    %c0_i32_0 = arith.constant 0 : i32
    %c0_i32_1 = arith.constant 0 : i32
    return %c0_i32, %c0_i32_0 : i32, i32
  }
  func.func @transform_12(%arg0: i32) -> (i32, i32) {
    %c0_i32 = arith.constant 0 : i32
    %c0_i32_0 = arith.constant 0 : i32
    %c0_i32_1 = arith.constant 0 : i32
    return %c0_i32, %c0_i32_0 : i32, i32
  }
  func.func @transform_13(%arg0: i32) -> (i32, i32) {
    %c0_i32 = arith.constant 0 : i32
    %c0_i32_0 = arith.constant 0 : i32
    %c0_i32_1 = arith.constant 0 : i32
    return %c0_i32, %c0_i32_0 : i32, i32
  }
  func.func @transform_14(%arg0: i32) -> (i32, i32) {
    %c0_i32 = arith.constant 0 : i32
    %c0_i32_0 = arith.constant 0 : i32
    %c0_i32_1 = arith.constant 0 : i32
    return %c0_i32, %c0_i32_0 : i32, i32
  }
  func.func @transform_15(%arg0: i32) -> (i32, i32) {
    %c0_i32 = arith.constant 0 : i32
    %c0_i32_0 = arith.constant 0 : i32
    %c0_i32_1 = arith.constant 0 : i32
    return %c0_i32, %c0_i32_0 : i32, i32
  }
  func.func @transform_16(%arg0: i32) -> (i32, i32) {
    %c0_i32 = arith.constant 0 : i32
    %c0_i32_0 = arith.constant 0 : i32
    %c0_i32_1 = arith.constant 0 : i32
    return %c0_i32, %c0_i32_0 : i32, i32
  }
  func.func @transform_17(%arg0: i32) -> (i32, i32) {
    %c0_i32 = arith.constant 0 : i32
    %c0_i32_0 = arith.constant 0 : i32
    %c0_i32_1 = arith.constant 0 : i32
    return %c0_i32, %c0_i32_0 : i32, i32
  }
  func.func @transform_18(%arg0: i32) -> (i32, i32) {
    %c0_i32 = arith.constant 0 : i32
    %c0_i32_0 = arith.constant 0 : i32
    %c0_i32_1 = arith.constant 0 : i32
    return %c0_i32, %c0_i32_0 : i32, i32
  }
  func.func @transform_19(%arg0: i32) -> (i32, i32) {
    %c0_i32 = arith.constant 0 : i32
    %c0_i32_0 = arith.constant 0 : i32
    %c0_i32_1 = arith.constant 0 : i32
    return %c0_i32, %c0_i32_0 : i32, i32
  }
  func.func @transform_20(%arg0: i32) -> (i32, i32) {
    %c0_i32 = arith.constant 0 : i32
    %c0_i32_0 = arith.constant 0 : i32
    %c0_i32_1 = arith.constant 0 : i32
    return %c0_i32, %c0_i32_0 : i32, i32
  }
  func.func @transform_21(%arg0: i32) -> (i32, i32) {
    %c0_i32 = arith.constant 0 : i32
    %c0_i32_0 = arith.constant 0 : i32
    %c0_i32_1 = arith.constant 0 : i32
    return %c0_i32, %c0_i32_0 : i32, i32
  }
  func.func @transform_22(%arg0: i32) -> (i32, i32) {
    %c0_i32 = arith.constant 0 : i32
    %c0_i32_0 = arith.constant 0 : i32
    %c0_i32_1 = arith.constant 0 : i32
    return %c0_i32, %c0_i32_0 : i32, i32
  }
  func.func @transform_23(%arg0: i32) -> (i32, i32, i32) {
    %c0_i32 = arith.constant 0 : i32
    %c0_i32_0 = arith.constant 0 : i32
    %c0_i32_1 = arith.constant 0 : i32
    return %arg0, %c0_i32, %c0_i32_0 : i32, i32, i32
  }
}

</mosaic_0001>

<llo_original>
// kernel: tpu_custom_call.1
$region0: #{tpu_custom_call.1}
  #allocation0 [shape = 'u32[]', space=smem, size = 0x4, offset = 0x4, fixed_abs, tag = 'smem constant byte address 0x4 - core index']
  #allocation1 [shape = 'u32[144,128]{1,0:T(1,128)}', space=vmem, size = 0x12000, scoped, tag = 'internal scratch']
  %s0 = inlined_call_operand.vmem [shape: f32[2,8,32], index: 0, kind: input, shape index: {}]
  %s1 = inlined_call_operand.vmem [shape: f32[2,12,32], index: 1, kind: input, shape index: {}]
  %s2 = inlined_call_operand.hbm [shape: f32[1,8,8], index: 2, kind: input, shape index: {}]
  %s3 = inlined_call_operand.vmem [shape: bf16[32,96], index: 3, kind: input, shape index: {}]
  %s4 = inlined_call_operand.vmem [shape: f32[1,96], index: 4, kind: input, shape index: {}]
  %s5 = inlined_call_operand.vmem [shape: bf16[32,32], index: 5, kind: input, shape index: {}]
  %s6 = inlined_call_operand.hbm [shape: f32[1,32], index: 6, kind: input, shape index: {}]
  %s7 = inlined_call_operand.hbm [shape: f32[1,32], index: 7, kind: input, shape index: {}]
  %s8 = inlined_call_operand.hbm [shape: f32[1,32], index: 8, kind: input, shape index: {}]
  %s9 = inlined_call_operand.vmem [shape: bf16[32,32], index: 9, kind: input, shape index: {}]
  %s10 = inlined_call_operand.hbm [shape: f32[1,32], index: 10, kind: input, shape index: {}]
  %s11 = inlined_call_operand.vmem [shape: bf16[32,64], index: 11, kind: input, shape index: {}]
  %s12 = inlined_call_operand.hbm [shape: f32[1,64], index: 12, kind: input, shape index: {}]
  %s13 = inlined_call_operand.vmem [shape: bf16[32,32], index: 13, kind: input, shape index: {}]
  %s14 = inlined_call_operand.hbm [shape: f32[1,32], index: 14, kind: input, shape index: {}]
  %s15 = inlined_call_operand.vmem [shape: f32[1,32], index: 15, kind: input, shape index: {}]
  %s16 = inlined_call_operand.vmem [shape: f32[1,32], index: 16, kind: input, shape index: {}]
  %s17 = inlined_call_operand.vmem [shape: bf16[32,64], index: 17, kind: input, shape index: {}]
  %s18 = inlined_call_operand.vmem [shape: f32[1,64], index: 18, kind: input, shape index: {}]
  %s19 = inlined_call_operand.vmem [shape: bf16[64,32], index: 19, kind: input, shape index: {}]
  %s20 = inlined_call_operand.vmem [shape: f32[1,32], index: 20, kind: input, shape index: {}]
  %s21 = inlined_call_operand.vmem [shape: f32[1,32], index: 21, kind: input, shape index: {}]
  %s22 = inlined_call_operand.vmem [shape: f32[1,32], index: 22, kind: input, shape index: {}]
  %s23 = inlined_call_operand.hbm [shape: f32[2,8,32], index: 23, kind: output, shape index: {}]
  %s24 = sld [smem:[#allocation0]]
  $region153: #{tpu_custom_call.1} parent=0
    _
  %s26 = ssub.s32 1, %s24
  %s27 = scalar_select 0, %s26, %s24
  $region1: #{tpu_custom_call.1} parent=0
    #allocation2 [shape = 'u8[4096]{0}', space=vmem, size = 0x1000, scoped, tag = 'input window, operand 2, single buffered']
    #allocation3 [shape = 's32[2]{0}', space=sflag, size = 0x8, scoped, tag = 'scoped memory for tpu_custom_call.1']
    #allocation4 [shape = 's32[2]{0}', space=sflag, size = 0x8, scoped, tag = 'scoped memory for tpu_custom_call.1']
    #allocation5 [shape = 'u8[512]{0}', space=vmem, size = 0x400, scoped, tag = 'input window, operand 6, single buffered']
    #allocation6 [shape = 's32[1]{0}', space=sflag, size = 0x4, scoped, tag = 'scoped memory for tpu_custom_call.1']
    #allocation7 [shape = 'u8[512]{0}', space=vmem, size = 0x400, scoped, tag = 'input window, operand 7, single buffered']
    #allocation8 [shape = 'u8[512]{0}', space=vmem, size = 0x400, scoped, tag = 'input window, operand 8, single buffered']
    #allocation9 [shape = 's32[1]{0}', space=sflag, size = 0x4, scoped, tag = 'scoped memory for tpu_custom_call.1']
    #allocation10 [shape = 'u8[512]{0}', space=vmem, size = 0x400, scoped, tag = 'input window, operand 10, single buffered']
    #allocation11 [shape = 'u8[512]{0}', space=vmem, size = 0x400, scoped, tag = 'input window, operand 12, single buffered']
    #allocation12 [shape = 's32[1]{0}', space=sflag, size = 0x4, scoped, tag = 'scoped memory for tpu_custom_call.1']
    #allocation13 [shape = 'u8[512]{0}', space=vmem, size = 0x400, scoped, tag = 'input window, operand 14, single buffered']
    #allocation14 [shape = 'u8[8192]{0}', space=vmem, size = 0x2000, scoped, tag = 'output window, operand 0']
    %28 = vsyncpa [#allocation3], 0
    %29 = vsyncpa [#allocation6], 0
    %30 = vsyncpa [#allocation9], 0
    %31 = vsyncpa [#allocation12], 0
    %32 = vsyncpa [#allocation4], 0
    %s33 = scalar_lea.sflag [#allocation4], 1
    %34 = vsyncpa %s33, 0
    loop: start=0, step=1, limit=4
    $region2: #{tpu_custom_call.1} parent=1 // loop_pre_header
      _
    $region3: #{tpu_custom_call.1} parent=1 // loop_header
      %s36 = sphi 0, %s40
      %p37 = scmp.ge.s32.totalorder %s36, 4
      %s46 = sphi 0, %s48
      %s49 = sphi 0, %s46
      %s50 = sphi 0, %s49
      %s66 = sphi 0, %s50
      %s72 = sphi 0, %s74
      %s75 = sphi 0, %s72
      %s76 = sphi 0, %s75
      %s92 = sphi 0, %s76
      %s96 = sphi 0, %s96
      %s98 = sphi 0, %s96
      %s99 = sphi 0, %s98
      %s113 = sphi 0, %s99
      %s117 = sphi 0, %s117
      %s119 = sphi 0, %s117
      %s120 = sphi 0, %s119
      %s134 = sphi 0, %s120
      %s138 = sphi 0, %s138
      %s140 = sphi 0, %s138
      %s141 = sphi 0, %s140
      %s155 = sphi 0, %s141
      %s159 = sphi 0, %s159
      %s161 = sphi 0, %s159
      %s162 = sphi 0, %s161
      %s176 = sphi 0, %s162
      %s180 = sphi 0, %s180
      %s182 = sphi 0, %s180
      %s183 = sphi 0, %s182
      %s197 = sphi 0, %s183
      %s201 = sphi 0, %s201
      %s203 = sphi 0, %s201
      %s204 = sphi 0, %s203
      %s218 = sphi 0, %s204
      %s222 = sphi 0, %s222
      %s224 = sphi 0, %s222
      %s225 = sphi 0, %s224
      %s239 = sphi 0, %s225
      %s243 = sphi 0, %s243
      %s245 = sphi 0, %s243
      %s246 = sphi 0, %s245
      %s260 = sphi 0, %s246
      %s264 = sphi 0, %s264
      %s266 = sphi 0, %s264
      %s267 = sphi 0, %s266
      %s281 = sphi 0, %s267
      %s285 = sphi 0, %s285
      %s287 = sphi 0, %s285
      %s288 = sphi 0, %s287
      %s302 = sphi 0, %s288
      %s306 = sphi 0, %s306
      %s308 = sphi 0, %s306
      %s309 = sphi 0, %s308
      %s323 = sphi 0, %s309
      %s327 = sphi 0, %s327
      %s329 = sphi 0, %s327
      %s330 = sphi 0, %s329
      %s344 = sphi 0, %s330
      %s348 = sphi 0, %s348
      %s350 = sphi 0, %s348
      %s351 = sphi 0, %s350
      %s365 = sphi 0, %s351
      %s369 = sphi 0, %s369
      %s371 = sphi 0, %s369
      %s372 = sphi 0, %s371
      %s386 = sphi 0, %s372
      %s390 = sphi 0, %s390
      %s392 = sphi 0, %s390
      %s393 = sphi 0, %s392
      %s407 = sphi 0, %s393
      %s411 = sphi 0, %s411
      %s413 = sphi 0, %s411
      %s414 = sphi 0, %s413
      %s428 = sphi 0, %s414
      %s432 = sphi 0, %s432
      %s434 = sphi 0, %s432
      %s435 = sphi 0, %s434
      %s449 = sphi 0, %s435
      %s453 = sphi 0, %s453
      %s455 = sphi 0, %s453
      %s456 = sphi 0, %s455
      %s470 = sphi 0, %s456
      %s474 = sphi 0, %s474
      %s476 = sphi 0, %s474
      %s477 = sphi 0, %s476
      %s491 = sphi 0, %s477
      %s495 = sphi 0, %s495
      %s497 = sphi 0, %s495
      %s498 = sphi 0, %s497
      %s512 = sphi 0, %s498
      %s516 = sphi 0, %s516
      %s518 = sphi 0, %s516
      %s519 = sphi 0, %s518
      %s533 = sphi 0, %s519
      %s539 = sphi 0, %s541
      %s542 = sphi 0, %s539
      %s543 = sphi 0, %s542
      %s559 = sphi 0, %s543
    $region4: #{tpu_custom_call.1} parent=1 // loop_header_branch
      %39 = sbr.rel (%p37) target = $region8
    $region5: #{tpu_custom_call.1} parent=1 // loop_body
      %s41 = ssub.s32 %s36, 1
      %s42 = ssub.s32 %s36, 2
      %s43 = sadd.s32 %s36, 1
      %s44 = ssub.s32 %s36, %s43
      %p45 = scmp.eq.s32.totalorder %s44, 0
      %s47 = sadd.s32 %s46, 1
      %s48 = scalar_select %p45, %s46, %s47
      %p51 = pneg %p45
      %p52 = scmp.eq.s32.totalorder %s36, 1
      %p53 = por %p51, %p52
      %p54 = scmp.ne.s32.totalorder %s46, %s49
      %p55 = scmp.eq.s32.totalorder %s36, 0
      %p56 = por %p54, %p55
      %p57 = scmp.ne.s32.totalorder %s46, %s49
      %p58 = scmp.eq.s32.totalorder %s41, 1
      %p59 = por %p57, %p58
      %p60 = scmp.ne.s32.totalorder %s49, %s50
      %p61 = scmp.eq.s32.totalorder %s41, 0
      %p62 = por %p60, %p61
      %p63 = scmp.ne.s32.totalorder %s49, %s50
      %p64 = scmp.eq.s32.totalorder %s42, 1
      %p65 = por %p63, %p64
      %p67 = scmp.ne.s32.totalorder %s50, %s66
      %p68 = scmp.eq.s32.totalorder %s42, 0
      %p69 = por %p67, %p68
      %s70 = ssub.s32 %s36, %s43
      %p71 = scmp.eq.s32.totalorder %s70, 0
      %s73 = sadd.s32 %s72, 1
      %s74 = scalar_select %p71, %s72, %s73
      %p77 = pneg %p71
      %p78 = scmp.eq.s32.totalorder %s36, 1
      %p79 = por %p77, %p78
      %p80 = scmp.ne.s32.totalorder %s72, %s75
      %p81 = scmp.eq.s32.totalorder %s36, 0
      %p82 = por %p80, %p81
      %p83 = scmp.ne.s32.totalorder %s72, %s75
      %p84 = scmp.eq.s32.totalorder %s41, 1
      %p85 = por %p83, %p84
      %p86 = scmp.ne.s32.totalorder %s75, %s76
      %p87 = scmp.eq.s32.totalorder %s41, 0
      %p88 = por %p86, %p87
      %p89 = scmp.ne.s32.totalorder %s75, %s76
      %p90 = scmp.eq.s32.totalorder %s42, 1
      %p91 = por %p89, %p90
      %p93 = scmp.ne.s32.totalorder %s76, %s92
      %p94 = scmp.eq.s32.totalorder %s42, 0
      %p95 = por %p93, %p94
      %s97 = sadd.s32 %s96, 1
      %p100 = scmp.eq.s32.totalorder %s36, 1
      %p101 = scmp.ne.s32.totalorder %s96, %s98
      %p102 = scmp.eq.s32.totalorder %s36, 0
      %p103 = por %p101, %p102
      %p104 = scmp.ne.s32.totalorder %s96, %s98
      %p105 = scmp.eq.s32.totalorder %s41, 1
      %p106 = por %p104, %p105
      %p107 = scmp.ne.s32.totalorder %s98, %s99
      %p108 = scmp.eq.s32.totalorder %s41, 0
      %p109 = por %p107, %p108
      %p110 = scmp.ne.s32.totalorder %s98, %s99
      %p111 = scmp.eq.s32.totalorder %s42, 1
      %p112 = por %p110, %p111
      %p114 = scmp.ne.s32.totalorder %s99, %s113
      %p115 = scmp.eq.s32.totalorder %s42, 0
      %p116 = por %p114, %p115
      %s118 = sadd.s32 %s117, 1
      %p121 = scmp.eq.s32.totalorder %s36, 1
      %p122 = scmp.ne.s32.totalorder %s117, %s119
      %p123 = scmp.eq.s32.totalorder %s36, 0
      %p124 = por %p122, %p123
      %p125 = scmp.ne.s32.totalorder %s117, %s119
      %p126 = scmp.eq.s32.totalorder %s41, 1
      %p127 = por %p125, %p126
      %p128 = scmp.ne.s32.totalorder %s119, %s120
      %p129 = scmp.eq.s32.totalorder %s41, 0
      %p130 = por %p128, %p129
      %p131 = scmp.ne.s32.totalorder %s119, %s120
      %p132 = scmp.eq.s32.totalorder %s42, 1
      %p133 = por %p131, %p132
      %p135 = scmp.ne.s32.totalorder %s120, %s134
      %p136 = scmp.eq.s32.totalorder %s42, 0
      %p137 = por %p135, %p136
      %s139 = sadd.s32 %s138, 1
      %p142 = scmp.eq.s32.totalorder %s36, 1
      %p143 = scmp.ne.s32.totalorder %s138, %s140
      %p144 = scmp.eq.s32.totalorder %s36, 0
      %p145 = por %p143, %p144
      %p146 = scmp.ne.s32.totalorder %s138, %s140
      %p147 = scmp.eq.s32.totalorder %s41, 1
      %p148 = por %p146, %p147
      %p149 = scmp.ne.s32.totalorder %s140, %s141
      %p150 = scmp.eq.s32.totalorder %s41, 0
      %p151 = por %p149, %p150
      %p152 = scmp.ne.s32.totalorder %s140, %s141
      %p153 = scmp.eq.s32.totalorder %s42, 1
      %p154 = por %p152, %p153
      %p156 = scmp.ne.s32.totalorder %s141, %s155
      %p157 = scmp.eq.s32.totalorder %s42, 0
      %p158 = por %p156, %p157
      %s160 = sadd.s32 %s159, 1
      %p163 = scmp.eq.s32.totalorder %s36, 1
      %p164 = scmp.ne.s32.totalorder %s159, %s161
      %p165 = scmp.eq.s32.totalorder %s36, 0
      %p166 = por %p164, %p165
      %p167 = scmp.ne.s32.totalorder %s159, %s161
      %p168 = scmp.eq.s32.totalorder %s41, 1
      %p169 = por %p167, %p168
      %p170 = scmp.ne.s32.totalorder %s161, %s162
      %p171 = scmp.eq.s32.totalorder %s41, 0
      %p172 = por %p170, %p171
      %p173 = scmp.ne.s32.totalorder %s161, %s162
      %p174 = scmp.eq.s32.totalorder %s42, 1
      %p175 = por %p173, %p174
      %p177 = scmp.ne.s32.totalorder %s162, %s176
      %p178 = scmp.eq.s32.totalorder %s42, 0
      %p179 = por %p177, %p178
      %s181 = sadd.s32 %s180, 1
      %p184 = scmp.eq.s32.totalorder %s36, 1
      %p185 = scmp.ne.s32.totalorder %s180, %s182
      %p186 = scmp.eq.s32.totalorder %s36, 0
      %p187 = por %p185, %p186
      %p188 = scmp.ne.s32.totalorder %s180, %s182
      %p189 = scmp.eq.s32.totalorder %s41, 1
      %p190 = por %p188, %p189
      %p191 = scmp.ne.s32.totalorder %s182, %s183
      %p192 = scmp.eq.s32.totalorder %s41, 0
      %p193 = por %p191, %p192
      %p194 = scmp.ne.s32.totalorder %s182, %s183
      %p195 = scmp.eq.s32.totalorder %s42, 1
      %p196 = por %p194, %p195
      %p198 = scmp.ne.s32.totalorder %s183, %s197
      %p199 = scmp.eq.s32.totalorder %s42, 0
      %p200 = por %p198, %p199
      %s202 = sadd.s32 %s201, 1
      %p205 = scmp.eq.s32.totalorder %s36, 1
      %p206 = scmp.ne.s32.totalorder %s201, %s203
      %p207 = scmp.eq.s32.totalorder %s36, 0
      %p208 = por %p206, %p207
      %p209 = scmp.ne.s32.totalorder %s201, %s203
      %p210 = scmp.eq.s32.totalorder %s41, 1
      %p211 = por %p209, %p210
      %p212 = scmp.ne.s32.totalorder %s203, %s204
      %p213 = scmp.eq.s32.totalorder %s41, 0
      %p214 = por %p212, %p213
      %p215 = scmp.ne.s32.totalorder %s203, %s204
      %p216 = scmp.eq.s32.totalorder %s42, 1
      %p217 = por %p215, %p216
      %p219 = scmp.ne.s32.totalorder %s204, %s218
      %p220 = scmp.eq.s32.totalorder %s42, 0
      %p221 = por %p219, %p220
      %s223 = sadd.s32 %s222, 1
      %p226 = scmp.eq.s32.totalorder %s36, 1
      %p227 = scmp.ne.s32.totalorder %s222, %s224
      %p228 = scmp.eq.s32.totalorder %s36, 0
      %p229 = por %p227, %p228
      %p230 = scmp.ne.s32.totalorder %s222, %s224
      %p231 = scmp.eq.s32.totalorder %s41, 1
      %p232 = por %p230, %p231
      %p233 = scmp.ne.s32.totalorder %s224, %s225
      %p234 = scmp.eq.s32.totalorder %s41, 0
      %p235 = por %p233, %p234
      %p236 = scmp.ne.s32.totalorder %s224, %s225
      %p237 = scmp.eq.s32.totalorder %s42, 1
      %p238 = por %p236, %p237
      %p240 = scmp.ne.s32.totalorder %s225, %s239
      %p241 = scmp.eq.s32.totalorder %s42, 0
      %p242 = por %p240, %p241
      %s244 = sadd.s32 %s243, 1
      %p247 = scmp.eq.s32.totalorder %s36, 1
      %p248 = scmp.ne.s32.totalorder %s243, %s245
      %p249 = scmp.eq.s32.totalorder %s36, 0
      %p250 = por %p248, %p249
      %p251 = scmp.ne.s32.totalorder %s243, %s245
      %p252 = scmp.eq.s32.totalorder %s41, 1
      %p253 = por %p251, %p252
      %p254 = scmp.ne.s32.totalorder %s245, %s246
      %p255 = scmp.eq.s32.totalorder %s41, 0
      %p256 = por %p254, %p255
      %p257 = scmp.ne.s32.totalorder %s245, %s246
      %p258 = scmp.eq.s32.totalorder %s42, 1
      %p259 = por %p257, %p258
      %p261 = scmp.ne.s32.totalorder %s246, %s260
      %p262 = scmp.eq.s32.totalorder %s42, 0
      %p263 = por %p261, %p262
      %s265 = sadd.s32 %s264, 1
      %p268 = scmp.eq.s32.totalorder %s36, 1
      %p269 = scmp.ne.s32.totalorder %s264, %s266
      %p270 = scmp.eq.s32.totalorder %s36, 0
      %p271 = por %p269, %p270
      %p272 = scmp.ne.s32.totalorder %s264, %s266
      %p273 = scmp.eq.s32.totalorder %s41, 1
      %p274 = por %p272, %p273
      %p275 = scmp.ne.s32.totalorder %s266, %s267
      %p276 = scmp.eq.s32.totalorder %s41, 0
      %p277 = por %p275, %p276
      %p278 = scmp.ne.s32.totalorder %s266, %s267
      %p279 = scmp.eq.s32.totalorder %s42, 1
      %p280 = por %p278, %p279
      %p282 = scmp.ne.s32.totalorder %s267, %s281
      %p283 = scmp.eq.s32.totalorder %s42, 0
      %p284 = por %p282, %p283
      %s286 = sadd.s32 %s285, 1
      %p289 = scmp.eq.s32.totalorder %s36, 1
      %p290 = scmp.ne.s32.totalorder %s285, %s287
      %p291 = scmp.eq.s32.totalorder %s36, 0
      %p292 = por %p290, %p291
      %p293 = scmp.ne.s32.totalorder %s285, %s287
      %p294 = scmp.eq.s32.totalorder %s41, 1
      %p295 = por %p293, %p294
      %p296 = scmp.ne.s32.totalorder %s287, %s288
      %p297 = scmp.eq.s32.totalorder %s41, 0
      %p298 = por %p296, %p297
      %p299 = scmp.ne.s32.totalorder %s287, %s288
      %p300 = scmp.eq.s32.totalorder %s42, 1
      %p301 = por %p299, %p300
      %p303 = scmp.ne.s32.totalorder %s288, %s302
      %p304 = scmp.eq.s32.totalorder %s42, 0
      %p305 = por %p303, %p304
      %s307 = sadd.s32 %s306, 1
      %p310 = scmp.eq.s32.totalorder %s36, 1
      %p311 = scmp.ne.s32.totalorder %s306, %s308
      %p312 = scmp.eq.s32.totalorder %s36, 0
      %p313 = por %p311, %p312
      %p314 = scmp.ne.s32.totalorder %s306, %s308
      %p315 = scmp.eq.s32.totalorder %s41, 1
      %p316 = por %p314, %p315
      %p317 = scmp.ne.s32.totalorder %s308, %s309
      %p318 = scmp.eq.s32.totalorder %s41, 0
      %p319 = por %p317, %p318
      %p320 = scmp.ne.s32.totalorder %s308, %s309
      %p321 = scmp.eq.s32.totalorder %s42, 1
      %p322 = por %p320, %p321
      %p324 = scmp.ne.s32.totalorder %s309, %s323
      %p325 = scmp.eq.s32.totalorder %s42, 0
      %p326 = por %p324, %p325
      %s328 = sadd.s32 %s327, 1
      %p331 = scmp.eq.s32.totalorder %s36, 1
      %p332 = scmp.ne.s32.totalorder %s327, %s329
      %p333 = scmp.eq.s32.totalorder %s36, 0
      %p334 = por %p332, %p333
      %p335 = scmp.ne.s32.totalorder %s327, %s329
      %p336 = scmp.eq.s32.totalorder %s41, 1
      %p337 = por %p335, %p336
      %p338 = scmp.ne.s32.totalorder %s329, %s330
      %p339 = scmp.eq.s32.totalorder %s41, 0
      %p340 = por %p338, %p339
      %p341 = scmp.ne.s32.totalorder %s329, %s330
      %p342 = scmp.eq.s32.totalorder %s42, 1
      %p343 = por %p341, %p342
      %p345 = scmp.ne.s32.totalorder %s330, %s344
      %p346 = scmp.eq.s32.totalorder %s42, 0
      %p347 = por %p345, %p346
      %s349 = sadd.s32 %s348, 1
      %p352 = scmp.eq.s32.totalorder %s36, 1
      %p353 = scmp.ne.s32.totalorder %s348, %s350
      %p354 = scmp.eq.s32.totalorder %s36, 0
      %p355 = por %p353, %p354
      %p356 = scmp.ne.s32.totalorder %s348, %s350
      %p357 = scmp.eq.s32.totalorder %s41, 1
      %p358 = por %p356, %p357
      %p359 = scmp.ne.s32.totalorder %s350, %s351
      %p360 = scmp.eq.s32.totalorder %s41, 0
      %p361 = por %p359, %p360
      %p362 = scmp.ne.s32.totalorder %s350, %s351
      %p363 = scmp.eq.s32.totalorder %s42, 1
      %p364 = por %p362, %p363
      %p366 = scmp.ne.s32.totalorder %s351, %s365
      %p367 = scmp.eq.s32.totalorder %s42, 0
      %p368 = por %p366, %p367
      %s370 = sadd.s32 %s369, 1
      %p373 = scmp.eq.s32.totalorder %s36, 1
      %p374 = scmp.ne.s32.totalorder %s369, %s371
      %p375 = scmp.eq.s32.totalorder %s36, 0
      %p376 = por %p374, %p375
      %p377 = scmp.ne.s32.totalorder %s369, %s371
      %p378 = scmp.eq.s32.totalorder %s41, 1
      %p379 = por %p377, %p378
      %p380 = scmp.ne.s32.totalorder %s371, %s372
      %p381 = scmp.eq.s32.totalorder %s41, 0
      %p382 = por %p380, %p381
      %p383 = scmp.ne.s32.totalorder %s371, %s372
      %p384 = scmp.eq.s32.totalorder %s42, 1
      %p385 = por %p383, %p384
      %p387 = scmp.ne.s32.totalorder %s372, %s386
      %p388 = scmp.eq.s32.totalorder %s42, 0
      %p389 = por %p387, %p388
      %s391 = sadd.s32 %s390, 1
      %p394 = scmp.eq.s32.totalorder %s36, 1
      %p395 = scmp.ne.s32.totalorder %s390, %s392
      %p396 = scmp.eq.s32.totalorder %s36, 0
      %p397 = por %p395, %p396
      %p398 = scmp.ne.s32.totalorder %s390, %s392
      %p399 = scmp.eq.s32.totalorder %s41, 1
      %p400 = por %p398, %p399
      %p401 = scmp.ne.s32.totalorder %s392, %s393
      %p402 = scmp.eq.s32.totalorder %s41, 0
      %p403 = por %p401, %p402
      %p404 = scmp.ne.s32.totalorder %s392, %s393
      %p405 = scmp.eq.s32.totalorder %s42, 1
      %p406 = por %p404, %p405
      %p408 = scmp.ne.s32.totalorder %s393, %s407
      %p409 = scmp.eq.s32.totalorder %s42, 0
      %p410 = por %p408, %p409
      %s412 = sadd.s32 %s411, 1
      %p415 = scmp.eq.s32.totalorder %s36, 1
      %p416 = scmp.ne.s32.totalorder %s411, %s413
      %p417 = scmp.eq.s32.totalorder %s36, 0
      %p418 = por %p416, %p417
      %p419 = scmp.ne.s32.totalorder %s411, %s413
      %p420 = scmp.eq.s32.totalorder %s41, 1
      %p421 = por %p419, %p420
      %p422 = scmp.ne.s32.totalorder %s413, %s414
      %p423 = scmp.eq.s32.totalorder %s41, 0
      %p424 = por %p422, %p423
      %p425 = scmp.ne.s32.totalorder %s413, %s414
      %p426 = scmp.eq.s32.totalorder %s42, 1
      %p427 = por %p425, %p426
      %p429 = scmp.ne.s32.totalorder %s414, %s428
      %p430 = scmp.eq.s32.totalorder %s42, 0
      %p431 = por %p429, %p430
      %s433 = sadd.s32 %s432, 1
      %p436 = scmp.eq.s32.totalorder %s36, 1
      %p437 = scmp.ne.s32.totalorder %s432, %s434
      %p438 = scmp.eq.s32.totalorder %s36, 0
      %p439 = por %p437, %p438
      %p440 = scmp.ne.s32.totalorder %s432, %s434
      %p441 = scmp.eq.s32.totalorder %s41, 1
      %p442 = por %p440, %p441
      %p443 = scmp.ne.s32.totalorder %s434, %s435
      %p444 = scmp.eq.s32.totalorder %s41, 0
      %p445 = por %p443, %p444
      %p446 = scmp.ne.s32.totalorder %s434, %s435
      %p447 = scmp.eq.s32.totalorder %s42, 1
      %p448 = por %p446, %p447
      %p450 = scmp.ne.s32.totalorder %s435, %s449
      %p451 = scmp.eq.s32.totalorder %s42, 0
      %p452 = por %p450, %p451
      %s454 = sadd.s32 %s453, 1
      %p457 = scmp.eq.s32.totalorder %s36, 1
      %p458 = scmp.ne.s32.totalorder %s453, %s455
      %p459 = scmp.eq.s32.totalorder %s36, 0
      %p460 = por %p458, %p459
      %p461 = scmp.ne.s32.totalorder %s453, %s455
      %p462 = scmp.eq.s32.totalorder %s41, 1
      %p463 = por %p461, %p462
      %p464 = scmp.ne.s32.totalorder %s455, %s456
      %p465 = scmp.eq.s32.totalorder %s41, 0
      %p466 = por %p464, %p465
      %p467 = scmp.ne.s32.totalorder %s455, %s456
      %p468 = scmp.eq.s32.totalorder %s42, 1
      %p469 = por %p467, %p468
      %p471 = scmp.ne.s32.totalorder %s456, %s470
      %p472 = scmp.eq.s32.totalorder %s42, 0
      %p473 = por %p471, %p472
      %s475 = sadd.s32 %s474, 1
      %p478 = scmp.eq.s32.totalorder %s36, 1
      %p479 = scmp.ne.s32.totalorder %s474, %s476
      %p480 = scmp.eq.s32.totalorder %s36, 0
      %p481 = por %p479, %p480
      %p482 = scmp.ne.s32.totalorder %s474, %s476
      %p483 = scmp.eq.s32.totalorder %s41, 1
      %p484 = por %p482, %p483
      %p485 = scmp.ne.s32.totalorder %s476, %s477
      %p486 = scmp.eq.s32.totalorder %s41, 0
      %p487 = por %p485, %p486
      %p488 = scmp.ne.s32.totalorder %s476, %s477
      %p489 = scmp.eq.s32.totalorder %s42, 1
      %p490 = por %p488, %p489
      %p492 = scmp.ne.s32.totalorder %s477, %s491
      %p493 = scmp.eq.s32.totalorder %s42, 0
      %p494 = por %p492, %p493
      %s496 = sadd.s32 %s495, 1
      %p499 = scmp.eq.s32.totalorder %s36, 1
      %p500 = scmp.ne.s32.totalorder %s495, %s497
      %p501 = scmp.eq.s32.totalorder %s36, 0
      %p502 = por %p500, %p501
      %p503 = scmp.ne.s32.totalorder %s495, %s497
      %p504 = scmp.eq.s32.totalorder %s41, 1
      %p505 = por %p503, %p504
      %p506 = scmp.ne.s32.totalorder %s497, %s498
      %p507 = scmp.eq.s32.totalorder %s41, 0
      %p508 = por %p506, %p507
      %p509 = scmp.ne.s32.totalorder %s497, %s498
      %p510 = scmp.eq.s32.totalorder %s42, 1
      %p511 = por %p509, %p510
      %p513 = scmp.ne.s32.totalorder %s498, %s512
      %p514 = scmp.eq.s32.totalorder %s42, 0
      %p515 = por %p513, %p514
      %s517 = sadd.s32 %s516, 1
      %p520 = scmp.eq.s32.totalorder %s36, 1
      %p521 = scmp.ne.s32.totalorder %s516, %s518
      %p522 = scmp.eq.s32.totalorder %s36, 0
      %p523 = por %p521, %p522
      %p524 = scmp.ne.s32.totalorder %s516, %s518
      %p525 = scmp.eq.s32.totalorder %s41, 1
      %p526 = por %p524, %p525
      %p527 = scmp.ne.s32.totalorder %s518, %s519
      %p528 = scmp.eq.s32.totalorder %s41, 0
      %p529 = por %p527, %p528
      %p530 = scmp.ne.s32.totalorder %s518, %s519
      %p531 = scmp.eq.s32.totalorder %s42, 1
      %p532 = por %p530, %p531
      %p534 = scmp.ne.s32.totalorder %s519, %s533
      %p535 = scmp.eq.s32.totalorder %s42, 0
      %p536 = por %p534, %p535
      %s537 = ssub.s32 %s36, %s43
      %p538 = scmp.eq.s32.totalorder %s537, 0
      %s540 = sadd.s32 %s539, 1
      %s541 = scalar_select %p538, %s539, %s540
      %p544 = pneg %p538
      %p545 = scmp.eq.s32.totalorder %s36, 1
      %p546 = por %p544, %p545
      %p547 = scmp.ne.s32.totalorder %s539, %s542
      %p548 = scmp.eq.s32.totalorder %s36, 0
      %p549 = por %p547, %p548
      %p550 = scmp.ne.s32.totalorder %s539, %s542
      %p551 = scmp.eq.s32.totalorder %s41, 1
      %p552 = por %p550, %p551
      %p553 = scmp.ne.s32.totalorder %s542, %s543
      %p554 = scmp.eq.s32.totalorder %s41, 0
      %p555 = por %p553, %p554
      %p556 = scmp.ne.s32.totalorder %s542, %s543
      %p557 = scmp.eq.s32.totalorder %s42, 1
      %p558 = por %p556, %p557
      %p560 = scmp.ne.s32.totalorder %s543, %s559
      %p561 = scmp.eq.s32.totalorder %s42, 0
      %p562 = por %p560, %p561
      %p563 = scmp.le.s32.totalorder 1, %s36
      %p564 = scmp.lt.s32.totalorder %s36, 3
      %p565 = pnand %p563, %p564
      %p566 = pneg %p565
      // Predicated region
      $region9: #{tpu_custom_call.1} parent=5 // pred_check
        _
      $region10: #{tpu_custom_call.1} parent=5 // pred_check_branch
        %568 = sbr.rel (%p565) target = $region12
      $region11: #{tpu_custom_call.1} parent=5 // pred_region
        %s569 = ssub.s32 %s36, 1
        // Predicated region
        $region13: #{tpu_custom_call.1} parent=11 // pred_check
          %p570 = pneg %p109
        $region14: #{tpu_custom_call.1} parent=11 // pred_check_branch
          %572 = sbr.rel (%p570) target = $region16
        $region15: #{tpu_custom_call.1} parent=11 // pred_region
          %s574 = ssub.s32 128, 128
          %575 = vsyncadd [#allocation3], %s574
          %s577 = sshll.u32 [#allocation2], 4
          %s578 = int_to_ptr.vmem [resolvable:$true] %s577
          %580 = dma.hbm_to_vmem [thread:$0]  %s2, 128, %s578, [#allocation3]
        $region16: #{tpu_custom_call.1} parent=11 // pred_fallthru
          _
        // Predicated region
        $region17: #{tpu_custom_call.1} parent=11 // pred_check
          %p581 = pneg %p130
        $region18: #{tpu_custom_call.1} parent=11 // pred_check_branch
          %583 = sbr.rel (%p581) target = $region20
        $region19: #{tpu_custom_call.1} parent=11 // pred_region
          _
        $region20: #{tpu_custom_call.1} parent=11 // pred_fallthru
          _
        // Predicated region
        $region21: #{tpu_custom_call.1} parent=11 // pred_check
          %p584 = pneg %p151
        $region22: #{tpu_custom_call.1} parent=11 // pred_check_branch
          %586 = sbr.rel (%p584) target = $region24
        $region23: #{tpu_custom_call.1} parent=11 // pred_region
          _
        $region24: #{tpu_custom_call.1} parent=11 // pred_fallthru
          _
        // Predicated region
        $region25: #{tpu_custom_call.1} parent=11 // pred_check
          %p587 = pneg %p172
        $region26: #{tpu_custom_call.1} parent=11 // pred_check_branch
          %589 = sbr.rel (%p587) target = $region28
        $region27: #{tpu_custom_call.1} parent=11 // pred_region
          _
        $region28: #{tpu_custom_call.1} parent=11 // pred_fallthru
          _
        // Predicated region
        $region29: #{tpu_custom_call.1} parent=11 // pred_check
          %p590 = pneg %p193
        $region30: #{tpu_custom_call.1} parent=11 // pred_check_branch
          %592 = sbr.rel (%p590) target = $region32
        $region31: #{tpu_custom_call.1} parent=11 // pred_region
          %s594 = ssub.s32 16, 16
          %595 = vsyncadd [#allocation6], %s594
          %s597 = sshll.u32 [#allocation5], 4
          %s598 = int_to_ptr.vmem [resolvable:$true] %s597
          %600 = dma.hbm_to_vmem [thread:$0]  %s6, 16, %s598, [#allocation6]
        $region32: #{tpu_custom_call.1} parent=11 // pred_fallthru
          _
        // Predicated region
        $region33: #{tpu_custom_call.1} parent=11 // pred_check
          %p601 = pneg %p214
        $region34: #{tpu_custom_call.1} parent=11 // pred_check_branch
          %603 = sbr.rel (%p601) target = $region36
        $region35: #{tpu_custom_call.1} parent=11 // pred_region
          %s605 = ssub.s32 16, 16
          %606 = vsyncadd [#allocation6], %s605
          %s608 = sshll.u32 [#allocation7], 4
          %s609 = int_to_ptr.vmem [resolvable:$true] %s608
          %611 = dma.hbm_to_vmem [thread:$0]  %s7, 16, %s609, [#allocation6]
        $region36: #{tpu_custom_call.1} parent=11 // pred_fallthru
          _
        // Predicated region
        $region37: #{tpu_custom_call.1} parent=11 // pred_check
          %p612 = pneg %p235
        $region38: #{tpu_custom_call.1} parent=11 // pred_check_branch
          %614 = sbr.rel (%p612) target = $region40
        $region39: #{tpu_custom_call.1} parent=11 // pred_region
          %s616 = ssub.s32 16, 16
          %617 = vsyncadd [#allocation9], %s616
          %s619 = sshll.u32 [#allocation8], 4
          %s620 = int_to_ptr.vmem [resolvable:$true] %s619
          %622 = dma.hbm_to_vmem [thread:$0]  %s8, 16, %s620, [#allocation9]
        $region40: #{tpu_custom_call.1} parent=11 // pred_fallthru
          _
        // Predicated region
        $region41: #{tpu_custom_call.1} parent=11 // pred_check
          %p623 = pneg %p256
        $region42: #{tpu_custom_call.1} parent=11 // pred_check_branch
          %625 = sbr.rel (%p623) target = $region44
        $region43: #{tpu_custom_call.1} parent=11 // pred_region
          _
        $region44: #{tpu_custom_call.1} parent=11 // pred_fallthru
          _
        // Predicated region
        $region45: #{tpu_custom_call.1} parent=11 // pred_check
          %p626 = pneg %p277
        $region46: #{tpu_custom_call.1} parent=11 // pred_check_branch
          %628 = sbr.rel (%p626) target = $region48
        $region47: #{tpu_custom_call.1} parent=11 // pred_region
          %s630 = ssub.s32 16, 16
          %631 = vsyncadd [#allocation9], %s630
          %s633 = sshll.u32 [#allocation10], 4
          %s634 = int_to_ptr.vmem [resolvable:$true] %s633
          %636 = dma.hbm_to_vmem [thread:$0]  %s10, 16, %s634, [#allocation9]
        $region48: #{tpu_custom_call.1} parent=11 // pred_fallthru
          _
        // Predicated region
        $region49: #{tpu_custom_call.1} parent=11 // pred_check
          %p637 = pneg %p298
        $region50: #{tpu_custom_call.1} parent=11 // pred_check_branch
          %639 = sbr.rel (%p637) target = $region52
        $region51: #{tpu_custom_call.1} parent=11 // pred_region
          _
        $region52: #{tpu_custom_call.1} parent=11 // pred_fallthru
          _
        // Predicated region
        $region53: #{tpu_custom_call.1} parent=11 // pred_check
          %p640 = pneg %p319
        $region54: #{tpu_custom_call.1} parent=11 // pred_check_branch
          %642 = sbr.rel (%p640) target = $region56
        $region55: #{tpu_custom_call.1} parent=11 // pred_region
          %s644 = ssub.s32 16, 16
          %645 = vsyncadd [#allocation12], %s644
          %s647 = sshll.u32 [#allocation11], 4
          %s648 = int_to_ptr.vmem [resolvable:$true] %s647
          %650 = dma.hbm_to_vmem [thread:$0]  %s12, 16, %s648, [#allocation12]
        $region56: #{tpu_custom_call.1} parent=11 // pred_fallthru
          _
        // Predicated region
        $region57: #{tpu_custom_call.1} parent=11 // pred_check
          %p651 = pneg %p340
        $region58: #{tpu_custom_call.1} parent=11 // pred_check_branch
          %653 = sbr.rel (%p651) target = $region60
        $region59: #{tpu_custom_call.1} parent=11 // pred_region
          _
        $region60: #{tpu_custom_call.1} parent=11 // pred_fallthru
          _
        // Predicated region
        $region61: #{tpu_custom_call.1} parent=11 // pred_check
          %p654 = pneg %p361
        $region62: #{tpu_custom_call.1} parent=11 // pred_check_branch
          %656 = sbr.rel (%p654) target = $region64
        $region63: #{tpu_custom_call.1} parent=11 // pred_region
          %s658 = ssub.s32 16, 16
          %659 = vsyncadd [#allocation12], %s658
          %s661 = sshll.u32 [#allocation13], 4
          %s662 = int_to_ptr.vmem [resolvable:$true] %s661
          %664 = dma.hbm_to_vmem [thread:$0]  %s14, 16, %s662, [#allocation12]
        $region64: #{tpu_custom_call.1} parent=11 // pred_fallthru
          _
        // Predicated region
        $region65: #{tpu_custom_call.1} parent=11 // pred_check
          %p665 = pneg %p382
        $region66: #{tpu_custom_call.1} parent=11 // pred_check_branch
          %667 = sbr.rel (%p665) target = $region68
        $region67: #{tpu_custom_call.1} parent=11 // pred_region
          _
        $region68: #{tpu_custom_call.1} parent=11 // pred_fallthru
          _
        // Predicated region
        $region69: #{tpu_custom_call.1} parent=11 // pred_check
          %p668 = pneg %p403
        $region70: #{tpu_custom_call.1} parent=11 // pred_check_branch
          %670 = sbr.rel (%p668) target = $region72
        $region71: #{tpu_custom_call.1} parent=11 // pred_region
          _
        $region72: #{tpu_custom_call.1} parent=11 // pred_fallthru
          _
        // Predicated region
        $region73: #{tpu_custom_call.1} parent=11 // pred_check
          %p671 = pneg %p424
        $region74: #{tpu_custom_call.1} parent=11 // pred_check_branch
          %673 = sbr.rel (%p671) target = $region76
        $region75: #{tpu_custom_call.1} parent=11 // pred_region
          _
        $region76: #{tpu_custom_call.1} parent=11 // pred_fallthru
          _
        // Predicated region
        $region77: #{tpu_custom_call.1} parent=11 // pred_check
          %p674 = pneg %p445
        $region78: #{tpu_custom_call.1} parent=11 // pred_check_branch
          %676 = sbr.rel (%p674) target = $region80
        $region79: #{tpu_custom_call.1} parent=11 // pred_region
          _
        $region80: #{tpu_custom_call.1} parent=11 // pred_fallthru
          _
        // Predicated region
        $region81: #{tpu_custom_call.1} parent=11 // pred_check
          %p677 = pneg %p466
        $region82: #{tpu_custom_call.1} parent=11 // pred_check_branch
          %679 = sbr.rel (%p677) target = $region84
        $region83: #{tpu_custom_call.1} parent=11 // pred_region
          _
        $region84: #{tpu_custom_call.1} parent=11 // pred_fallthru
          _
        // Predicated region
        $region85: #{tpu_custom_call.1} parent=11 // pred_check
          %p680 = pneg %p487
        $region86: #{tpu_custom_call.1} parent=11 // pred_check_branch
          %682 = sbr.rel (%p680) target = $region88
        $region87: #{tpu_custom_call.1} parent=11 // pred_region
          _
        $region88: #{tpu_custom_call.1} parent=11 // pred_fallthru
          _
        // Predicated region
        $region89: #{tpu_custom_call.1} parent=11 // pred_check
          %p683 = pneg %p508
        $region90: #{tpu_custom_call.1} parent=11 // pred_check_branch
          %685 = sbr.rel (%p683) target = $region92
        $region91: #{tpu_custom_call.1} parent=11 // pred_region
          _
        $region92: #{tpu_custom_call.1} parent=11 // pred_fallthru
          _
        // Predicated region
        $region93: #{tpu_custom_call.1} parent=11 // pred_check
          %p686 = pneg %p529
        $region94: #{tpu_custom_call.1} parent=11 // pred_check_branch
          %688 = sbr.rel (%p686) target = $region96
        $region95: #{tpu_custom_call.1} parent=11 // pred_region
          _
        $region96: #{tpu_custom_call.1} parent=11 // pred_fallthru
          _
      $region12: #{tpu_custom_call.1} parent=5 // pred_fallthru
        _
      %p689 = scmp.lt.s32.totalorder %s36, 2
      // Predicated region
      $region97: #{tpu_custom_call.1} parent=5 // pred_check
        %p690 = pneg %p689
      $region98: #{tpu_custom_call.1} parent=5 // pred_check_branch
        %692 = sbr.rel (%p690) target = $region100
      $region99: #{tpu_custom_call.1} parent=5 // pred_region
        // Predicated region
        $region101: #{tpu_custom_call.1} parent=99 // pred_check
          %p693 = pneg %p56
        $region102: #{tpu_custom_call.1} parent=99 // pred_check_branch
          %695 = sbr.rel (%p693) target = $region104
        $region103: #{tpu_custom_call.1} parent=99 // pred_region
          %p696 = scmp.lt.s32.totalorder %s36, 1
          %s697 = scalar_select %p696, %s36, 1
          %s698 = smul.addr %s697, 8
          %s699 = scalar_lea.vmem %s0, %s698
        $region104: #{tpu_custom_call.1} parent=99 // pred_fallthru
          _
        // Predicated region
        $region105: #{tpu_custom_call.1} parent=99 // pred_check
          %p700 = pneg %p82
        $region106: #{tpu_custom_call.1} parent=99 // pred_check_branch
          %702 = sbr.rel (%p700) target = $region108
        $region107: #{tpu_custom_call.1} parent=99 // pred_region
          %p703 = scmp.lt.s32.totalorder %s36, 1
          %s704 = scalar_select %p703, %s36, 1
          %s705 = smul.addr %s704, 2
          %s706 = smul.addr %s705, 8
          %s707 = scalar_lea.vmem %s1, %s706
        $region108: #{tpu_custom_call.1} parent=99 // pred_fallthru
          _
      $region100: #{tpu_custom_call.1} parent=5 // pred_fallthru
        _
      %p708 = scmp.le.s32.totalorder 1, %s36
      %p709 = scmp.lt.s32.totalorder %s36, 3
      %p710 = pnand %p708, %p709
      %p711 = pneg %p710
      // Predicated region
      $region109: #{tpu_custom_call.1} parent=5 // pred_check
        _
      $region110: #{tpu_custom_call.1} parent=5 // pred_check_branch
        %713 = sbr.rel (%p710) target = $region112
      $region111: #{tpu_custom_call.1} parent=5 // pred_region
        %s714 = ssub.s32 %s36, 1
        // Predicated region
        $region113: #{tpu_custom_call.1} parent=111 // pred_check
          %p715 = pneg %p109
        $region114: #{tpu_custom_call.1} parent=111 // pred_check_branch
          %717 = sbr.rel (%p715) target = $region116
        $region115: #{tpu_custom_call.1} parent=111 // pred_region
          %718 = dma.done [#allocation3], 128
        $region116: #{tpu_custom_call.1} parent=111 // pred_fallthru
          _
        // Predicated region
        $region117: #{tpu_custom_call.1} parent=111 // pred_check
          %p719 = pneg %p193
        $region118: #{tpu_custom_call.1} parent=111 // pred_check_branch
          %721 = sbr.rel (%p719) target = $region120
        $region119: #{tpu_custom_call.1} parent=111 // pred_region
          %722 = dma.done [#allocation6], 16
        $region120: #{tpu_custom_call.1} parent=111 // pred_fallthru
          _
        // Predicated region
        $region121: #{tpu_custom_call.1} parent=111 // pred_check
          %p723 = pneg %p214
        $region122: #{tpu_custom_call.1} parent=111 // pred_check_branch
          %725 = sbr.rel (%p723) target = $region124
        $region123: #{tpu_custom_call.1} parent=111 // pred_region
          %726 = dma.done [#allocation6], 16
        $region124: #{tpu_custom_call.1} parent=111 // pred_fallthru
          _
        // Predicated region
        $region125: #{tpu_custom_call.1} parent=111 // pred_check
          %p727 = pneg %p235
        $region126: #{tpu_custom_call.1} parent=111 // pred_check_branch
          %729 = sbr.rel (%p727) target = $region128
        $region127: #{tpu_custom_call.1} parent=111 // pred_region
          %730 = dma.done [#allocation9], 16
        $region128: #{tpu_custom_call.1} parent=111 // pred_fallthru
          _
        // Predicated region
        $region129: #{tpu_custom_call.1} parent=111 // pred_check
          %p731 = pneg %p277
        $region130: #{tpu_custom_call.1} parent=111 // pred_check_branch
          %733 = sbr.rel (%p731) target = $region132
        $region131: #{tpu_custom_call.1} parent=111 // pred_region
          %734 = dma.done [#allocation9], 16
        $region132: #{tpu_custom_call.1} parent=111 // pred_fallthru
          _
        // Predicated region
        $region133: #{tpu_custom_call.1} parent=111 // pred_check
          %p735 = pneg %p319
        $region134: #{tpu_custom_call.1} parent=111 // pred_check_branch
          %737 = sbr.rel (%p735) target = $region136
        $region135: #{tpu_custom_call.1} parent=111 // pred_region
          %738 = dma.done [#allocation12], 16
        $region136: #{tpu_custom_call.1} parent=111 // pred_fallthru
          _
        // Predicated region
        $region137: #{tpu_custom_call.1} parent=111 // pred_check
          %p739 = pneg %p361
        $region138: #{tpu_custom_call.1} parent=111 // pred_check_branch
          %741 = sbr.rel (%p739) target = $region140
        $region139: #{tpu_custom_call.1} parent=111 // pred_region
          %742 = dma.done [#allocation12], 16
        $region140: #{tpu_custom_call.1} parent=111 // pred_fallthru
          _
        %p743 = scmp.lt.s32.totalorder %s41, 1
        %s744 = scalar_select %p743, %s41, 1
        %s745 = smul.addr %s744, 8
        %s746 = scalar_lea.vmem %s0, %s745
        %p747 = pneg %p62
        %p748 = pneg %p59
        %p749 = scmp.lt.s32.totalorder %s41, 1
        %s750 = scalar_select %p749, %s41, 1
        %s751 = smul.addr %s750, 2
        %s752 = smul.addr %s751, 8
        %s753 = scalar_lea.vmem %s1, %s752
        %p754 = pneg %p88
        %p755 = pneg %p85
        %p756 = pneg %p109
        %p757 = pneg %p106
        %p758 = pneg %p130
        %p759 = pneg %p127
        %p760 = pneg %p151
        %p761 = pneg %p148
        %p762 = pneg %p172
        %p763 = pneg %p169
        %p764 = pneg %p193
        %p765 = pneg %p190
        %p766 = pneg %p214
        %p767 = pneg %p211
        %p768 = pneg %p235
        %p769 = pneg %p232
        %p770 = pneg %p256
        %p771 = pneg %p253
        %p772 = pneg %p277
        %p773 = pneg %p274
        %p774 = pneg %p298
        %p775 = pneg %p295
        %p776 = pneg %p319
        %p777 = pneg %p316
        %p778 = pneg %p340
        %p779 = pneg %p337
        %p780 = pneg %p361
        %p781 = pneg %p358
        %p782 = pneg %p382
        %p783 = pneg %p379
        %p784 = pneg %p403
        %p785 = pneg %p400
        %p786 = pneg %p424
        %p787 = pneg %p421
        %p788 = pneg %p445
        %p789 = pneg %p442
        %p790 = pneg %p466
        %p791 = pneg %p463
        %p792 = pneg %p487
        %p793 = pneg %p484
        %p794 = pneg %p508
        %p795 = pneg %p505
        %p796 = pneg %p529
        %p797 = pneg %p526
        %p798 = pneg %p555
        %p799 = pneg %p552
        %s800 = sand.u32 %s542, 1
        %s801 = scalar_lea.sflag [#allocation4], %s800
        %s802 = sand.u32 %s542, 1
        %s803 = smul.addr %s802, 8
        %s804 = scalar_lea.vmem [#allocation14], %s803
        %p805 = scmp.lt.s32.totalorder %s41, 1
        %s806 = scalar_select %p805, %s41, 1
        %s807 = smul.addr %s806, 8
        %s808 = scalar_lea.vmem %s0, %s807
        %p809 = scmp.lt.s32.totalorder %s41, 1
        %s810 = scalar_select %p809, %s41, 1
        %s811 = smul.addr %s810, 2
        %s812 = smul.addr %s811, 8
        %s813 = scalar_lea.vmem %s1, %s812
        %v815 = vld [vmem:[%s808] sm:$0xff]
        %v816 = vld [vmem:[%s813] sm:$0xff]
        %v817 = vld [vmem:[%s813 + $0x8] sm:$0xf]
        %v818 = vpack.c.bf16 %v817, %v816
        %v819 = vld [vmem:[#allocation2] sm:$0xff]
        %v820 = vpack.c.bf16 %v815, %v815
        %v821 = vld [vmem:[%s3] sm:$0xf]
        %v822 = vld [vmem:[%s3 + $0x4] sm:$0xf]
        %v823 = vld [vmem:[%s3 + $0x8] sm:$0xf]
        %v824 = vld [vmem:[%s3 + $0xc] sm:$0xf]
        %v825 = vld [vmem:[%s4] sm:$0x1]
        %v827 = vlaneseq
        %v828 = vshrl.u32 %v827, 7
        %v829 = vsub.s32 0, %v828
        %v830 = vrot.slane %v825, %v829
        %v836 = vunpack.c.l.b16 %v821
        %v837 = vunpack.c.l.b16 %v822
        %v838 = vunpack.c.l.b16 %v823
        %v839 = vunpack.c.l.b16 %v824
        %v840 = vpack.c.b16 %v837, %v836
        %v841 = vpack.c.b16 %v839, %v838
        %vm844 = vcmask 261120
        %v846 = vsel %vm844, %v820, 0
        %848 = vmatprep.subr.bf16.mxu0 0
        %849 = vmatpush1.bf16.msra.mxu0 0
        %850 = vmatprep.subr.bf16.mxu0 0
        %851 = vmatpush1.bf16.msra.mxu0 0
        %852 = vmatprep.subr.bf16.mxu0 0
        %853 = vmatpush1.bf16.msra.mxu0 0
        %854 = vmatprep.subr.bf16.mxu0 0
        %855 = vmatpush1.bf16.msra.mxu0 0
        %856 = vmatprep.subr.bf16.mxu0 0
        %857 = vmatpush1.bf16.msra.mxu0 0
        %858 = vmatprep.subr.bf16.mxu0 0
        %859 = vmatpush1.bf16.msra.mxu0 0
        %860 = vmatprep.subr.bf16.mxu0 0
        %861 = vmatpush1.bf16.msra.mxu0 %v841
        %862 = vmatprep.subr.bf16.mxu0 0
        %863 = vmatpush1.bf16.msra.mxu0 %v840
        %864 = vmatprep.subr.bf16.mxu0 0
        %865 = vmatpush2.bf16.msra.mxu0 0
        %866 = vmatprep.subr.bf16.mxu0 0
        %867 = vmatpush2.bf16.msra.mxu0 0
        %868 = vmatprep.subr.bf16.mxu0 0
        %869 = vmatpush2.bf16.msra.mxu0 0
        %870 = vmatprep.subr.bf16.mxu0 0
        %871 = vmatpush2.bf16.msra.mxu0 0
        %872 = vmatprep.subr.bf16.mxu0 0
        %873 = vmatpush2.bf16.msra.mxu0 0
        %874 = vmatprep.subr.bf16.mxu0 0
        %875 = vmatpush2.bf16.msra.mxu0 0
        %876 = vmatprep.subr.bf16.mxu0 0
        %877 = vmatpush2.bf16.msra.mxu0 0
        %878 = vmatprep.subr.bf16.mxu0 0
        %879 = vmatpush2.bf16.msra.mxu0 0
        %880 = vmatprep.mubr.bf16.mxu0 0
        %881 = vmatmul.mubr.bf16.gmra.mxu0 %v846
        %v882 = vpop.f32.mrf.mxu0
        %v883 = vadd.f32 %v830, %v882
        %v884 = vpop.f32.mrf.mxu0
        %v885 = vpop.f32.mrf.mxu0
        %v886 = vpop.f32.mrf.mxu0
        %887 = vdwg.mxu0
        %v888 = vpack.c.bf16 %v883, %v883
        %890 = vrot.lane.b32.xlu0 %v888, 96
        %v891 = vpop.permute.xlu0 %890
        %vm892 = vcmask 64512
        %v894 = vsel %vm892, %v888, 0
        %v897 = vsel %vm892, %v891, 0
        %899 = vmatprep.subr.bf16.mxu0 0
        %900 = vmatpush1.bf16.xpose.msra.mxu0 0
        %901 = vmatprep.subr.bf16.mxu0 0
        %902 = vmatpush1.bf16.xpose.msra.mxu0 0
        %903 = vmatprep.subr.bf16.mxu0 0
        %904 = vmatpush1.bf16.xpose.msra.mxu0 0
        %905 = vmatprep.subr.bf16.mxu0 0
        %906 = vmatpush1.bf16.xpose.msra.mxu0 0
        %907 = vmatprep.subr.bf16.mxu0 0
        %908 = vmatpush1.bf16.xpose.msra.mxu0 0
        %909 = vmatprep.subr.bf16.mxu0 0
        %910 = vmatpush1.bf16.xpose.msra.mxu0 0
        %911 = vmatprep.subr.bf16.mxu0 0
        %912 = vmatpush1.bf16.xpose.msra.mxu0 0
        %913 = vmatprep.subr.bf16.mxu0 0
        %914 = vmatpush1.bf16.xpose.msra.mxu0 %v897
        %915 = vmatprep.subr.bf16.mxu0 0
        %916 = vmatpush2.bf16.xpose.msra.mxu0 0
        %917 = vmatprep.subr.bf16.mxu0 0
        %918 = vmatpush2.bf16.xpose.msra.mxu0 0
        %919 = vmatprep.subr.bf16.mxu0 0
        %920 = vmatpush2.bf16.xpose.msra.mxu0 0
        %921 = vmatprep.subr.bf16.mxu0 0
        %922 = vmatpush2.bf16.xpose.msra.mxu0 0
        %923 = vmatprep.subr.bf16.mxu0 0
        %924 = vmatpush2.bf16.xpose.msra.mxu0 0
        %925 = vmatprep.subr.bf16.mxu0 0
        %926 = vmatpush2.bf16.xpose.msra.mxu0 0
        %927 = vmatprep.subr.bf16.mxu0 0
        %928 = vmatpush2.bf16.xpose.msra.mxu0 0
        %929 = vmatprep.subr.bf16.mxu0 0
        %930 = vmatpush2.bf16.xpose.msra.mxu0 0
        %931 = vmatprep.mubr.bf16.mxu0 0
        %932 = vmatmul.mubr.bf16.gmra.mxu0 %v894
        %v933 = vpop.f32.mrf.mxu0
        %v934 = vadd.f32 %v819, %v933
        %v935 = vpop.f32.mrf.mxu0
        %v936 = vpop.f32.mrf.mxu0
        %v937 = vpop.f32.mrf.mxu0
        %938 = vdwg.mxu0
        %v939 = vsel %vm892, %v934, -inf
        %940 = vmax.xlane.f32.xlu0 %v939
        %v941 = vpop.xlane.xlu0 %940
        %v942 = vsub.f32 %v934, %v941
        %v943 = vmul.f32 %v942, 1.442695
        %v944 = vpow.pop %v943
        %v945 = vsel %vm892, %v944, 0.0
        %946 = vadd.xlane.f32.xlu0 %v945
        %v947 = vpop.xlane.xlu0 %946
        %v948 = vrcp.pop %v947
        %v949 = vmul.f32 %v944, %v948
        %v950 = vpack.c.bf16 %v949, %v949
        %951 = vrot.lane.b32.xlu0 %v888, 64
        %v952 = vpop.permute.xlu0 %951
        %v954 = vsel %vm892, %v950, 0
        %vm956 = vcmask 1043456
        %v958 = vsel %vm956, %v952, 0
        %960 = vmatprep.subr.bf16.mxu0 0
        %961 = vmatpush1.bf16.msra.mxu0 0
        %962 = vmatprep.subr.bf16.mxu0 0
        %963 = vmatpush1.bf16.msra.mxu0 0
        %964 = vmatprep.subr.bf16.mxu0 0
        %965 = vmatpush1.bf16.msra.mxu0 0
        %966 = vmatprep.subr.bf16.mxu0 0
        %967 = vmatpush1.bf16.msra.mxu0 0
        %968 = vmatprep.subr.bf16.mxu0 0
        %969 = vmatpush1.bf16.msra.mxu0 0
        %970 = vmatprep.subr.bf16.mxu0 0
        %971 = vmatpush1.bf16.msra.mxu0 0
        %972 = vmatprep.subr.bf16.mxu0 0
        %973 = vmatpush1.bf16.msra.mxu0 0
        %974 = vmatprep.subr.bf16.mxu0 0
        %975 = vmatpush1.bf16.msra.mxu0 %v958
        %976 = vmatprep.subr.bf16.mxu0 0
        %977 = vmatpush2.bf16.msra.mxu0 0
        %978 = vmatprep.subr.bf16.mxu0 0
        %979 = vmatpush2.bf16.msra.mxu0 0
        %980 = vmatprep.subr.bf16.mxu0 0
        %981 = vmatpush2.bf16.msra.mxu0 0
        %982 = vmatprep.subr.bf16.mxu0 0
        %983 = vmatpush2.bf16.msra.mxu0 0
        %984 = vmatprep.subr.bf16.mxu0 0
        %985 = vmatpush2.bf16.msra.mxu0 0
        %986 = vmatprep.subr.bf16.mxu0 0
        %987 = vmatpush2.bf16.msra.mxu0 0
        %988 = vmatprep.subr.bf16.mxu0 0
        %989 = vmatpush2.bf16.msra.mxu0 0
        %990 = vmatprep.subr.bf16.mxu0 0
        %991 = vmatpush2.bf16.msra.mxu0 0
        %992 = vmatprep.mubr.bf16.mxu0 0
        %993 = vmatmul.mubr.bf16.gmra.mxu0 %v954
        %v994 = vpop.f32.mrf.mxu0
        %v995 = vadd.f32 0.0, %v994
        %v996 = vpop.f32.mrf.mxu0
        %v997 = vpop.f32.mrf.mxu0
        %v998 = vpop.f32.mrf.mxu0
        %999 = vdwg.mxu0
        %v1000 = vpack.c.bf16 %v995, %v995
        %v1001 = vld [vmem:[%s5] sm:$0xf]
        %1002 = vrot.lane.b32.xlu0 %v888, 120
        %v1003 = vpop.permute.xlu0 %1002
        %1004 = vrot.lane.b32.xlu0 %v888, 88
        %v1005 = vpop.permute.xlu0 %1004
        %v1007 = vsel %vm892, %v1003, 0
        %v1010 = vsel %vm892, %v1005, 0
        %1012 = vmatprep.subr.bf16.mxu0 0
        %1013 = vmatpush1.bf16.xpose.msra.mxu0 0
        %1014 = vmatprep.subr.bf16.mxu0 0
        %1015 = vmatpush1.bf16.xpose.msra.mxu0 0
        %1016 = vmatprep.subr.bf16.mxu0 0
        %1017 = vmatpush1.bf16.xpose.msra.mxu0 0
        %1018 = vmatprep.subr.bf16.mxu0 0
        %1019 = vmatpush1.bf16.xpose.msra.mxu0 0
        %1020 = vmatprep.subr.bf16.mxu0 0
        %1021 = vmatpush1.bf16.xpose.msra.mxu0 0
        %1022 = vmatprep.subr.bf16.mxu0 0
        %1023 = vmatpush1.bf16.xpose.msra.mxu0 0
        %1024 = vmatprep.subr.bf16.mxu0 0
        %1025 = vmatpush1.bf16.xpose.msra.mxu0 0
        %1026 = vmatprep.subr.bf16.mxu0 0
        %1027 = vmatpush1.bf16.xpose.msra.mxu0 %v1010
        %1028 = vmatprep.subr.bf16.mxu0 0
        %1029 = vmatpush2.bf16.xpose.msra.mxu0 0
        %1030 = vmatprep.subr.bf16.mxu0 0
        %1031 = vmatpush2.bf16.xpose.msra.mxu0 0
        %1032 = vmatprep.subr.bf16.mxu0 0
        %1033 = vmatpush2.bf16.xpose.msra.mxu0 0
        %1034 = vmatprep.subr.bf16.mxu0 0
        %1035 = vmatpush2.bf16.xpose.msra.mxu0 0
        %1036 = vmatprep.subr.bf16.mxu0 0
        %1037 = vmatpush2.bf16.xpose.msra.mxu0 0
        %1038 = vmatprep.subr.bf16.mxu0 0
        %1039 = vmatpush2.bf16.xpose.msra.mxu0 0
        %1040 = vmatprep.subr.bf16.mxu0 0
        %1041 = vmatpush2.bf16.xpose.msra.mxu0 0
        %1042 = vmatprep.subr.bf16.mxu0 0
        %1043 = vmatpush2.bf16.xpose.msra.mxu0 0
        %1044 = vmatprep.mubr.bf16.mxu0 0
        %1045 = vmatmul.mubr.bf16.gmra.mxu0 %v1007
        %v1046 = vpop.f32.mrf.mxu0
        %v1047 = vadd.f32 %v819, %v1046
        %v1048 = vpop.f32.mrf.mxu0
        %v1049 = vpop.f32.mrf.mxu0
        %v1050 = vpop.f32.mrf.mxu0
        %1051 = vdwg.mxu0
        %v1052 = vsel %vm892, %v1047, -inf
        %1053 = vmax.xlane.f32.xlu0 %v1052
        %v1054 = vpop.xlane.xlu0 %1053
        %v1055 = vsub.f32 %v1047, %v1054
        %v1056 = vmul.f32 %v1055, 1.442695
        %v1057 = vpow.pop %v1056
        %v1058 = vsel %vm892, %v1057, 0.0
        %1059 = vadd.xlane.f32.xlu0 %v1058
        %v1060 = vpop.xlane.xlu0 %1059
        %v1061 = vrcp.pop %v1060
        %v1062 = vmul.f32 %v1057, %v1061
        %v1063 = vpack.c.bf16 %v1062, %v1062
        %1064 = vrot.lane.b32.xlu0 %v888, 56
        %v1065 = vpop.permute.xlu0 %1064
        %v1067 = vsel %vm892, %v1063, 0
        %v1070 = vsel %vm956, %v1065, 0
        %1072 = vmatprep.subr.bf16.mxu0 0
        %1073 = vmatpush1.bf16.msra.mxu0 0
        %1074 = vmatprep.subr.bf16.mxu0 0
        %1075 = vmatpush1.bf16.msra.mxu0 0
        %1076 = vmatprep.subr.bf16.mxu0 0
        %1077 = vmatpush1.bf16.msra.mxu0 0
        %1078 = vmatprep.subr.bf16.mxu0 0
        %1079 = vmatpush1.bf16.msra.mxu0 0
        %1080 = vmatprep.subr.bf16.mxu0 0
        %1081 = vmatpush1.bf16.msra.mxu0 0
        %1082 = vmatprep.subr.bf16.mxu0 0
        %1083 = vmatpush1.bf16.msra.mxu0 0
        %1084 = vmatprep.subr.bf16.mxu0 0
        %1085 = vmatpush1.bf16.msra.mxu0 0
        %1086 = vmatprep.subr.bf16.mxu0 0
        %1087 = vmatpush1.bf16.msra.mxu0 %v1070
        %1088 = vmatprep.subr.bf16.mxu0 0
        %1089 = vmatpush2.bf16.msra.mxu0 0
        %1090 = vmatprep.subr.bf16.mxu0 0
        %1091 = vmatpush2.bf16.msra.mxu0 0
        %1092 = vmatprep.subr.bf16.mxu0 0
        %1093 = vmatpush2.bf16.msra.mxu0 0
        %1094 = vmatprep.subr.bf16.mxu0 0
        %1095 = vmatpush2.bf16.msra.mxu0 0
        %1096 = vmatprep.subr.bf16.mxu0 0
        %1097 = vmatpush2.bf16.msra.mxu0 0
        %1098 = vmatprep.subr.bf16.mxu0 0
        %1099 = vmatpush2.bf16.msra.mxu0 0
        %1100 = vmatprep.subr.bf16.mxu0 0
        %1101 = vmatpush2.bf16.msra.mxu0 0
        %1102 = vmatprep.subr.bf16.mxu0 0
        %1103 = vmatpush2.bf16.msra.mxu0 0
        %1104 = vmatprep.mubr.bf16.mxu0 0
        %1105 = vmatmul.mubr.bf16.gmra.mxu0 %v1067
        %v1106 = vpop.f32.mrf.mxu0
        %v1107 = vadd.f32 0.0, %v1106
        %v1108 = vpop.f32.mrf.mxu0
        %v1109 = vpop.f32.mrf.mxu0
        %v1110 = vpop.f32.mrf.mxu0
        %1111 = vdwg.mxu0
        %v1112 = vpack.c.bf16 %v1107, %v1107
        %v1113 = vld [vmem:[%s5 + $0x4] sm:$0xf]
        %v1115 = vsel %vm892, %v1112, 0
        %v1118 = vsel %vm956, %v1113, 0
        %1120 = vmatprep.subr.bf16.mxu0 0
        %1121 = vmatpush1.bf16.msra.mxu0 0
        %1122 = vmatprep.subr.bf16.mxu0 0
        %1123 = vmatpush1.bf16.msra.mxu0 0
        %1124 = vmatprep.subr.bf16.mxu0 0
        %1125 = vmatpush1.bf16.msra.mxu0 0
        %1126 = vmatprep.subr.bf16.mxu0 0
        %1127 = vmatpush1.bf16.msra.mxu0 0
        %1128 = vmatprep.subr.bf16.mxu0 0
        %1129 = vmatpush1.bf16.msra.mxu0 0
        %1130 = vmatprep.subr.bf16.mxu0 0
        %1131 = vmatpush1.bf16.msra.mxu0 0
        %1132 = vmatprep.subr.bf16.mxu0 0
        %1133 = vmatpush1.bf16.msra.mxu0 0
        %1134 = vmatprep.subr.bf16.mxu0 0
        %1135 = vmatpush1.bf16.msra.mxu0 %v1118
        %1136 = vmatprep.subr.bf16.mxu0 0
        %1137 = vmatpush2.bf16.msra.mxu0 0
        %1138 = vmatprep.subr.bf16.mxu0 0
        %1139 = vmatpush2.bf16.msra.mxu0 0
        %1140 = vmatprep.subr.bf16.mxu0 0
        %1141 = vmatpush2.bf16.msra.mxu0 0
        %1142 = vmatprep.subr.bf16.mxu0 0
        %1143 = vmatpush2.bf16.msra.mxu0 0
        %1144 = vmatprep.subr.bf16.mxu0 0
        %1145 = vmatpush2.bf16.msra.mxu0 0
        %1146 = vmatprep.subr.bf16.mxu0 0
        %1147 = vmatpush2.bf16.msra.mxu0 0
        %1148 = vmatprep.subr.bf16.mxu0 0
        %1149 = vmatpush2.bf16.msra.mxu0 0
        %1150 = vmatprep.subr.bf16.mxu0 0
        %1151 = vmatpush2.bf16.msra.mxu0 0
        %1152 = vmatprep.mubr.bf16.mxu0 0
        %1153 = vmatmul.mubr.bf16.gmra.mxu0 %v1115
        %v1154 = vpop.f32.mrf.mxu0
        %v1155 = vadd.f32 0.0, %v1154
        %v1156 = vpop.f32.mrf.mxu0
        %v1157 = vpop.f32.mrf.mxu0
        %v1158 = vpop.f32.mrf.mxu0
        %1159 = vdwg.mxu0
        %v1161 = vsel %vm892, %v1000, 0
        %v1164 = vsel %vm956, %v1001, 0
        %1166 = vmatprep.subr.bf16.mxu0 0
        %1167 = vmatpush1.bf16.msra.mxu0 0
        %1168 = vmatprep.subr.bf16.mxu0 0
        %1169 = vmatpush1.bf16.msra.mxu0 0
        %1170 = vmatprep.subr.bf16.mxu0 0
        %1171 = vmatpush1.bf16.msra.mxu0 0
        %1172 = vmatprep.subr.bf16.mxu0 0
        %1173 = vmatpush1.bf16.msra.mxu0 0
        %1174 = vmatprep.subr.bf16.mxu0 0
        %1175 = vmatpush1.bf16.msra.mxu0 0
        %1176 = vmatprep.subr.bf16.mxu0 0
        %1177 = vmatpush1.bf16.msra.mxu0 0
        %1178 = vmatprep.subr.bf16.mxu0 0
        %1179 = vmatpush1.bf16.msra.mxu0 0
        %1180 = vmatprep.subr.bf16.mxu0 0
        %1181 = vmatpush1.bf16.msra.mxu0 %v1164
        %1182 = vmatprep.subr.bf16.mxu0 0
        %1183 = vmatpush2.bf16.msra.mxu0 0
        %1184 = vmatprep.subr.bf16.mxu0 0
        %1185 = vmatpush2.bf16.msra.mxu0 0
        %1186 = vmatprep.subr.bf16.mxu0 0
        %1187 = vmatpush2.bf16.msra.mxu0 0
        %1188 = vmatprep.subr.bf16.mxu0 0
        %1189 = vmatpush2.bf16.msra.mxu0 0
        %1190 = vmatprep.subr.bf16.mxu0 0
        %1191 = vmatpush2.bf16.msra.mxu0 0
        %1192 = vmatprep.subr.bf16.mxu0 0
        %1193 = vmatpush2.bf16.msra.mxu0 0
        %1194 = vmatprep.subr.bf16.mxu0 0
        %1195 = vmatpush2.bf16.msra.mxu0 0
        %1196 = vmatprep.subr.bf16.mxu0 0
        %1197 = vmatpush2.bf16.msra.mxu0 0
        %1198 = vmatprep.mubr.bf16.mxu0 0
        %1199 = vmatmul.mubr.bf16.gmra.mxu0 %v1161
        %v1200 = vpop.f32.mrf.mxu0
        %v1201 = vadd.f32 %v1155, %v1200
        %v1202 = vpop.f32.mrf.mxu0
        %v1203 = vpop.f32.mrf.mxu0
        %v1204 = vpop.f32.mrf.mxu0
        %1205 = vdwg.mxu0
        %1206 = vrot.lane.b32.xlu0 %v888, 112
        %v1207 = vpop.permute.xlu0 %1206
        %1208 = vrot.lane.b32.xlu0 %v888, 80
        %v1209 = vpop.permute.xlu0 %1208
        %v1211 = vsel %vm892, %v1207, 0
        %v1214 = vsel %vm892, %v1209, 0
        %1216 = vmatprep.subr.bf16.mxu0 0
        %1217 = vmatpush1.bf16.xpose.msra.mxu0 0
        %1218 = vmatprep.subr.bf16.mxu0 0
        %1219 = vmatpush1.bf16.xpose.msra.mxu0 0
        %1220 = vmatprep.subr.bf16.mxu0 0
        %1221 = vmatpush1.bf16.xpose.msra.mxu0 0
        %1222 = vmatprep.subr.bf16.mxu0 0
        %1223 = vmatpush1.bf16.xpose.msra.mxu0 0
        %1224 = vmatprep.subr.bf16.mxu0 0
        %1225 = vmatpush1.bf16.xpose.msra.mxu0 0
        %1226 = vmatprep.subr.bf16.mxu0 0
        %1227 = vmatpush1.bf16.xpose.msra.mxu0 0
        %1228 = vmatprep.subr.bf16.mxu0 0
        %1229 = vmatpush1.bf16.xpose.msra.mxu0 0
        %1230 = vmatprep.subr.bf16.mxu0 0
        %1231 = vmatpush1.bf16.xpose.msra.mxu0 %v1214
        %1232 = vmatprep.subr.bf16.mxu0 0
        %1233 = vmatpush2.bf16.xpose.msra.mxu0 0
        %1234 = vmatprep.subr.bf16.mxu0 0
        %1235 = vmatpush2.bf16.xpose.msra.mxu0 0
        %1236 = vmatprep.subr.bf16.mxu0 0
        %1237 = vmatpush2.bf16.xpose.msra.mxu0 0
        %1238 = vmatprep.subr.bf16.mxu0 0
        %1239 = vmatpush2.bf16.xpose.msra.mxu0 0
        %1240 = vmatprep.subr.bf16.mxu0 0
        %1241 = vmatpush2.bf16.xpose.msra.mxu0 0
        %1242 = vmatprep.subr.bf16.mxu0 0
        %1243 = vmatpush2.bf16.xpose.msra.mxu0 0
        %1244 = vmatprep.subr.bf16.mxu0 0
        %1245 = vmatpush2.bf16.xpose.msra.mxu0 0
        %1246 = vmatprep.subr.bf16.mxu0 0
        %1247 = vmatpush2.bf16.xpose.msra.mxu0 0
        %1248 = vmatprep.mubr.bf16.mxu0 0
        %1249 = vmatmul.mubr.bf16.gmra.mxu0 %v1211
        %v1250 = vpop.f32.mrf.mxu0
        %v1251 = vadd.f32 %v819, %v1250
        %v1252 = vpop.f32.mrf.mxu0
        %v1253 = vpop.f32.mrf.mxu0
        %v1254 = vpop.f32.mrf.mxu0
        %1255 = vdwg.mxu0
        %v1256 = vsel %vm892, %v1251, -inf
        %1257 = vmax.xlane.f32.xlu0 %v1256
        %v1258 = vpop.xlane.xlu0 %1257
        %v1259 = vsub.f32 %v1251, %v1258
        %v1260 = vmul.f32 %v1259, 1.442695
        %v1261 = vpow.pop %v1260
        %v1262 = vsel %vm892, %v1261, 0.0
        %1263 = vadd.xlane.f32.xlu0 %v1262
        %v1264 = vpop.xlane.xlu0 %1263
        %v1265 = vrcp.pop %v1264
        %v1266 = vmul.f32 %v1261, %v1265
        %v1267 = vpack.c.bf16 %v1266, %v1266
        %1268 = vrot.lane.b32.xlu0 %v888, 48
        %v1269 = vpop.permute.xlu0 %1268
        %v1271 = vsel %vm892, %v1267, 0
        %v1274 = vsel %vm956, %v1269, 0
        %1276 = vmatprep.subr.bf16.mxu0 0
        %1277 = vmatpush1.bf16.msra.mxu0 0
        %1278 = vmatprep.subr.bf16.mxu0 0
        %1279 = vmatpush1.bf16.msra.mxu0 0
        %1280 = vmatprep.subr.bf16.mxu0 0
        %1281 = vmatpush1.bf16.msra.mxu0 0
        %1282 = vmatprep.subr.bf16.mxu0 0
        %1283 = vmatpush1.bf16.msra.mxu0 0
        %1284 = vmatprep.subr.bf16.mxu0 0
        %1285 = vmatpush1.bf16.msra.mxu0 0
        %1286 = vmatprep.subr.bf16.mxu0 0
        %1287 = vmatpush1.bf16.msra.mxu0 0
        %1288 = vmatprep.subr.bf16.mxu0 0
        %1289 = vmatpush1.bf16.msra.mxu0 0
        %1290 = vmatprep.subr.bf16.mxu0 0
        %1291 = vmatpush1.bf16.msra.mxu0 %v1274
        %1292 = vmatprep.subr.bf16.mxu0 0
        %1293 = vmatpush2.bf16.msra.mxu0 0
        %1294 = vmatprep.subr.bf16.mxu0 0
        %1295 = vmatpush2.bf16.msra.mxu0 0
        %1296 = vmatprep.subr.bf16.mxu0 0
        %1297 = vmatpush2.bf16.msra.mxu0 0
        %1298 = vmatprep.subr.bf16.mxu0 0
        %1299 = vmatpush2.bf16.msra.mxu0 0
        %1300 = vmatprep.subr.bf16.mxu0 0
        %1301 = vmatpush2.bf16.msra.mxu0 0
        %1302 = vmatprep.subr.bf16.mxu0 0
        %1303 = vmatpush2.bf16.msra.mxu0 0
        %1304 = vmatprep.subr.bf16.mxu0 0
        %1305 = vmatpush2.bf16.msra.mxu0 0
        %1306 = vmatprep.subr.bf16.mxu0 0
        %1307 = vmatpush2.bf16.msra.mxu0 0
        %1308 = vmatprep.mubr.bf16.mxu0 0
        %1309 = vmatmul.mubr.bf16.gmra.mxu0 %v1271
        %v1310 = vpop.f32.mrf.mxu0
        %v1311 = vadd.f32 0.0, %v1310
        %v1312 = vpop.f32.mrf.mxu0
        %v1313 = vpop.f32.mrf.mxu0
        %v1314 = vpop.f32.mrf.mxu0
        %1315 = vdwg.mxu0
        %v1316 = vpack.c.bf16 %v1311, %v1311
        %v1317 = vld [vmem:[%s5 + $0x8] sm:$0xf]
        %v1319 = vsel %vm892, %v1316, 0
        %v1322 = vsel %vm956, %v1317, 0
        %1324 = vmatprep.subr.bf16.mxu0 0
        %1325 = vmatpush1.bf16.msra.mxu0 0
        %1326 = vmatprep.subr.bf16.mxu0 0
        %1327 = vmatpush1.bf16.msra.mxu0 0
        %1328 = vmatprep.subr.bf16.mxu0 0
        %1329 = vmatpush1.bf16.msra.mxu0 0
        %1330 = vmatprep.subr.bf16.mxu0 0
        %1331 = vmatpush1.bf16.msra.mxu0 0
        %1332 = vmatprep.subr.bf16.mxu0 0
        %1333 = vmatpush1.bf16.msra.mxu0 0
        %1334 = vmatprep.subr.bf16.mxu0 0
        %1335 = vmatpush1.bf16.msra.mxu0 0
        %1336 = vmatprep.subr.bf16.mxu0 0
        %1337 = vmatpush1.bf16.msra.mxu0 0
        %1338 = vmatprep.subr.bf16.mxu0 0
        %1339 = vmatpush1.bf16.msra.mxu0 %v1322
        %1340 = vmatprep.subr.bf16.mxu0 0
        %1341 = vmatpush2.bf16.msra.mxu0 0
        %1342 = vmatprep.subr.bf16.mxu0 0
        %1343 = vmatpush2.bf16.msra.mxu0 0
        %1344 = vmatprep.subr.bf16.mxu0 0
        %1345 = vmatpush2.bf16.msra.mxu0 0
        %1346 = vmatprep.subr.bf16.mxu0 0
        %1347 = vmatpush2.bf16.msra.mxu0 0
        %1348 = vmatprep.subr.bf16.mxu0 0
        %1349 = vmatpush2.bf16.msra.mxu0 0
        %1350 = vmatprep.subr.bf16.mxu0 0
        %1351 = vmatpush2.bf16.msra.mxu0 0
        %1352 = vmatprep.subr.bf16.mxu0 0
        %1353 = vmatpush2.bf16.msra.mxu0 0
        %1354 = vmatprep.subr.bf16.mxu0 0
        %1355 = vmatpush2.bf16.msra.mxu0 0
        %1356 = vmatprep.mubr.bf16.mxu0 0
        %1357 = vmatmul.mubr.bf16.gmra.mxu0 %v1319
        %v1358 = vpop.f32.mrf.mxu0
        %v1359 = vadd.f32 0.0, %v1358
        %v1360 = vpop.f32.mrf.mxu0
        %v1361 = vpop.f32.mrf.mxu0
        %v1362 = vpop.f32.mrf.mxu0
        %1363 = vdwg.mxu0
        %v1364 = vadd.f32 %v1201, %v1359
        %1365 = vrot.lane.b32.xlu0 %v888, 104
        %v1366 = vpop.permute.xlu0 %1365
        %1367 = vrot.lane.b32.xlu0 %v888, 72
        %v1368 = vpop.permute.xlu0 %1367
        %v1370 = vsel %vm892, %v1366, 0
        %v1373 = vsel %vm892, %v1368, 0
        %1375 = vmatprep.subr.bf16.mxu0 0
        %1376 = vmatpush1.bf16.xpose.msra.mxu0 0
        %1377 = vmatprep.subr.bf16.mxu0 0
        %1378 = vmatpush1.bf16.xpose.msra.mxu0 0
        %1379 = vmatprep.subr.bf16.mxu0 0
        %1380 = vmatpush1.bf16.xpose.msra.mxu0 0
        %1381 = vmatprep.subr.bf16.mxu0 0
        %1382 = vmatpush1.bf16.xpose.msra.mxu0 0
        %1383 = vmatprep.subr.bf16.mxu0 0
        %1384 = vmatpush1.bf16.xpose.msra.mxu0 0
        %1385 = vmatprep.subr.bf16.mxu0 0
        %1386 = vmatpush1.bf16.xpose.msra.mxu0 0
        %1387 = vmatprep.subr.bf16.mxu0 0
        %1388 = vmatpush1.bf16.xpose.msra.mxu0 0
        %1389 = vmatprep.subr.bf16.mxu0 0
        %1390 = vmatpush1.bf16.xpose.msra.mxu0 %v1373
        %1391 = vmatprep.subr.bf16.mxu0 0
        %1392 = vmatpush2.bf16.xpose.msra.mxu0 0
        %1393 = vmatprep.subr.bf16.mxu0 0
        %1394 = vmatpush2.bf16.xpose.msra.mxu0 0
        %1395 = vmatprep.subr.bf16.mxu0 0
        %1396 = vmatpush2.bf16.xpose.msra.mxu0 0
        %1397 = vmatprep.subr.bf16.mxu0 0
        %1398 = vmatpush2.bf16.xpose.msra.mxu0 0
        %1399 = vmatprep.subr.bf16.mxu0 0
        %1400 = vmatpush2.bf16.xpose.msra.mxu0 0
        %1401 = vmatprep.subr.bf16.mxu0 0
        %1402 = vmatpush2.bf16.xpose.msra.mxu0 0
        %1403 = vmatprep.subr.bf16.mxu0 0
        %1404 = vmatpush2.bf16.xpose.msra.mxu0 0
        %1405 = vmatprep.subr.bf16.mxu0 0
        %1406 = vmatpush2.bf16.xpose.msra.mxu0 0
        %1407 = vmatprep.mubr.bf16.mxu0 0
        %1408 = vmatmul.mubr.bf16.gmra.mxu0 %v1370
        %v1409 = vpop.f32.mrf.mxu0
        %v1410 = vadd.f32 %v819, %v1409
        %v1411 = vpop.f32.mrf.mxu0
        %v1412 = vpop.f32.mrf.mxu0
        %v1413 = vpop.f32.mrf.mxu0
        %1414 = vdwg.mxu0
        %v1415 = vsel %vm892, %v1410, -inf
        %1416 = vmax.xlane.f32.xlu0 %v1415
        %v1417 = vpop.xlane.xlu0 %1416
        %v1418 = vsub.f32 %v1410, %v1417
        %v1419 = vmul.f32 %v1418, 1.442695
        %v1420 = vpow.pop %v1419
        %v1421 = vsel %vm892, %v1420, 0.0
        %1422 = vadd.xlane.f32.xlu0 %v1421
        %v1423 = vpop.xlane.xlu0 %1422
        %v1424 = vrcp.pop %v1423
        %v1425 = vmul.f32 %v1420, %v1424
        %v1426 = vpack.c.bf16 %v1425, %v1425
        %1427 = vrot.lane.b32.xlu0 %v888, 40
        %v1428 = vpop.permute.xlu0 %1427
        %v1430 = vsel %vm892, %v1426, 0
        %v1433 = vsel %vm956, %v1428, 0
        %1435 = vmatprep.subr.bf16.mxu0 0
        %1436 = vmatpush1.bf16.msra.mxu0 0
        %1437 = vmatprep.subr.bf16.mxu0 0
        %1438 = vmatpush1.bf16.msra.mxu0 0
        %1439 = vmatprep.subr.bf16.mxu0 0
        %1440 = vmatpush1.bf16.msra.mxu0 0
        %1441 = vmatprep.subr.bf16.mxu0 0
        %1442 = vmatpush1.bf16.msra.mxu0 0
        %1443 = vmatprep.subr.bf16.mxu0 0
        %1444 = vmatpush1.bf16.msra.mxu0 0
        %1445 = vmatprep.subr.bf16.mxu0 0
        %1446 = vmatpush1.bf16.msra.mxu0 0
        %1447 = vmatprep.subr.bf16.mxu0 0
        %1448 = vmatpush1.bf16.msra.mxu0 0
        %1449 = vmatprep.subr.bf16.mxu0 0
        %1450 = vmatpush1.bf16.msra.mxu0 %v1433
        %1451 = vmatprep.subr.bf16.mxu0 0
        %1452 = vmatpush2.bf16.msra.mxu0 0
        %1453 = vmatprep.subr.bf16.mxu0 0
        %1454 = vmatpush2.bf16.msra.mxu0 0
        %1455 = vmatprep.subr.bf16.mxu0 0
        %1456 = vmatpush2.bf16.msra.mxu0 0
        %1457 = vmatprep.subr.bf16.mxu0 0
        %1458 = vmatpush2.bf16.msra.mxu0 0
        %1459 = vmatprep.subr.bf16.mxu0 0
        %1460 = vmatpush2.bf16.msra.mxu0 0
        %1461 = vmatprep.subr.bf16.mxu0 0
        %1462 = vmatpush2.bf16.msra.mxu0 0
        %1463 = vmatprep.subr.bf16.mxu0 0
        %1464 = vmatpush2.bf16.msra.mxu0 0
        %1465 = vmatprep.subr.bf16.mxu0 0
        %1466 = vmatpush2.bf16.msra.mxu0 0
        %1467 = vmatprep.mubr.bf16.mxu0 0
        %1468 = vmatmul.mubr.bf16.gmra.mxu0 %v1430
        %v1469 = vpop.f32.mrf.mxu0
        %v1470 = vadd.f32 0.0, %v1469
        %v1471 = vpop.f32.mrf.mxu0
        %v1472 = vpop.f32.mrf.mxu0
        %v1473 = vpop.f32.mrf.mxu0
        %1474 = vdwg.mxu0
        %v1475 = vpack.c.bf16 %v1470, %v1470
        %v1476 = vld [vmem:[%s5 + $0xc] sm:$0xf]
        %v1478 = vsel %vm892, %v1475, 0
        %v1481 = vsel %vm956, %v1476, 0
        %1483 = vmatprep.subr.bf16.mxu0 0
        %1484 = vmatpush1.bf16.msra.mxu0 0
        %1485 = vmatprep.subr.bf16.mxu0 0
        %1486 = vmatpush1.bf16.msra.mxu0 0
        %1487 = vmatprep.subr.bf16.mxu0 0
        %1488 = vmatpush1.bf16.msra.mxu0 0
        %1489 = vmatprep.subr.bf16.mxu0 0
        %1490 = vmatpush1.bf16.msra.mxu0 0
        %1491 = vmatprep.subr.bf16.mxu0 0
        %1492 = vmatpush1.bf16.msra.mxu0 0
        %1493 = vmatprep.subr.bf16.mxu0 0
        %1494 = vmatpush1.bf16.msra.mxu0 0
        %1495 = vmatprep.subr.bf16.mxu0 0
        %1496 = vmatpush1.bf16.msra.mxu0 0
        %1497 = vmatprep.subr.bf16.mxu0 0
        %1498 = vmatpush1.bf16.msra.mxu0 %v1481
        %1499 = vmatprep.subr.bf16.mxu0 0
        %1500 = vmatpush2.bf16.msra.mxu0 0
        %1501 = vmatprep.subr.bf16.mxu0 0
        %1502 = vmatpush2.bf16.msra.mxu0 0
        %1503 = vmatprep.subr.bf16.mxu0 0
        %1504 = vmatpush2.bf16.msra.mxu0 0
        %1505 = vmatprep.subr.bf16.mxu0 0
        %1506 = vmatpush2.bf16.msra.mxu0 0
        %1507 = vmatprep.subr.bf16.mxu0 0
        %1508 = vmatpush2.bf16.msra.mxu0 0
        %1509 = vmatprep.subr.bf16.mxu0 0
        %1510 = vmatpush2.bf16.msra.mxu0 0
        %1511 = vmatprep.subr.bf16.mxu0 0
        %1512 = vmatpush2.bf16.msra.mxu0 0
        %1513 = vmatprep.subr.bf16.mxu0 0
        %1514 = vmatpush2.bf16.msra.mxu0 0
        %1515 = vmatprep.mubr.bf16.mxu0 0
        %1516 = vmatmul.mubr.bf16.gmra.mxu0 %v1478
        %v1517 = vpop.f32.mrf.mxu0
        %v1518 = vadd.f32 0.0, %v1517
        %v1519 = vpop.f32.mrf.mxu0
        %v1520 = vpop.f32.mrf.mxu0
        %v1521 = vpop.f32.mrf.mxu0
        %1522 = vdwg.mxu0
        %v1523 = vadd.f32 %v1364, %v1518
        %v1524 = vld [vmem:[#allocation5] sm:$0x1]
        %v1526 = vlaneseq
        %v1527 = vshrl.u32 %v1526, 7
        %v1528 = vsub.s32 0, %v1527
        %v1529 = vrot.slane %v1524, %v1528
        %v1531 = vadd.f32 %v1523, %v1529
        %v1532 = vld [vmem:[#allocation7] sm:$0x1]
        %v1533 = vld [vmem:[#allocation8] sm:$0x1]
        %v1534 = vadd.f32 %v815, %v1531
        %v1535 = vsel %vm844, %v1534, 0.0
        %1536 = vadd.xlane.f32.xlu0 %v1535
        %v1537 = vpop.xlane.xlu0 %1536
        %v1538 = vrcp.pop 32.0
        %v1539 = vmul.f32 %v1537, %v1538
        %v1540 = vsub.f32 %v1534, %v1539
        %v1541 = vmul.f32 %v1540, %v1540
        %v1542 = vsel %vm844, %v1541, 0.0
        %1543 = vadd.xlane.f32.xlu0 %v1542
        %v1544 = vpop.xlane.xlu0 %1543
        %v1545 = vmul.f32 %v1544, %v1538
        %v1546 = vadd.f32 %v1545, 1e-05
        %v1547 = vrsqrt.pop %v1546
        %v1548 = vmul.f32 %v1540, %v1547
        %v1550 = vlaneseq
        %v1551 = vshrl.u32 %v1550, 7
        %v1552 = vsub.s32 0, %v1551
        %v1553 = vrot.slane %v1532, %v1552
        %v1555 = vmul.f32 %v1548, %v1553
        %v1557 = vlaneseq
        %v1558 = vshrl.u32 %v1557, 7
        %v1559 = vsub.s32 0, %v1558
        %v1560 = vrot.slane %v1533, %v1559
        %v1562 = vadd.f32 %v1555, %v1560
        %v1563 = vpack.c.bf16 %v1562, %v1562
        %v1564 = vld [vmem:[%s9] sm:$0xf]
        %v1565 = vld [vmem:[%s9 + $0x4] sm:$0xf]
        %v1566 = vld [vmem:[%s9 + $0x8] sm:$0xf]
        %v1567 = vld [vmem:[%s9 + $0xc] sm:$0xf]
        %v1568 = vld [vmem:[#allocation10] sm:$0x1]
        %v1570 = vlaneseq
        %v1571 = vshrl.u32 %v1570, 7
        %v1572 = vsub.s32 0, %v1571
        %v1573 = vrot.slane %v1568, %v1572
        %v1579 = vunpack.c.l.b16 %v1564
        %v1580 = vunpack.c.l.b16 %v1565
        %v1581 = vunpack.c.l.b16 %v1566
        %v1582 = vunpack.c.l.b16 %v1567
        %v1583 = vpack.c.b16 %v1580, %v1579
        %v1584 = vpack.c.b16 %v1582, %v1581
        %v1588 = vsel %vm844, %v1563, 0
        %1590 = vmatprep.subr.bf16.mxu0 0
        %1591 = vmatpush1.bf16.msra.mxu0 0
        %1592 = vmatprep.subr.bf16.mxu0 0
        %1593 = vmatpush1.bf16.msra.mxu0 0
        %1594 = vmatprep.subr.bf16.mxu0 0
        %1595 = vmatpush1.bf16.msra.mxu0 0
        %1596 = vmatprep.subr.bf16.mxu0 0
        %1597 = vmatpush1.bf16.msra.mxu0 0
        %1598 = vmatprep.subr.bf16.mxu0 0
        %1599 = vmatpush1.bf16.msra.mxu0 0
        %1600 = vmatprep.subr.bf16.mxu0 0
        %1601 = vmatpush1.bf16.msra.mxu0 0
        %1602 = vmatprep.subr.bf16.mxu0 0
        %1603 = vmatpush1.bf16.msra.mxu0 %v1584
        %1604 = vmatprep.subr.bf16.mxu0 0
        %1605 = vmatpush1.bf16.msra.mxu0 %v1583
        %1606 = vmatprep.subr.bf16.mxu0 0
        %1607 = vmatpush2.bf16.msra.mxu0 0
        %1608 = vmatprep.subr.bf16.mxu0 0
        %1609 = vmatpush2.bf16.msra.mxu0 0
        %1610 = vmatprep.subr.bf16.mxu0 0
        %1611 = vmatpush2.bf16.msra.mxu0 0
        %1612 = vmatprep.subr.bf16.mxu0 0
        %1613 = vmatpush2.bf16.msra.mxu0 0
        %1614 = vmatprep.subr.bf16.mxu0 0
        %1615 = vmatpush2.bf16.msra.mxu0 0
        %1616 = vmatprep.subr.bf16.mxu0 0
        %1617 = vmatpush2.bf16.msra.mxu0 0
        %1618 = vmatprep.subr.bf16.mxu0 0
        %1619 = vmatpush2.bf16.msra.mxu0 0
        %1620 = vmatprep.subr.bf16.mxu0 0
        %1621 = vmatpush2.bf16.msra.mxu0 0
        %1622 = vmatprep.mubr.bf16.mxu0 0
        %1623 = vmatmul.mubr.bf16.gmra.mxu0 %v1588
        %v1624 = vpop.f32.mrf.mxu0
        %v1625 = vadd.f32 %v1573, %v1624
        %v1626 = vpop.f32.mrf.mxu0
        %v1627 = vpop.f32.mrf.mxu0
        %v1628 = vpop.f32.mrf.mxu0
        %1629 = vdwg.mxu0
        %v1630 = vld [vmem:[%s11] sm:$0xf]
        %v1631 = vld [vmem:[%s11 + $0x4] sm:$0xf]
        %v1632 = vld [vmem:[%s11 + $0x8] sm:$0xf]
        %v1633 = vld [vmem:[%s11 + $0xc] sm:$0xf]
        %v1634 = vld [vmem:[#allocation11] sm:$0x1]
        %v1636 = vlaneseq
        %v1637 = vshrl.u32 %v1636, 7
        %v1638 = vsub.s32 0, %v1637
        %v1639 = vrot.slane %v1634, %v1638
        %v1645 = vunpack.c.l.b16 %v1630
        %v1646 = vunpack.c.l.b16 %v1631
        %v1647 = vunpack.c.l.b16 %v1632
        %v1648 = vunpack.c.l.b16 %v1633
        %v1649 = vpack.c.b16 %v1646, %v1645
        %v1650 = vpack.c.b16 %v1648, %v1647
        %v1654 = vsel %vm844, %v818, 0
        %1656 = vmatprep.subr.bf16.mxu0 0
        %1657 = vmatpush1.bf16.msra.mxu0 0
        %1658 = vmatprep.subr.bf16.mxu0 0
        %1659 = vmatpush1.bf16.msra.mxu0 0
        %1660 = vmatprep.subr.bf16.mxu0 0
        %1661 = vmatpush1.bf16.msra.mxu0 0
        %1662 = vmatprep.subr.bf16.mxu0 0
        %1663 = vmatpush1.bf16.msra.mxu0 0
        %1664 = vmatprep.subr.bf16.mxu0 0
        %1665 = vmatpush1.bf16.msra.mxu0 0
        %1666 = vmatprep.subr.bf16.mxu0 0
        %1667 = vmatpush1.bf16.msra.mxu0 0
        %1668 = vmatprep.subr.bf16.mxu0 0
        %1669 = vmatpush1.bf16.msra.mxu0 %v1650
        %1670 = vmatprep.subr.bf16.mxu0 0
        %1671 = vmatpush1.bf16.msra.mxu0 %v1649
        %1672 = vmatprep.subr.bf16.mxu0 0
        %1673 = vmatpush2.bf16.msra.mxu0 0
        %1674 = vmatprep.subr.bf16.mxu0 0
        %1675 = vmatpush2.bf16.msra.mxu0 0
        %1676 = vmatprep.subr.bf16.mxu0 0
        %1677 = vmatpush2.bf16.msra.mxu0 0
        %1678 = vmatprep.subr.bf16.mxu0 0
        %1679 = vmatpush2.bf16.msra.mxu0 0
        %1680 = vmatprep.subr.bf16.mxu0 0
        %1681 = vmatpush2.bf16.msra.mxu0 0
        %1682 = vmatprep.subr.bf16.mxu0 0
        %1683 = vmatpush2.bf16.msra.mxu0 0
        %1684 = vmatprep.subr.bf16.mxu0 0
        %1685 = vmatpush2.bf16.msra.mxu0 0
        %1686 = vmatprep.subr.bf16.mxu0 0
        %1687 = vmatpush2.bf16.msra.mxu0 0
        %1688 = vmatprep.mubr.bf16.mxu0 0
        %1689 = vmatmul.mubr.bf16.gmra.mxu0 %v1654
        %v1690 = vpop.f32.mrf.mxu0
        %v1691 = vadd.f32 %v1639, %v1690
        %v1692 = vpop.f32.mrf.mxu0
        %v1693 = vpop.f32.mrf.mxu0
        %v1694 = vadd.f32 %v1639, %v1693
        %v1695 = vpop.f32.mrf.mxu0
        %1696 = vdwg.mxu0
        %v1697 = vpack.c.bf16 %v1625, %v1625
        %v1698 = vpack.c.bf16 %v1694, %v1691
        %v1700 = vsel %vm892, %v1697, 0
        %v1703 = vsel %vm892, %v1698, 0
        %1705 = vmatprep.subr.bf16.mxu0 0
        %1706 = vmatpush1.bf16.xpose.msra.mxu0 0
        %1707 = vmatprep.subr.bf16.mxu0 0
        %1708 = vmatpush1.bf16.xpose.msra.mxu0 0
        %1709 = vmatprep.subr.bf16.mxu0 0
        %1710 = vmatpush1.bf16.xpose.msra.mxu0 0
        %1711 = vmatprep.subr.bf16.mxu0 0
        %1712 = vmatpush1.bf16.xpose.msra.mxu0 0
        %1713 = vmatprep.subr.bf16.mxu0 0
        %1714 = vmatpush1.bf16.xpose.msra.mxu0 0
        %1715 = vmatprep.subr.bf16.mxu0 0
        %1716 = vmatpush1.bf16.xpose.msra.mxu0 0
        %1717 = vmatprep.subr.bf16.mxu0 0
        %1718 = vmatpush1.bf16.xpose.msra.mxu0 0
        %1719 = vmatprep.subr.bf16.mxu0 0
        %1720 = vmatpush1.bf16.xpose.msra.mxu0 %v1703
        %1721 = vmatprep.subr.bf16.mxu0 0
        %1722 = vmatpush2.bf16.xpose.msra.mxu0 0
        %1723 = vmatprep.subr.bf16.mxu0 0
        %1724 = vmatpush2.bf16.xpose.msra.mxu0 0
        %1725 = vmatprep.subr.bf16.mxu0 0
        %1726 = vmatpush2.bf16.xpose.msra.mxu0 0
        %1727 = vmatprep.subr.bf16.mxu0 0
        %1728 = vmatpush2.bf16.xpose.msra.mxu0 0
        %1729 = vmatprep.subr.bf16.mxu0 0
        %1730 = vmatpush2.bf16.xpose.msra.mxu0 0
        %1731 = vmatprep.subr.bf16.mxu0 0
        %1732 = vmatpush2.bf16.xpose.msra.mxu0 0
        %1733 = vmatprep.subr.bf16.mxu0 0
        %1734 = vmatpush2.bf16.xpose.msra.mxu0 0
        %1735 = vmatprep.subr.bf16.mxu0 0
        %1736 = vmatpush2.bf16.xpose.msra.mxu0 0
        %1737 = vmatprep.mubr.bf16.mxu0 0
        %1738 = vmatmul.mubr.bf16.gmra.mxu0 %v1700
        %v1739 = vpop.f32.mrf.mxu0
        %v1740 = vadd.f32 0.0, %v1739
        %v1741 = vpop.f32.mrf.mxu0
        %v1742 = vpop.f32.mrf.mxu0
        %v1743 = vpop.f32.mrf.mxu0
        %1744 = vdwg.mxu0
        %vm1745 = vcmask 97280
        %v1746 = vsel %vm1745, %v1740, -inf
        %1747 = vmax.xlane.f32.xlu0 %v1746
        %v1748 = vpop.xlane.xlu0 %1747
        %v1749 = vsub.f32 %v1740, %v1748
        %v1750 = vmul.f32 %v1749, 1.442695
        %v1751 = vpow.pop %v1750
        %v1752 = vsel %vm1745, %v1751, 0.0
        %1753 = vadd.xlane.f32.xlu0 %v1752
        %v1754 = vpop.xlane.xlu0 %1753
        %v1755 = vrcp.pop %v1754
        %v1756 = vmul.f32 %v1751, %v1755
        %v1757 = vpack.c.bf16 %v1756, %v1756
        %1759 = vrot.lane.b32.xlu0 %v1698, 96
        %v1760 = vpop.permute.xlu0 %1759
        %v1762 = vsel %vm1745, %v1757, 0
        %vm1764 = vcmask 1045504
        %v1766 = vsel %vm1764, %v1760, 0
        %1768 = vmatprep.subr.bf16.mxu0 0
        %1769 = vmatpush1.bf16.msra.mxu0 0
        %1770 = vmatprep.subr.bf16.mxu0 0
        %1771 = vmatpush1.bf16.msra.mxu0 0
        %1772 = vmatprep.subr.bf16.mxu0 0
        %1773 = vmatpush1.bf16.msra.mxu0 0
        %1774 = vmatprep.subr.bf16.mxu0 0
        %1775 = vmatpush1.bf16.msra.mxu0 0
        %1776 = vmatprep.subr.bf16.mxu0 0
        %1777 = vmatpush1.bf16.msra.mxu0 0
        %1778 = vmatprep.subr.bf16.mxu0 0
        %1779 = vmatpush1.bf16.msra.mxu0 0
        %1780 = vmatprep.subr.bf16.mxu0 0
        %1781 = vmatpush1.bf16.msra.mxu0 0
        %1782 = vmatprep.subr.bf16.mxu0 0
        %1783 = vmatpush1.bf16.msra.mxu0 %v1766
        %1784 = vmatprep.subr.bf16.mxu0 0
        %1785 = vmatpush2.bf16.msra.mxu0 0
        %1786 = vmatprep.subr.bf16.mxu0 0
        %1787 = vmatpush2.bf16.msra.mxu0 0
        %1788 = vmatprep.subr.bf16.mxu0 0
        %1789 = vmatpush2.bf16.msra.mxu0 0
        %1790 = vmatprep.subr.bf16.mxu0 0
        %1791 = vmatpush2.bf16.msra.mxu0 0
        %1792 = vmatprep.subr.bf16.mxu0 0
        %1793 = vmatpush2.bf16.msra.mxu0 0
        %1794 = vmatprep.subr.bf16.mxu0 0
        %1795 = vmatpush2.bf16.msra.mxu0 0
        %1796 = vmatprep.subr.bf16.mxu0 0
        %1797 = vmatpush2.bf16.msra.mxu0 0
        %1798 = vmatprep.subr.bf16.mxu0 0
        %1799 = vmatpush2.bf16.msra.mxu0 0
        %1800 = vmatprep.mubr.bf16.mxu0 0
        %1801 = vmatmul.mubr.bf16.gmra.mxu0 %v1762
        %v1802 = vpop.f32.mrf.mxu0
        %v1803 = vadd.f32 0.0, %v1802
        %v1804 = vpop.f32.mrf.mxu0
        %v1805 = vpop.f32.mrf.mxu0
        %v1806 = vpop.f32.mrf.mxu0
        %1807 = vdwg.mxu0
        %v1808 = vpack.c.bf16 %v1803, %v1803
        %v1809 = vld [vmem:[%s13] sm:$0xf]
        %1811 = vrot.lane.b32.xlu0 %v1697, 120
        %v1812 = vpop.permute.xlu0 %1811
        %1813 = vrot.lane.b32.xlu0 %v1698, 120
        %v1814 = vpop.permute.xlu0 %1813
        %v1816 = vsel %vm892, %v1812, 0
        %v1819 = vsel %vm892, %v1814, 0
        %1821 = vmatprep.subr.bf16.mxu0 0
        %1822 = vmatpush1.bf16.xpose.msra.mxu0 0
        %1823 = vmatprep.subr.bf16.mxu0 0
        %1824 = vmatpush1.bf16.xpose.msra.mxu0 0
        %1825 = vmatprep.subr.bf16.mxu0 0
        %1826 = vmatpush1.bf16.xpose.msra.mxu0 0
        %1827 = vmatprep.subr.bf16.mxu0 0
        %1828 = vmatpush1.bf16.xpose.msra.mxu0 0
        %1829 = vmatprep.subr.bf16.mxu0 0
        %1830 = vmatpush1.bf16.xpose.msra.mxu0 0
        %1831 = vmatprep.subr.bf16.mxu0 0
        %1832 = vmatpush1.bf16.xpose.msra.mxu0 0
        %1833 = vmatprep.subr.bf16.mxu0 0
        %1834 = vmatpush1.bf16.xpose.msra.mxu0 0
        %1835 = vmatprep.subr.bf16.mxu0 0
        %1836 = vmatpush1.bf16.xpose.msra.mxu0 %v1819
        %1837 = vmatprep.subr.bf16.mxu0 0
        %1838 = vmatpush2.bf16.xpose.msra.mxu0 0
        %1839 = vmatprep.subr.bf16.mxu0 0
        %1840 = vmatpush2.bf16.xpose.msra.mxu0 0
        %1841 = vmatprep.subr.bf16.mxu0 0
        %1842 = vmatpush2.bf16.xpose.msra.mxu0 0
        %1843 = vmatprep.subr.bf16.mxu0 0
        %1844 = vmatpush2.bf16.xpose.msra.mxu0 0
        %1845 = vmatprep.subr.bf16.mxu0 0
        %1846 = vmatpush2.bf16.xpose.msra.mxu0 0
        %1847 = vmatprep.subr.bf16.mxu0 0
        %1848 = vmatpush2.bf16.xpose.msra.mxu0 0
        %1849 = vmatprep.subr.bf16.mxu0 0
        %1850 = vmatpush2.bf16.xpose.msra.mxu0 0
        %1851 = vmatprep.subr.bf16.mxu0 0
        %1852 = vmatpush2.bf16.xpose.msra.mxu0 0
        %1853 = vmatprep.mubr.bf16.mxu0 0
        %1854 = vmatmul.mubr.bf16.gmra.mxu0 %v1816
        %v1855 = vpop.f32.mrf.mxu0
        %v1856 = vadd.f32 0.0, %v1855
        %v1857 = vpop.f32.mrf.mxu0
        %v1858 = vpop.f32.mrf.mxu0
        %v1859 = vpop.f32.mrf.mxu0
        %1860 = vdwg.mxu0
        %v1861 = vsel %vm1745, %v1856, -inf
        %1862 = vmax.xlane.f32.xlu0 %v1861
        %v1863 = vpop.xlane.xlu0 %1862
        %v1864 = vsub.f32 %v1856, %v1863
        %v1865 = vmul.f32 %v1864, 1.442695
        %v1866 = vpow.pop %v1865
        %v1867 = vsel %vm1745, %v1866, 0.0
        %1868 = vadd.xlane.f32.xlu0 %v1867
        %v1869 = vpop.xlane.xlu0 %1868
        %v1870 = vrcp.pop %v1869
        %v1871 = vmul.f32 %v1866, %v1870
        %v1872 = vpack.c.bf16 %v1871, %v1871
        %1873 = vrot.lane.b32.xlu0 %v1698, 88
        %v1874 = vpop.permute.xlu0 %1873
        %v1876 = vsel %vm1745, %v1872, 0
        %v1879 = vsel %vm1764, %v1874, 0
        %1881 = vmatprep.subr.bf16.mxu0 0
        %1882 = vmatpush1.bf16.msra.mxu0 0
        %1883 = vmatprep.subr.bf16.mxu0 0
        %1884 = vmatpush1.bf16.msra.mxu0 0
        %1885 = vmatprep.subr.bf16.mxu0 0
        %1886 = vmatpush1.bf16.msra.mxu0 0
        %1887 = vmatprep.subr.bf16.mxu0 0
        %1888 = vmatpush1.bf16.msra.mxu0 0
        %1889 = vmatprep.subr.bf16.mxu0 0
        %1890 = vmatpush1.bf16.msra.mxu0 0
        %1891 = vmatprep.subr.bf16.mxu0 0
        %1892 = vmatpush1.bf16.msra.mxu0 0
        %1893 = vmatprep.subr.bf16.mxu0 0
        %1894 = vmatpush1.bf16.msra.mxu0 0
        %1895 = vmatprep.subr.bf16.mxu0 0
        %1896 = vmatpush1.bf16.msra.mxu0 %v1879
        %1897 = vmatprep.subr.bf16.mxu0 0
        %1898 = vmatpush2.bf16.msra.mxu0 0
        %1899 = vmatprep.subr.bf16.mxu0 0
        %1900 = vmatpush2.bf16.msra.mxu0 0
        %1901 = vmatprep.subr.bf16.mxu0 0
        %1902 = vmatpush2.bf16.msra.mxu0 0
        %1903 = vmatprep.subr.bf16.mxu0 0
        %1904 = vmatpush2.bf16.msra.mxu0 0
        %1905 = vmatprep.subr.bf16.mxu0 0
        %1906 = vmatpush2.bf16.msra.mxu0 0
        %1907 = vmatprep.subr.bf16.mxu0 0
        %1908 = vmatpush2.bf16.msra.mxu0 0
        %1909 = vmatprep.subr.bf16.mxu0 0
        %1910 = vmatpush2.bf16.msra.mxu0 0
        %1911 = vmatprep.subr.bf16.mxu0 0
        %1912 = vmatpush2.bf16.msra.mxu0 0
        %1913 = vmatprep.mubr.bf16.mxu0 0
        %1914 = vmatmul.mubr.bf16.gmra.mxu0 %v1876
        %v1915 = vpop.f32.mrf.mxu0
        %v1916 = vadd.f32 0.0, %v1915
        %v1917 = vpop.f32.mrf.mxu0
        %v1918 = vpop.f32.mrf.mxu0
        %v1919 = vpop.f32.mrf.mxu0
        %1920 = vdwg.mxu0
        %v1921 = vpack.c.bf16 %v1916, %v1916
        %v1922 = vld [vmem:[%s13 + $0x4] sm:$0xf]
        %v1924 = vsel %vm892, %v1921, 0
        %v1927 = vsel %vm956, %v1922, 0
        %1929 = vmatprep.subr.bf16.mxu0 0
        %1930 = vmatpush1.bf16.msra.mxu0 0
        %1931 = vmatprep.subr.bf16.mxu0 0
        %1932 = vmatpush1.bf16.msra.mxu0 0
        %1933 = vmatprep.subr.bf16.mxu0 0
        %1934 = vmatpush1.bf16.msra.mxu0 0
        %1935 = vmatprep.subr.bf16.mxu0 0
        %1936 = vmatpush1.bf16.msra.mxu0 0
        %1937 = vmatprep.subr.bf16.mxu0 0
        %1938 = vmatpush1.bf16.msra.mxu0 0
        %1939 = vmatprep.subr.bf16.mxu0 0
        %1940 = vmatpush1.bf16.msra.mxu0 0
        %1941 = vmatprep.subr.bf16.mxu0 0
        %1942 = vmatpush1.bf16.msra.mxu0 0
        %1943 = vmatprep.subr.bf16.mxu0 0
        %1944 = vmatpush1.bf16.msra.mxu0 %v1927
        %1945 = vmatprep.subr.bf16.mxu0 0
        %1946 = vmatpush2.bf16.msra.mxu0 0
        %1947 = vmatprep.subr.bf16.mxu0 0
        %1948 = vmatpush2.bf16.msra.mxu0 0
        %1949 = vmatprep.subr.bf16.mxu0 0
        %1950 = vmatpush2.bf16.msra.mxu0 0
        %1951 = vmatprep.subr.bf16.mxu0 0
        %1952 = vmatpush2.bf16.msra.mxu0 0
        %1953 = vmatprep.subr.bf16.mxu0 0
        %1954 = vmatpush2.bf16.msra.mxu0 0
        %1955 = vmatprep.subr.bf16.mxu0 0
        %1956 = vmatpush2.bf16.msra.mxu0 0
        %1957 = vmatprep.subr.bf16.mxu0 0
        %1958 = vmatpush2.bf16.msra.mxu0 0
        %1959 = vmatprep.subr.bf16.mxu0 0
        %1960 = vmatpush2.bf16.msra.mxu0 0
        %1961 = vmatprep.mubr.bf16.mxu0 0
        %1962 = vmatmul.mubr.bf16.gmra.mxu0 %v1924
        %v1963 = vpop.f32.mrf.mxu0
        %v1964 = vadd.f32 0.0, %v1963
        %v1965 = vpop.f32.mrf.mxu0
        %v1966 = vpop.f32.mrf.mxu0
        %v1967 = vpop.f32.mrf.mxu0
        %1968 = vdwg.mxu0
        %v1970 = vsel %vm892, %v1808, 0
        %v1973 = vsel %vm956, %v1809, 0
        %1975 = vmatprep.subr.bf16.mxu0 0
        %1976 = vmatpush1.bf16.msra.mxu0 0
        %1977 = vmatprep.subr.bf16.mxu0 0
        %1978 = vmatpush1.bf16.msra.mxu0 0
        %1979 = vmatprep.subr.bf16.mxu0 0
        %1980 = vmatpush1.bf16.msra.mxu0 0
        %1981 = vmatprep.subr.bf16.mxu0 0
        %1982 = vmatpush1.bf16.msra.mxu0 0
        %1983 = vmatprep.subr.bf16.mxu0 0
        %1984 = vmatpush1.bf16.msra.mxu0 0
        %1985 = vmatprep.subr.bf16.mxu0 0
        %1986 = vmatpush1.bf16.msra.mxu0 0
        %1987 = vmatprep.subr.bf16.mxu0 0
        %1988 = vmatpush1.bf16.msra.mxu0 0
        %1989 = vmatprep.subr.bf16.mxu0 0
        %1990 = vmatpush1.bf16.msra.mxu0 %v1973
        %1991 = vmatprep.subr.bf16.mxu0 0
        %1992 = vmatpush2.bf16.msra.mxu0 0
        %1993 = vmatprep.subr.bf16.mxu0 0
        %1994 = vmatpush2.bf16.msra.mxu0 0
        %1995 = vmatprep.subr.bf16.mxu0 0
        %1996 = vmatpush2.bf16.msra.mxu0 0
        %1997 = vmatprep.subr.bf16.mxu0 0
        %1998 = vmatpush2.bf16.msra.mxu0 0
        %1999 = vmatprep.subr.bf16.mxu0 0
        %2000 = vmatpush2.bf16.msra.mxu0 0
        %2001 = vmatprep.subr.bf16.mxu0 0
        %2002 = vmatpush2.bf16.msra.mxu0 0
        %2003 = vmatprep.subr.bf16.mxu0 0
        %2004 = vmatpush2.bf16.msra.mxu0 0
        %2005 = vmatprep.subr.bf16.mxu0 0
        %2006 = vmatpush2.bf16.msra.mxu0 0
        %2007 = vmatprep.mubr.bf16.mxu0 0
        %2008 = vmatmul.mubr.bf16.gmra.mxu0 %v1970
        %v2009 = vpop.f32.mrf.mxu0
        %v2010 = vadd.f32 %v1964, %v2009
        %v2011 = vpop.f32.mrf.mxu0
        %v2012 = vpop.f32.mrf.mxu0
        %v2013 = vpop.f32.mrf.mxu0
        %2014 = vdwg.mxu0
        %2015 = vrot.lane.b32.xlu0 %v1697, 112
        %v2016 = vpop.permute.xlu0 %2015
        %2017 = vrot.lane.b32.xlu0 %v1698, 112
        %v2018 = vpop.permute.xlu0 %2017
        %v2020 = vsel %vm892, %v2016, 0
        %v2023 = vsel %vm892, %v2018, 0
        %2025 = vmatprep.subr.bf16.mxu0 0
        %2026 = vmatpush1.bf16.xpose.msra.mxu0 0
        %2027 = vmatprep.subr.bf16.mxu0 0
        %2028 = vmatpush1.bf16.xpose.msra.mxu0 0
        %2029 = vmatprep.subr.bf16.mxu0 0
        %2030 = vmatpush1.bf16.xpose.msra.mxu0 0
        %2031 = vmatprep.subr.bf16.mxu0 0
        %2032 = vmatpush1.bf16.xpose.msra.mxu0 0
        %2033 = vmatprep.subr.bf16.mxu0 0
        %2034 = vmatpush1.bf16.xpose.msra.mxu0 0
        %2035 = vmatprep.subr.bf16.mxu0 0
        %2036 = vmatpush1.bf16.xpose.msra.mxu0 0
        %2037 = vmatprep.subr.bf16.mxu0 0
        %2038 = vmatpush1.bf16.xpose.msra.mxu0 0
        %2039 = vmatprep.subr.bf16.mxu0 0
        %2040 = vmatpush1.bf16.xpose.msra.mxu0 %v2023
        %2041 = vmatprep.subr.bf16.mxu0 0
        %2042 = vmatpush2.bf16.xpose.msra.mxu0 0
        %2043 = vmatprep.subr.bf16.mxu0 0
        %2044 = vmatpush2.bf16.xpose.msra.mxu0 0
        %2045 = vmatprep.subr.bf16.mxu0 0
        %2046 = vmatpush2.bf16.xpose.msra.mxu0 0
        %2047 = vmatprep.subr.bf16.mxu0 0
        %2048 = vmatpush2.bf16.xpose.msra.mxu0 0
        %2049 = vmatprep.subr.bf16.mxu0 0
        %2050 = vmatpush2.bf16.xpose.msra.mxu0 0
        %2051 = vmatprep.subr.bf16.mxu0 0
        %2052 = vmatpush2.bf16.xpose.msra.mxu0 0
        %2053 = vmatprep.subr.bf16.mxu0 0
        %2054 = vmatpush2.bf16.xpose.msra.mxu0 0
        %2055 = vmatprep.subr.bf16.mxu0 0
        %2056 = vmatpush2.bf16.xpose.msra.mxu0 0
        %2057 = vmatprep.mubr.bf16.mxu0 0
        %2058 = vmatmul.mubr.bf16.gmra.mxu0 %v2020
        %v2059 = vpop.f32.mrf.mxu0
        %v2060 = vadd.f32 0.0, %v2059
        %v2061 = vpop.f32.mrf.mxu0
        %v2062 = vpop.f32.mrf.mxu0
        %v2063 = vpop.f32.mrf.mxu0
        %2064 = vdwg.mxu0
        %v2065 = vsel %vm1745, %v2060, -inf
        %2066 = vmax.xlane.f32.xlu0 %v2065
        %v2067 = vpop.xlane.xlu0 %2066
        %v2068 = vsub.f32 %v2060, %v2067
        %v2069 = vmul.f32 %v2068, 1.442695
        %v2070 = vpow.pop %v2069
        %v2071 = vsel %vm1745, %v2070, 0.0
        %2072 = vadd.xlane.f32.xlu0 %v2071
        %v2073 = vpop.xlane.xlu0 %2072
        %v2074 = vrcp.pop %v2073
        %v2075 = vmul.f32 %v2070, %v2074
        %v2076 = vpack.c.bf16 %v2075, %v2075
        %2077 = vrot.lane.b32.xlu0 %v1698, 80
        %v2078 = vpop.permute.xlu0 %2077
        %v2080 = vsel %vm1745, %v2076, 0
        %v2083 = vsel %vm1764, %v2078, 0
        %2085 = vmatprep.subr.bf16.mxu0 0
        %2086 = vmatpush1.bf16.msra.mxu0 0
        %2087 = vmatprep.subr.bf16.mxu0 0
        %2088 = vmatpush1.bf16.msra.mxu0 0
        %2089 = vmatprep.subr.bf16.mxu0 0
        %2090 = vmatpush1.bf16.msra.mxu0 0
        %2091 = vmatprep.subr.bf16.mxu0 0
        %2092 = vmatpush1.bf16.msra.mxu0 0
        %2093 = vmatprep.subr.bf16.mxu0 0
        %2094 = vmatpush1.bf16.msra.mxu0 0
        %2095 = vmatprep.subr.bf16.mxu0 0
        %2096 = vmatpush1.bf16.msra.mxu0 0
        %2097 = vmatprep.subr.bf16.mxu0 0
        %2098 = vmatpush1.bf16.msra.mxu0 0
        %2099 = vmatprep.subr.bf16.mxu0 0
        %2100 = vmatpush1.bf16.msra.mxu0 %v2083
        %2101 = vmatprep.subr.bf16.mxu0 0
        %2102 = vmatpush2.bf16.msra.mxu0 0
        %2103 = vmatprep.subr.bf16.mxu0 0
        %2104 = vmatpush2.bf16.msra.mxu0 0
        %2105 = vmatprep.subr.bf16.mxu0 0
        %2106 = vmatpush2.bf16.msra.mxu0 0
        %2107 = vmatprep.subr.bf16.mxu0 0
        %2108 = vmatpush2.bf16.msra.mxu0 0
        %2109 = vmatprep.subr.bf16.mxu0 0
        %2110 = vmatpush2.bf16.msra.mxu0 0
        %2111 = vmatprep.subr.bf16.mxu0 0
        %2112 = vmatpush2.bf16.msra.mxu0 0
        %2113 = vmatprep.subr.bf16.mxu0 0
        %2114 = vmatpush2.bf16.msra.mxu0 0
        %2115 = vmatprep.subr.bf16.mxu0 0
        %2116 = vmatpush2.bf16.msra.mxu0 0
        %2117 = vmatprep.mubr.bf16.mxu0 0
        %2118 = vmatmul.mubr.bf16.gmra.mxu0 %v2080
        %v2119 = vpop.f32.mrf.mxu0
        %v2120 = vadd.f32 0.0, %v2119
        %v2121 = vpop.f32.mrf.mxu0
        %v2122 = vpop.f32.mrf.mxu0
        %v2123 = vpop.f32.mrf.mxu0
        %2124 = vdwg.mxu0
        %v2125 = vpack.c.bf16 %v2120, %v2120
        %v2126 = vld [vmem:[%s13 + $0x8] sm:$0xf]
        %v2128 = vsel %vm892, %v2125, 0
        %v2131 = vsel %vm956, %v2126, 0
        %2133 = vmatprep.subr.bf16.mxu0 0
        %2134 = vmatpush1.bf16.msra.mxu0 0
        %2135 = vmatprep.subr.bf16.mxu0 0
        %2136 = vmatpush1.bf16.msra.mxu0 0
        %2137 = vmatprep.subr.bf16.mxu0 0
        %2138 = vmatpush1.bf16.msra.mxu0 0
        %2139 = vmatprep.subr.bf16.mxu0 0
        %2140 = vmatpush1.bf16.msra.mxu0 0
        %2141 = vmatprep.subr.bf16.mxu0 0
        %2142 = vmatpush1.bf16.msra.mxu0 0
        %2143 = vmatprep.subr.bf16.mxu0 0
        %2144 = vmatpush1.bf16.msra.mxu0 0
        %2145 = vmatprep.subr.bf16.mxu0 0
        %2146 = vmatpush1.bf16.msra.mxu0 0
        %2147 = vmatprep.subr.bf16.mxu0 0
        %2148 = vmatpush1.bf16.msra.mxu0 %v2131
        %2149 = vmatprep.subr.bf16.mxu0 0
        %2150 = vmatpush2.bf16.msra.mxu0 0
        %2151 = vmatprep.subr.bf16.mxu0 0
        %2152 = vmatpush2.bf16.msra.mxu0 0
        %2153 = vmatprep.subr.bf16.mxu0 0
        %2154 = vmatpush2.bf16.msra.mxu0 0
        %2155 = vmatprep.subr.bf16.mxu0 0
        %2156 = vmatpush2.bf16.msra.mxu0 0
        %2157 = vmatprep.subr.bf16.mxu0 0
        %2158 = vmatpush2.bf16.msra.mxu0 0
        %2159 = vmatprep.subr.bf16.mxu0 0
        %2160 = vmatpush2.bf16.msra.mxu0 0
        %2161 = vmatprep.subr.bf16.mxu0 0
        %2162 = vmatpush2.bf16.msra.mxu0 0
        %2163 = vmatprep.subr.bf16.mxu0 0
        %2164 = vmatpush2.bf16.msra.mxu0 0
        %2165 = vmatprep.mubr.bf16.mxu0 0
        %2166 = vmatmul.mubr.bf16.gmra.mxu0 %v2128
        %v2167 = vpop.f32.mrf.mxu0
        %v2168 = vadd.f32 0.0, %v2167
        %v2169 = vpop.f32.mrf.mxu0
        %v2170 = vpop.f32.mrf.mxu0
        %v2171 = vpop.f32.mrf.mxu0
        %2172 = vdwg.mxu0
        %v2173 = vadd.f32 %v2010, %v2168
        %2174 = vrot.lane.b32.xlu0 %v1697, 104
        %v2175 = vpop.permute.xlu0 %2174
        %2176 = vrot.lane.b32.xlu0 %v1698, 104
        %v2177 = vpop.permute.xlu0 %2176
        %v2179 = vsel %vm892, %v2175, 0
        %v2182 = vsel %vm892, %v2177, 0
        %2184 = vmatprep.subr.bf16.mxu0 0
        %2185 = vmatpush1.bf16.xpose.msra.mxu0 0
        %2186 = vmatprep.subr.bf16.mxu0 0
        %2187 = vmatpush1.bf16.xpose.msra.mxu0 0
        %2188 = vmatprep.subr.bf16.mxu0 0
        %2189 = vmatpush1.bf16.xpose.msra.mxu0 0
        %2190 = vmatprep.subr.bf16.mxu0 0
        %2191 = vmatpush1.bf16.xpose.msra.mxu0 0
        %2192 = vmatprep.subr.bf16.mxu0 0
        %2193 = vmatpush1.bf16.xpose.msra.mxu0 0
        %2194 = vmatprep.subr.bf16.mxu0 0
        %2195 = vmatpush1.bf16.xpose.msra.mxu0 0
        %2196 = vmatprep.subr.bf16.mxu0 0
        %2197 = vmatpush1.bf16.xpose.msra.mxu0 0
        %2198 = vmatprep.subr.bf16.mxu0 0
        %2199 = vmatpush1.bf16.xpose.msra.mxu0 %v2182
        %2200 = vmatprep.subr.bf16.mxu0 0
        %2201 = vmatpush2.bf16.xpose.msra.mxu0 0
        %2202 = vmatprep.subr.bf16.mxu0 0
        %2203 = vmatpush2.bf16.xpose.msra.mxu0 0
        %2204 = vmatprep.subr.bf16.mxu0 0
        %2205 = vmatpush2.bf16.xpose.msra.mxu0 0
        %2206 = vmatprep.subr.bf16.mxu0 0
        %2207 = vmatpush2.bf16.xpose.msra.mxu0 0
        %2208 = vmatprep.subr.bf16.mxu0 0
        %2209 = vmatpush2.bf16.xpose.msra.mxu0 0
        %2210 = vmatprep.subr.bf16.mxu0 0
        %2211 = vmatpush2.bf16.xpose.msra.mxu0 0
        %2212 = vmatprep.subr.bf16.mxu0 0
        %2213 = vmatpush2.bf16.xpose.msra.mxu0 0
        %2214 = vmatprep.subr.bf16.mxu0 0
        %2215 = vmatpush2.bf16.xpose.msra.mxu0 0
        %2216 = vmatprep.mubr.bf16.mxu0 0
        %2217 = vmatmul.mubr.bf16.gmra.mxu0 %v2179
        %v2218 = vpop.f32.mrf.mxu0
        %v2219 = vadd.f32 0.0, %v2218
        %v2220 = vpop.f32.mrf.mxu0
        %v2221 = vpop.f32.mrf.mxu0
        %v2222 = vpop.f32.mrf.mxu0
        %2223 = vdwg.mxu0
        %v2224 = vsel %vm1745, %v2219, -inf
        %2225 = vmax.xlane.f32.xlu0 %v2224
        %v2226 = vpop.xlane.xlu0 %2225
        %v2227 = vsub.f32 %v2219, %v2226
        %v2228 = vmul.f32 %v2227, 1.442695
        %v2229 = vpow.pop %v2228
        %v2230 = vsel %vm1745, %v2229, 0.0
        %2231 = vadd.xlane.f32.xlu0 %v2230
        %v2232 = vpop.xlane.xlu0 %2231
        %v2233 = vrcp.pop %v2232
        %v2234 = vmul.f32 %v2229, %v2233
        %v2235 = vpack.c.bf16 %v2234, %v2234
        %2236 = vrot.lane.b32.xlu0 %v1698, 72
        %v2237 = vpop.permute.xlu0 %2236
        %v2239 = vsel %vm1745, %v2235, 0
        %v2242 = vsel %vm1764, %v2237, 0
        %2244 = vmatprep.subr.bf16.mxu0 0
        %2245 = vmatpush1.bf16.msra.mxu0 0
        %2246 = vmatprep.subr.bf16.mxu0 0
        %2247 = vmatpush1.bf16.msra.mxu0 0
        %2248 = vmatprep.subr.bf16.mxu0 0
        %2249 = vmatpush1.bf16.msra.mxu0 0
        %2250 = vmatprep.subr.bf16.mxu0 0
        %2251 = vmatpush1.bf16.msra.mxu0 0
        %2252 = vmatprep.subr.bf16.mxu0 0
        %2253 = vmatpush1.bf16.msra.mxu0 0
        %2254 = vmatprep.subr.bf16.mxu0 0
        %2255 = vmatpush1.bf16.msra.mxu0 0
        %2256 = vmatprep.subr.bf16.mxu0 0
        %2257 = vmatpush1.bf16.msra.mxu0 0
        %2258 = vmatprep.subr.bf16.mxu0 0
        %2259 = vmatpush1.bf16.msra.mxu0 %v2242
        %2260 = vmatprep.subr.bf16.mxu0 0
        %2261 = vmatpush2.bf16.msra.mxu0 0
        %2262 = vmatprep.subr.bf16.mxu0 0
        %2263 = vmatpush2.bf16.msra.mxu0 0
        %2264 = vmatprep.subr.bf16.mxu0 0
        %2265 = vmatpush2.bf16.msra.mxu0 0
        %2266 = vmatprep.subr.bf16.mxu0 0
        %2267 = vmatpush2.bf16.msra.mxu0 0
        %2268 = vmatprep.subr.bf16.mxu0 0
        %2269 = vmatpush2.bf16.msra.mxu0 0
        %2270 = vmatprep.subr.bf16.mxu0 0
        %2271 = vmatpush2.bf16.msra.mxu0 0
        %2272 = vmatprep.subr.bf16.mxu0 0
        %2273 = vmatpush2.bf16.msra.mxu0 0
        %2274 = vmatprep.subr.bf16.mxu0 0
        %2275 = vmatpush2.bf16.msra.mxu0 0
        %2276 = vmatprep.mubr.bf16.mxu0 0
        %2277 = vmatmul.mubr.bf16.gmra.mxu0 %v2239
        %v2278 = vpop.f32.mrf.mxu0
        %v2279 = vadd.f32 0.0, %v2278
        %v2280 = vpop.f32.mrf.mxu0
        %v2281 = vpop.f32.mrf.mxu0
        %v2282 = vpop.f32.mrf.mxu0
        %2283 = vdwg.mxu0
        %v2284 = vpack.c.bf16 %v2279, %v2279
        %v2285 = vld [vmem:[%s13 + $0xc] sm:$0xf]
        %v2287 = vsel %vm892, %v2284, 0
        %v2290 = vsel %vm956, %v2285, 0
        %2292 = vmatprep.subr.bf16.mxu0 0
        %2293 = vmatpush1.bf16.msra.mxu0 0
        %2294 = vmatprep.subr.bf16.mxu0 0
        %2295 = vmatpush1.bf16.msra.mxu0 0
        %2296 = vmatprep.subr.bf16.mxu0 0
        %2297 = vmatpush1.bf16.msra.mxu0 0
        %2298 = vmatprep.subr.bf16.mxu0 0
        %2299 = vmatpush1.bf16.msra.mxu0 0
        %2300 = vmatprep.subr.bf16.mxu0 0
        %2301 = vmatpush1.bf16.msra.mxu0 0
        %2302 = vmatprep.subr.bf16.mxu0 0
        %2303 = vmatpush1.bf16.msra.mxu0 0
        %2304 = vmatprep.subr.bf16.mxu0 0
        %2305 = vmatpush1.bf16.msra.mxu0 0
        %2306 = vmatprep.subr.bf16.mxu0 0
        %2307 = vmatpush1.bf16.msra.mxu0 %v2290
        %2308 = vmatprep.subr.bf16.mxu0 0
        %2309 = vmatpush2.bf16.msra.mxu0 0
        %2310 = vmatprep.subr.bf16.mxu0 0
        %2311 = vmatpush2.bf16.msra.mxu0 0
        %2312 = vmatprep.subr.bf16.mxu0 0
        %2313 = vmatpush2.bf16.msra.mxu0 0
        %2314 = vmatprep.subr.bf16.mxu0 0
        %2315 = vmatpush2.bf16.msra.mxu0 0
        %2316 = vmatprep.subr.bf16.mxu0 0
        %2317 = vmatpush2.bf16.msra.mxu0 0
        %2318 = vmatprep.subr.bf16.mxu0 0
        %2319 = vmatpush2.bf16.msra.mxu0 0
        %2320 = vmatprep.subr.bf16.mxu0 0
        %2321 = vmatpush2.bf16.msra.mxu0 0
        %2322 = vmatprep.subr.bf16.mxu0 0
        %2323 = vmatpush2.bf16.msra.mxu0 0
        %2324 = vmatprep.mubr.bf16.mxu0 0
        %2325 = vmatmul.mubr.bf16.gmra.mxu0 %v2287
        %v2326 = vpop.f32.mrf.mxu0
        %v2327 = vadd.f32 0.0, %v2326
        %v2328 = vpop.f32.mrf.mxu0
        %v2329 = vpop.f32.mrf.mxu0
        %v2330 = vpop.f32.mrf.mxu0
        %2331 = vdwg.mxu0
        %v2332 = vadd.f32 %v2173, %v2327
        %v2333 = vld [vmem:[#allocation13] sm:$0x1]
        %v2335 = vlaneseq
        %v2336 = vshrl.u32 %v2335, 7
        %v2337 = vsub.s32 0, %v2336
        %v2338 = vrot.slane %v2333, %v2337
        %v2340 = vadd.f32 %v2332, %v2338
        %v2341 = vld [vmem:[%s15] sm:$0x1]
        %v2342 = vld [vmem:[%s16] sm:$0x1]
        %v2343 = vadd.f32 %v1562, %v2340
        %v2344 = vsel %vm844, %v2343, 0.0
        %2345 = vadd.xlane.f32.xlu0 %v2344
        %v2346 = vpop.xlane.xlu0 %2345
        %v2347 = vmul.f32 %v2346, %v1538
        %v2348 = vsub.f32 %v2343, %v2347
        %v2349 = vmul.f32 %v2348, %v2348
        %v2350 = vsel %vm844, %v2349, 0.0
        %2351 = vadd.xlane.f32.xlu0 %v2350
        %v2352 = vpop.xlane.xlu0 %2351
        %v2353 = vmul.f32 %v2352, %v1538
        %v2354 = vadd.f32 %v2353, 1e-05
        %v2355 = vrsqrt.pop %v2354
        %v2356 = vmul.f32 %v2348, %v2355
        %v2358 = vlaneseq
        %v2359 = vshrl.u32 %v2358, 7
        %v2360 = vsub.s32 0, %v2359
        %v2361 = vrot.slane %v2341, %v2360
        %v2363 = vmul.f32 %v2356, %v2361
        %v2365 = vlaneseq
        %v2366 = vshrl.u32 %v2365, 7
        %v2367 = vsub.s32 0, %v2366
        %v2368 = vrot.slane %v2342, %v2367
        %v2370 = vadd.f32 %v2363, %v2368
        %v2371 = vpack.c.bf16 %v2370, %v2370
        %v2372 = vld [vmem:[%s17] sm:$0xf]
        %v2373 = vld [vmem:[%s17 + $0x4] sm:$0xf]
        %v2374 = vld [vmem:[%s17 + $0x8] sm:$0xf]
        %v2375 = vld [vmem:[%s17 + $0xc] sm:$0xf]
        %v2376 = vld [vmem:[%s18] sm:$0x1]
        %v2378 = vlaneseq
        %v2379 = vshrl.u32 %v2378, 7
        %v2380 = vsub.s32 0, %v2379
        %v2381 = vrot.slane %v2376, %v2380
        %v2387 = vunpack.c.l.b16 %v2372
        %v2388 = vunpack.c.l.b16 %v2373
        %v2389 = vunpack.c.l.b16 %v2374
        %v2390 = vunpack.c.l.b16 %v2375
        %v2391 = vpack.c.b16 %v2388, %v2387
        %v2392 = vpack.c.b16 %v2390, %v2389
        %v2396 = vsel %vm844, %v2371, 0
        %2398 = vmatprep.subr.bf16.mxu0 0
        %2399 = vmatpush1.bf16.msra.mxu0 0
        %2400 = vmatprep.subr.bf16.mxu0 0
        %2401 = vmatpush1.bf16.msra.mxu0 0
        %2402 = vmatprep.subr.bf16.mxu0 0
        %2403 = vmatpush1.bf16.msra.mxu0 0
        %2404 = vmatprep.subr.bf16.mxu0 0
        %2405 = vmatpush1.bf16.msra.mxu0 0
        %2406 = vmatprep.subr.bf16.mxu0 0
        %2407 = vmatpush1.bf16.msra.mxu0 0
        %2408 = vmatprep.subr.bf16.mxu0 0
        %2409 = vmatpush1.bf16.msra.mxu0 0
        %2410 = vmatprep.subr.bf16.mxu0 0
        %2411 = vmatpush1.bf16.msra.mxu0 %v2392
        %2412 = vmatprep.subr.bf16.mxu0 0
        %2413 = vmatpush1.bf16.msra.mxu0 %v2391
        %2414 = vmatprep.subr.bf16.mxu0 0
        %2415 = vmatpush2.bf16.msra.mxu0 0
        %2416 = vmatprep.subr.bf16.mxu0 0
        %2417 = vmatpush2.bf16.msra.mxu0 0
        %2418 = vmatprep.subr.bf16.mxu0 0
        %2419 = vmatpush2.bf16.msra.mxu0 0
        %2420 = vmatprep.subr.bf16.mxu0 0
        %2421 = vmatpush2.bf16.msra.mxu0 0
        %2422 = vmatprep.subr.bf16.mxu0 0
        %2423 = vmatpush2.bf16.msra.mxu0 0
        %2424 = vmatprep.subr.bf16.mxu0 0
        %2425 = vmatpush2.bf16.msra.mxu0 0
        %2426 = vmatprep.subr.bf16.mxu0 0
        %2427 = vmatpush2.bf16.msra.mxu0 0
        %2428 = vmatprep.subr.bf16.mxu0 0
        %2429 = vmatpush2.bf16.msra.mxu0 0
        %2430 = vmatprep.mubr.bf16.mxu0 0
        %2431 = vmatmul.mubr.bf16.gmra.mxu0 %v2396
        %v2432 = vpop.f32.mrf.mxu0
        %v2433 = vadd.f32 %v2381, %v2432
        %v2434 = vpop.f32.mrf.mxu0
        %v2435 = vpop.f32.mrf.mxu0
        %v2436 = vpop.f32.mrf.mxu0
        %2437 = vdwg.mxu0
        %v2438 = vmax.f32 %v2433, 0.0
        %v2439 = vpack.c.bf16 %v2438, %v2438
        %v2440 = vld [vmem:[%s19] sm:$0xf]
        %v2441 = vld [vmem:[%s19 + $0x4] sm:$0xf]
        %v2442 = vld [vmem:[%s19 + $0x8] sm:$0xf]
        %v2443 = vld [vmem:[%s19 + $0xc] sm:$0xf]
        %v2444 = vld [vmem:[%s19 + $0x10] sm:$0xf]
        %v2445 = vld [vmem:[%s19 + $0x14] sm:$0xf]
        %v2446 = vld [vmem:[%s19 + $0x18] sm:$0xf]
        %v2447 = vld [vmem:[%s19 + $0x1c] sm:$0xf]
        %v2448 = vld [vmem:[%s20] sm:$0x1]
        %v2450 = vlaneseq
        %v2451 = vshrl.u32 %v2450, 7
        %v2452 = vsub.s32 0, %v2451
        %v2453 = vrot.slane %v2448, %v2452
        %v2463 = vunpack.c.l.b16 %v2440
        %v2464 = vunpack.c.l.b16 %v2441
        %v2465 = vunpack.c.l.b16 %v2442
        %v2466 = vunpack.c.l.b16 %v2443
        %v2467 = vunpack.c.l.b16 %v2444
        %v2468 = vunpack.c.l.b16 %v2445
        %v2469 = vunpack.c.l.b16 %v2446
        %v2470 = vunpack.c.l.b16 %v2447
        %v2471 = vpack.c.b16 %v2464, %v2463
        %v2472 = vpack.c.b16 %v2466, %v2465
        %v2473 = vpack.c.b16 %v2468, %v2467
        %v2474 = vpack.c.b16 %v2470, %v2469
        %vm2479 = vcmask 523264
        %v2481 = vsel %vm2479, %v2439, 0
        %2483 = vmatprep.subr.bf16.mxu0 0
        %2484 = vmatpush1.bf16.msra.mxu0 0
        %2485 = vmatprep.subr.bf16.mxu0 0
        %2486 = vmatpush1.bf16.msra.mxu0 0
        %2487 = vmatprep.subr.bf16.mxu0 0
        %2488 = vmatpush1.bf16.msra.mxu0 0
        %2489 = vmatprep.subr.bf16.mxu0 0
        %2490 = vmatpush1.bf16.msra.mxu0 0
        %2491 = vmatprep.subr.bf16.mxu0 0
        %2492 = vmatpush1.bf16.msra.mxu0 %v2474
        %2493 = vmatprep.subr.bf16.mxu0 0
        %2494 = vmatpush1.bf16.msra.mxu0 %v2473
        %2495 = vmatprep.subr.bf16.mxu0 0
        %2496 = vmatpush1.bf16.msra.mxu0 %v2472
        %2497 = vmatprep.subr.bf16.mxu0 0
        %2498 = vmatpush1.bf16.msra.mxu0 %v2471
        %2499 = vmatprep.subr.bf16.mxu0 0
        %2500 = vmatpush2.bf16.msra.mxu0 0
        %2501 = vmatprep.subr.bf16.mxu0 0
        %2502 = vmatpush2.bf16.msra.mxu0 0
        %2503 = vmatprep.subr.bf16.mxu0 0
        %2504 = vmatpush2.bf16.msra.mxu0 0
        %2505 = vmatprep.subr.bf16.mxu0 0
        %2506 = vmatpush2.bf16.msra.mxu0 0
        %2507 = vmatprep.subr.bf16.mxu0 0
        %2508 = vmatpush2.bf16.msra.mxu0 0
        %2509 = vmatprep.subr.bf16.mxu0 0
        %2510 = vmatpush2.bf16.msra.mxu0 0
        %2511 = vmatprep.subr.bf16.mxu0 0
        %2512 = vmatpush2.bf16.msra.mxu0 0
        %2513 = vmatprep.subr.bf16.mxu0 0
        %2514 = vmatpush2.bf16.msra.mxu0 0
        %2515 = vmatprep.mubr.bf16.mxu0 0
        %2516 = vmatmul.mubr.bf16.gmra.mxu0 %v2481
        %v2517 = vpop.f32.mrf.mxu0
        %v2518 = vadd.f32 %v2453, %v2517
        %v2519 = vpop.f32.mrf.mxu0
        %v2520 = vpop.f32.mrf.mxu0
        %v2521 = vpop.f32.mrf.mxu0
        %2522 = vdwg.mxu0
        %v2523 = vld [vmem:[%s21] sm:$0x1]
        %v2524 = vld [vmem:[%s22] sm:$0x1]
        %v2525 = vadd.f32 %v2370, %v2518
        %v2526 = vsel %vm844, %v2525, 0.0
        %2527 = vadd.xlane.f32.xlu0 %v2526
        %v2528 = vpop.xlane.xlu0 %2527
        %v2529 = vmul.f32 %v2528, %v1538
        %v2530 = vsub.f32 %v2525, %v2529
        %v2531 = vmul.f32 %v2530, %v2530
        %v2532 = vsel %vm844, %v2531, 0.0
        %2533 = vadd.xlane.f32.xlu0 %v2532
        %v2534 = vpop.xlane.xlu0 %2533
        %v2535 = vmul.f32 %v2534, %v1538
        %v2536 = vadd.f32 %v2535, 1e-05
        %v2537 = vrsqrt.pop %v2536
        %v2538 = vmul.f32 %v2530, %v2537
        %v2540 = vlaneseq
        %v2541 = vshrl.u32 %v2540, 7
        %v2542 = vsub.s32 0, %v2541
        %v2543 = vrot.slane %v2523, %v2542
        %v2545 = vmul.f32 %v2538, %v2543
        %v2547 = vlaneseq
        %v2548 = vshrl.u32 %v2547, 7
        %v2549 = vsub.s32 0, %v2548
        %v2550 = vrot.slane %v2524, %v2549
        %v2552 = vadd.f32 %v2545, %v2550
        %2553 = vst.msk [vmem:[%s804] sm:$0xff] %vm844, %v2552
        %s2554 = sand.u32 %s542, 1
        %s2555 = scalar_lea.sflag [#allocation4], %s2554
        %s2556 = sand.u32 %s542, 1
        %s2557 = smul.addr %s2556, 8
        %s2558 = scalar_lea.vmem [#allocation14], %s2557
        // Predicated region
        $region141: #{tpu_custom_call.1} parent=111 // pred_check
          %p2559 = pneg %p552
        $region142: #{tpu_custom_call.1} parent=111 // pred_check_branch
          %2561 = sbr.rel (%p2559) target = $region144
        $region143: #{tpu_custom_call.1} parent=111 // pred_region
          %s2563 = ssub.s32 128, 128
          %2564 = vsyncadd %s2555, %s2563
          %s2565 = smul.addr %s41, 128
          %s2566 = scalar_lea.hbm %s23, %s2565
          %s2568 = sshll.u32 %s2558, 4
          %s2569 = int_to_ptr.vmem [resolvable:$true] %s2568
          %2571 = dma.vmem_to_hbm [thread:$0]  %s2569, 128, %s2566, %s2555
        $region144: #{tpu_custom_call.1} parent=111 // pred_fallthru
          _
      $region112: #{tpu_custom_call.1} parent=5 // pred_fallthru
        _
      %p2572 = scmp.le.s32.totalorder 2, %s36
      // Predicated region
      $region145: #{tpu_custom_call.1} parent=5 // pred_check
        %p2573 = pneg %p2572
      $region146: #{tpu_custom_call.1} parent=5 // pred_check_branch
        %2575 = sbr.rel (%p2573) target = $region148
      $region147: #{tpu_custom_call.1} parent=5 // pred_region
        %s2576 = ssub.s32 %s36, 2
        // Predicated region
        $region149: #{tpu_custom_call.1} parent=147 // pred_check
          %p2577 = pneg %p558
        $region150: #{tpu_custom_call.1} parent=147 // pred_check_branch
          %2579 = sbr.rel (%p2577) target = $region152
        $region151: #{tpu_custom_call.1} parent=147 // pred_region
          %s2580 = sand.u32 %s543, 1
          %s2581 = scalar_lea.sflag [#allocation4], %s2580
          %s2582 = sand.u32 %s543, 1
          %s2583 = smul.addr %s2582, 8
          %s2584 = scalar_lea.vmem [#allocation14], %s2583
          %2585 = dma.done %s2581, 128
        $region152: #{tpu_custom_call.1} parent=147 // pred_fallthru
          _
      $region148: #{tpu_custom_call.1} parent=5 // pred_fallthru
        _
    $region6: #{tpu_custom_call.1} parent=1 // loop_footer
      %s40 = sadd.s32 1, %s36
    $region7: #{tpu_custom_call.1} parent=1 // loop_footer_branch
      %35 = sbr.rel target = $region3
    $region8: #{tpu_custom_call.1} parent=1 // loop_exit
      _
    %2586 = vsyncpa [#allocation3], 1
    %s2587 = scalar_lea.sflag [#allocation3], 1
    %2588 = vsyncpa %s2587, 1
    %2589 = vsyncpa [#allocation6], 1
    %2590 = vsyncpa [#allocation9], 1
    %2591 = vsyncpa [#allocation12], 1
    %2592 = vsyncpa [#allocation4], 1
    %s2593 = scalar_lea.sflag [#allocation4], 1
    %2594 = vsyncpa %s2593, 1

</llo_original>
